<compile_context>
chip_gen: v7x
topology: tpu7x:2x2x1
jax: 0.10.0
libtpu: 0.0.40
codegen_flags: <defaults>
</compile_context>

<pallas_src>
import jax
import jax.numpy as jnp
import numpy as np
from jax import lax
from jax.experimental import pallas as pl
from jax.experimental.pallas import tpu as pltpu

LANE = 128
MATMUL_DTYPE = jnp.bfloat16     # MXU operand dtype (f32 accumulate everywhere)


def _round_up(x, m):
    return ((x + m - 1) // m) * m


def _cdiv(a, b):
    return -(-a // b)


# ---------------------------------------------------------------------------
# Generation-specific VMEM budget (v7x: 64 MiB physical; v5e/v6e: 128 MiB)
# ---------------------------------------------------------------------------
def _vmem_budget_bytes():
    cap = 64 * 1024 * 1024                      # conservative fallback = v7x VMEM
    try:
        cap = pltpu.get_tpu_info().vmem_capacity_bytes
    except Exception:
        pass
    budget = min(int(cap * 0.625), 100 * 1024 * 1024)   # ~40 MiB v7x, ~80 MiB v5e/v6e
    limit = min(int(cap * 0.75), 112 * 1024 * 1024)     # scoped limit for Mosaic
    return budget, limit


def _tile_bytes(tb, T, H, Gp, Vp, L):
    """Conservative per-tile working set: double-buffered blocks + weights + live state."""
    acts = 2 * tb * T * (Gp + Vp) * 4                       # xp0 + logits blocks (f32, x2 buf)
    wgts = 2 * (2 * L * H * Gp * 2 + L * Gp * 4             # w_hh/w_ih (bf16) + biases (f32)
                + H * Vp * 2 + Vp * 4)                      # w_out (bf16) + b_out (f32)
    live = 4 * L * tb * H * 4 + 8 * tb * max(Gp, Vp) * 4    # h/c state + gate temporaries
    return acts + wgts + live


def _pick_batch_tile(B, T, H, Gp, Vp, L, budget):
    """Pick (tb, Bp): pad the batch (never fall back to an unbudgeted tb=B)."""
    tb = 8
    for cand in (256, 128, 64, 32, 16, 8):
        if _tile_bytes(cand, T, H, Gp, Vp, L) <= budget:
            tb = cand
            break
    # Don't pick a tile (much) larger than the (8-padded) batch itself.
    while tb >= 16 and tb >= 2 * _round_up(B, 8):
        tb //= 2
    n_tiles = _cdiv(B, tb)
    # Prefer >= 2 "parallel" tiles so v7x's two TensorCores both get work.
    if n_tiles == 1 and tb >= 16:
        tb //= 2
        n_tiles = _cdiv(B, tb)
    # Prefer an even tile count on v7x; halve the tile first, pad as a last resort.
    if n_tiles > 1 and n_tiles % 2 == 1:
        if tb >= 16:
            tb //= 2
            n_tiles = _cdiv(B, tb)
        if n_tiles % 2 == 1:
            n_tiles += 1
    return tb, n_tiles * tb


# ---------------------------------------------------------------------------
# Fused kernel: all LSTM layers + output Linear for one batch tile
# ---------------------------------------------------------------------------
def _gate_nonlin(gates, H):
    """Split packed gates (tb, Gp) into i/f/g/o with their nonlinearities."""
    if H % LANE == 0:
        # Lane-aligned gate slices: apply the transcendental per gate (4H total).
        i_g = jax.nn.sigmoid(gates[:, 0 * H:1 * H])
        f_g = jax.nn.sigmoid(gates[:, 1 * H:2 * H])
        g_g = jnp.tanh(gates[:, 2 * H:3 * H])
        o_g = jax.nn.sigmoid(gates[:, 3 * H:4 * H])
    else:
        # Small H: two full-width EUP passes over the packed gates (cheaper than
        # four passes over padded 128-lane-wide gate slices), then slice.
        sig = jax.nn.sigmoid(gates)
        th = jnp.tanh(gates)
        i_g = sig[:, 0 * H:1 * H]
        f_g = sig[:, 1 * H:2 * H]
        g_g = th[:, 2 * H:3 * H]
        o_g = sig[:, 3 * H:4 * H]
    return i_g, f_g, g_g, o_g


def fused_smiles_lstm_kernel(xp0_ref, w_hh_ref, w_ih_ref, b_ref,
                             w_out_ref, b_out_ref, out_ref):
    """One batch tile of the whole forward pass.

    xp0_ref  : (tb, T*Gp) f32   layer-0 gate pre-activations (emb-gather, bias folded)
    w_hh_ref : (L, H, Gp) bf16  recurrent weights (gates packed, K dim un-padded)
    w_ih_ref : (max(L-1,1), H, Gp) bf16  input projections for layers 1..L-1
    b_ref    : (max(L-1,1), 1, Gp) f32   fused biases for layers 1..L-1
    w_out_ref: (H, Vp) bf16
    b_out_ref: (1, Vp) f32
    out_ref  : (tb, T*Vp) f32   logits, batch-major, lane-dense per step
    """
    tb, t_gp = xp0_ref.shape
    n_layers, h_dim, gp = w_hh_ref.shape
    vp = w_out_ref.shape[1]
    n_steps = t_gp // gp

    # Hoist all weight loads out of the time loop (they stay in vregs/VMEM).
    w_hh = [w_hh_ref[l] for l in range(n_layers)]
    w_ih = [w_ih_ref[l] for l in range(n_layers - 1)]
    b_g = [b_ref[l] for l in range(n_layers - 1)]
    w_out = w_out_ref[...]
    b_out = b_out_ref[...]

    # LSTM state: exact width H (no padded columns), f32.
    h = [jnp.zeros((tb, h_dim), jnp.float32) for _ in range(n_layers)]
    c = [jnp.zeros((tb, h_dim), jnp.float32) for _ in range(n_layers)]

    # Short static time loop (T small); live set per step is a handful of vregs.
    for t in range(n_steps):
        layer_in = None
        for l in range(n_layers):
            if l == 0:
                gates = xp0_ref[:, t * gp:(t + 1) * gp]          # (tb, Gp) f32
            else:
                gates = jnp.dot(layer_in, w_ih[l - 1],
                                preferred_element_type=jnp.float32) + b_g[l - 1]
            # Recurrent matmul: bf16 operands, f32 accumulate, K = H (un-padded).
            gates = gates + jnp.dot(h[l].astype(MATMUL_DTYPE), w_hh[l],
                                    preferred_element_type=jnp.float32)
            i_g, f_g, g_g, o_g = _gate_nonlin(gates, h_dim)
            c[l] = f_g * c[l] + i_g * g_g
            h[l] = o_g * jnp.tanh(c[l])
            layer_in = h[l].astype(MATMUL_DTYPE)
        # Output Linear for this step; store is 128-lane aligned and dense.
        logits_t = jnp.dot(layer_in, w_out,
                           preferred_element_type=jnp.float32) + b_out
        out_ref[:, t * vp:(t + 1) * vp] = logits_t


def _fused_forward_call(xp0, w_hh, w_ih, b, w_out, b_out, tb, vmem_limit):
    bp, t_gp = xp0.shape
    n_layers, h_dim, gp = w_hh.shape
    lm1 = w_ih.shape[0]
    vp = w_out.shape[1]
    n_steps = t_gp // gp
    return pl.pallas_call(
        fused_smiles_lstm_kernel,
        out_shape=jax.ShapeDtypeStruct((bp, n_steps * vp), jnp.float32),
        grid_spec=pltpu.PrefetchScalarGridSpec(
            num_scalar_prefetch=0,
            grid=(bp // tb,),
            in_specs=[
                pl.BlockSpec((tb, n_steps * gp), lambda i: (i, 0)),      # xp0
                pl.BlockSpec((n_layers, h_dim, gp), lambda i: (0, 0, 0)),  # w_hh (resident)
                pl.BlockSpec((lm1, h_dim, gp), lambda i: (0, 0, 0)),       # w_ih
                pl.BlockSpec((lm1, 1, gp), lambda i: (0, 0, 0)),           # biases
                pl.BlockSpec((h_dim, vp), lambda i: (0, 0)),               # w_out
                pl.BlockSpec((1, vp), lambda i: (0, 0)),                   # b_out
            ],
            out_specs=pl.BlockSpec((tb, n_steps * vp), lambda i: (i, 0)),
        ),
        compiler_params=pltpu.CompilerParams(
            dimension_semantics=("parallel",),        # batch tiles are independent
            vmem_limit_bytes=vmem_limit),
    )(xp0, w_hh, w_ih, b, w_out, b_out)


# ---------------------------------------------------------------------------
# Forward
# ---------------------------------------------------------------------------
def smiles_lstm_forward(in_seq, params):
    """in_seq: (B, T) int32 -> logits (B, T, V) float32."""
    V = params["w_ih"][0].shape[0]
    H = params["w_hh"][0].shape[0]
    n_layers = len(params["w_ih"])
    B, T = in_seq.shape

    Gp = _round_up(4 * H, LANE)        # packed-gate width (4H rounded up to lanes)
    Vp = _round_up(V, LANE)

    budget, vmem_limit = _vmem_budget_bytes()
    tb, Bp = _pick_batch_tile(B, T, H, Gp, Vp, n_layers, budget)

    def pad_g(w):                      # pad packed-gate columns 4H -> Gp
        return jnp.pad(w, ((0, 0), (0, Gp - 4 * H)))

    # Layer 0: one_hot(in_seq) @ W_ih + b  ==  gather of the bias-folded table.
    emb0 = pad_g(params["w_ih"][0] + params["b"][0])                 # (V, Gp) f32
    in_seq_p = jnp.pad(in_seq, ((0, Bp - B), (0, 0)))                # pad with token 0
    xp0 = jnp.take(emb0, in_seq_p, axis=0).reshape(Bp, T * Gp)       # (Bp, T*Gp) f32

    # Stacked weights for the fused kernel; MXU operands in bf16.
    w_hh = jnp.stack([pad_g(params["w_hh"][l]) for l in range(n_layers)]
                     ).astype(MATMUL_DTYPE)                          # (L, H, Gp)
    if n_layers > 1:
        w_ih = jnp.stack([pad_g(params["w_ih"][l]) for l in range(1, n_layers)]
                         ).astype(MATMUL_DTYPE)                      # (L-1, H, Gp)
        b = jnp.stack([pad_g(params["b"][l]) for l in range(1, n_layers)])  # (L-1,1,Gp)
    else:
        w_ih = jnp.zeros((1, H, Gp), MATMUL_DTYPE)                   # unused dummy
        b = jnp.zeros((1, 1, Gp), jnp.float32)

    w_out = jnp.pad(params["w_out"], ((0, 0), (0, Vp - V))).astype(MATMUL_DTYPE)
    b_out = jnp.pad(params["b_out"], ((0, 0), (0, Vp - V)))

    logits = _fused_forward_call(xp0, w_hh, w_ih, b, w_out, b_out, tb, vmem_limit)
    # Batch-major already (no transpose). Only the narrow V-slice / batch un-pad
    # is left to XLA, to preserve the PyTorch forward() signature.
    return logits.reshape(Bp, T, Vp)[:B, :, :V]


# ---------------------------------------------------------------------------
# Deterministic parameter construction (PyTorch nn.LSTM / nn.Linear layout)
# ---------------------------------------------------------------------------
def init_params(key, vocab_size, hidden_size, n_layers):
    k = 1.0 / np.sqrt(hidden_size)
    params = {"w_ih": [], "w_hh": [], "b": []}
    for layer in range(n_layers):
        din = vocab_size if layer == 0 else hidden_size
        key, k1, k2, k3, k4 = jax.random.split(key, 5)
        # PyTorch stores (4H, Din)/(4H, H) with gate order i,f,g,o; we store
        # transposed for x @ W so gates are packed contiguously along columns.
        w_ih = jax.random.uniform(k1, (din, 4 * hidden_size), jnp.float32, -k, k)
        w_hh = jax.random.uniform(k2, (hidden_size, 4 * hidden_size),
                                  jnp.float32, -k, k)
        b_ih = jax.random.uniform(k3, (4 * hidden_size,), jnp.float32, -k, k)
        b_hh = jax.random.uniform(k4, (4 * hidden_size,), jnp.float32, -k, k)
        params["w_ih"].append(w_ih)
        params["w_hh"].append(w_hh)
        params["b"].append((b_ih + b_hh).reshape(1, 4 * hidden_size))
    key, k1, k2 = jax.random.split(key, 3)
    params["w_out"] = jax.random.uniform(k1, (hidden_size, vocab_size),
                                         jnp.float32, -k, k)
    params["b_out"] = jax.random.uniform(k2, (vocab_size,), jnp.float32,
                                         -k, k).reshape(1, vocab_size)
    return params


# Pure-JAX f32 reference (same math as the PyTorch module) for correctness.
def reference_forward(in_seq, params):
    V = params["w_ih"][0].shape[0]
    H = params["w_hh"][0].shape[0]
    x = jax.nn.one_hot(in_seq, V, dtype=jnp.float32)       # (B, T, V)
    x = jnp.transpose(x, (1, 0, 2))                        # (T, B, V)
    B = x.shape[1]
    for layer in range(len(params["w_ih"])):
        w_ih, w_hh, b = (params["w_ih"][layer], params["w_hh"][layer],
                         params["b"][layer])

        def step(carry, x_t):
            h, c = carry
            gates = x_t @ w_ih + h @ w_hh + b
            i_g = jax.nn.sigmoid(gates[:, 0 * H:1 * H])
            f_g = jax.nn.sigmoid(gates[:, 1 * H:2 * H])
            g_g = jnp.tanh(gates[:, 2 * H:3 * H])
            o_g = jax.nn.sigmoid(gates[:, 3 * H:4 * H])
            c_new = f_g * c + i_g * g_g
            h_new = o_g * jnp.tanh(c_new)
            return (h_new, c_new), h_new

        h0 = jnp.zeros((B, H), jnp.float32)
        c0 = jnp.zeros((B, H), jnp.float32)
        _, x = lax.scan(step, (h0, c0), x)                  # (T, B, H)
    out = x @ params["w_out"] + params["b_out"]             # (T, B, V)
    return jnp.transpose(out, (1, 0, 2))                    # (B, T, V)


if __name__ == "__main__":
    VOCAB_SIZE = 16    # len(vocab.char_list)
    HIDDEN = 32
    N_LAYERS = 2
    B, T = 24, 8       # batch pads to 32 -> two 16-row "parallel" tiles

    key = jax.random.PRNGKey(0)
    key, pkey, skey = jax.random.split(key, 3)
    params = init_params(pkey, VOCAB_SIZE, HIDDEN, N_LAYERS)
    in_seq = jax.random.randint(skey, (B, T), 0, VOCAB_SIZE, dtype=jnp.int32)

    fwd = jax.jit(smiles_lstm_forward)
    logits = jax.block_until_ready(fwd(in_seq, params))
    ref = jax.block_until_ready(reference_forward(in_seq, params))

    assert logits.shape == (B, T, VOCAB_SIZE)
    # Tolerance accounts for bf16 MXU operands (f32 accumulate) in the recurrent,
    # projection and output matmuls; h/c state and gate adds stay f32.
    np.testing.assert_allclose(np.asarray(logits), np.asarray(ref),
                               rtol=5e-2, atol=3e-2)
    print("KERNEL_OK")
</pallas_src>

<mosaic_0001>
module attributes {stable_mosaic.version = 11 : i64} {
  func.func @fused_smiles_lstm_kernel(%arg0: i32, %arg1: memref<16x1024xf32, #tpu.memory_space<vmem>>, %arg2: memref<2x32x128xbf16, #tpu.memory_space<vmem>>, %arg3: memref<1x32x128xbf16, #tpu.memory_space<vmem>>, %arg4: memref<1x1x128xf32, #tpu.memory_space<vmem>>, %arg5: memref<32x128xbf16, #tpu.memory_space<vmem>>, %arg6: memref<1x128xf32, #tpu.memory_space<vmem>>, %arg7: memref<16x1024xf32, #tpu.memory_space<vmem>>) attributes {dimension_semantics = [#tpu.dimension_semantics<parallel>], iteration_bounds = array<i64: 2>, scalar_prefetch = 0 : i64, scratch_operands = 0 : i64, tpu.core_type = #tpu.core_type<tc>, window_params = [{transform_indices = @transform_0, window_bounds = array<i64: 16, 1024>}, {pipeline_mode = #tpu.pipeline_mode<synchronous>, transform_indices = @transform_1, window_bounds = array<i64: 2, 32, 128>}, {pipeline_mode = #tpu.pipeline_mode<synchronous>, transform_indices = @transform_2, window_bounds = array<i64: 1, 32, 128>}, {pipeline_mode = #tpu.pipeline_mode<synchronous>, transform_indices = @transform_3, window_bounds = array<i64: 1, 1, 128>}, {pipeline_mode = #tpu.pipeline_mode<synchronous>, transform_indices = @transform_4, window_bounds = array<i64: 32, 128>}, {pipeline_mode = #tpu.pipeline_mode<synchronous>, transform_indices = @transform_5, window_bounds = array<i64: 1, 128>}, {transform_indices = @transform_6, window_bounds = array<i64: 16, 1024>}]} {
    %c0 = arith.constant 0 : index
    %c0_0 = arith.constant 0 : index
    %c0_1 = arith.constant 0 : index
    %0 = vector.load %arg2[%c0, %c0_0, %c0_1] : memref<2x32x128xbf16, #tpu.memory_space<vmem>>, vector<1x32x128xbf16>
    %1 = vector.shape_cast %0 : vector<1x32x128xbf16> to vector<32x128xbf16>
    %c1 = arith.constant 1 : index
    %c0_2 = arith.constant 0 : index
    %c0_3 = arith.constant 0 : index
    %2 = vector.load %arg2[%c1, %c0_2, %c0_3] : memref<2x32x128xbf16, #tpu.memory_space<vmem>>, vector<1x32x128xbf16>
    %3 = vector.shape_cast %2 : vector<1x32x128xbf16> to vector<32x128xbf16>
    %c0_4 = arith.constant 0 : index
    %c0_5 = arith.constant 0 : index
    %c0_6 = arith.constant 0 : index
    %4 = vector.load %arg3[%c0_4, %c0_5, %c0_6] : memref<1x32x128xbf16, #tpu.memory_space<vmem>>, vector<1x32x128xbf16>
    %5 = vector.shape_cast %4 : vector<1x32x128xbf16> to vector<32x128xbf16>
    %c0_7 = arith.constant 0 : index
    %c0_8 = arith.constant 0 : index
    %c0_9 = arith.constant 0 : index
    %6 = vector.load %arg4[%c0_7, %c0_8, %c0_9] : memref<1x1x128xf32, #tpu.memory_space<vmem>>, vector<1x1x128xf32>
    %7 = vector.shape_cast %6 : vector<1x1x128xf32> to vector<1x128xf32>
    %c0_10 = arith.constant 0 : index
    %c0_11 = arith.constant 0 : index
    %8 = vector.load %arg5[%c0_10, %c0_11] : memref<32x128xbf16, #tpu.memory_space<vmem>>, vector<32x128xbf16>
    %c0_12 = arith.constant 0 : index
    %c0_13 = arith.constant 0 : index
    %9 = vector.load %arg6[%c0_12, %c0_13] : memref<1x128xf32, #tpu.memory_space<vmem>>, vector<1x128xf32>
    %cst = arith.constant 0.000000e+00 : f32
    %10 = vector.broadcast %cst : f32 to vector<16x32xf32>
    %cst_14 = arith.constant 0.000000e+00 : f32
    %11 = vector.broadcast %cst_14 : f32 to vector<16x32xf32>
    %cst_15 = arith.constant 0.000000e+00 : f32
    %12 = vector.broadcast %cst_15 : f32 to vector<16x32xf32>
    %cst_16 = arith.constant 0.000000e+00 : f32
    %13 = vector.broadcast %cst_16 : f32 to vector<16x32xf32>
    %c0_17 = arith.constant 0 : index
    %c0_18 = arith.constant 0 : index
    %14 = vector.load %arg1[%c0_17, %c0_18] : memref<16x1024xf32, #tpu.memory_space<vmem>>, vector<16x128xf32>
    %15 = arith.truncf %10 : vector<16x32xf32> to vector<16x32xbf16>
    %cst_19 = arith.constant dense<0.000000e+00> : vector<16x128xf32>
    %16 = tpu.matmul %15, %1, %cst_19 {dimension_numbers = #tpu.dot_dimension_numbers<[1], [0], [0], [1], [0, 0, 1, 1], [], []>} : vector<16x32xbf16>, vector<32x128xbf16>, vector<16x128xf32> -> vector<16x128xf32>
    %17 = arith.addf %14, %16 : vector<16x128xf32>
    %18 = arith.negf %17 : vector<16x128xf32>
    %19 = math.exp %18 : vector<16x128xf32>
    %cst_20 = arith.constant 1.000000e+00 : f32
    %20 = vector.broadcast %cst_20 : f32 to vector<16x128xf32>
    %21 = arith.addf %20, %19 : vector<16x128xf32>
    %22 = arith.divf %20, %21 : vector<16x128xf32>
    %23 = math.tanh %17 : vector<16x128xf32>
    %24 = vector.extract_strided_slice %22 {offsets = [0, 0], sizes = [16, 32], strides = [1, 1]} : vector<16x128xf32> to vector<16x32xf32>
    %25 = vector.extract_strided_slice %22 {offsets = [0, 32], sizes = [16, 32], strides = [1, 1]} : vector<16x128xf32> to vector<16x32xf32>
    %26 = vector.extract_strided_slice %23 {offsets = [0, 64], sizes = [16, 32], strides = [1, 1]} : vector<16x128xf32> to vector<16x32xf32>
    %27 = vector.extract_strided_slice %22 {offsets = [0, 96], sizes = [16, 32], strides = [1, 1]} : vector<16x128xf32> to vector<16x32xf32>
    %28 = arith.mulf %25, %12 : vector<16x32xf32>
    %29 = arith.mulf %24, %26 : vector<16x32xf32>
    %30 = arith.addf %28, %29 : vector<16x32xf32>
    %31 = math.tanh %30 : vector<16x32xf32>
    %32 = arith.mulf %27, %31 : vector<16x32xf32>
    %33 = arith.truncf %32 : vector<16x32xf32> to vector<16x32xbf16>
    %cst_21 = arith.constant dense<0.000000e+00> : vector<16x128xf32>
    %34 = tpu.matmul %33, %5, %cst_21 {dimension_numbers = #tpu.dot_dimension_numbers<[1], [0], [0], [1], [0, 0, 1, 1], [], []>} : vector<16x32xbf16>, vector<32x128xbf16>, vector<16x128xf32> -> vector<16x128xf32>
    %35 = vector.broadcast %7 : vector<1x128xf32> to vector<16x128xf32>
    %36 = arith.addf %34, %35 : vector<16x128xf32>
    %37 = arith.truncf %11 : vector<16x32xf32> to vector<16x32xbf16>
    %cst_22 = arith.constant dense<0.000000e+00> : vector<16x128xf32>
    %38 = tpu.matmul %37, %3, %cst_22 {dimension_numbers = #tpu.dot_dimension_numbers<[1], [0], [0], [1], [0, 0, 1, 1], [], []>} : vector<16x32xbf16>, vector<32x128xbf16>, vector<16x128xf32> -> vector<16x128xf32>
    %39 = arith.addf %36, %38 : vector<16x128xf32>
    %40 = arith.negf %39 : vector<16x128xf32>
    %41 = math.exp %40 : vector<16x128xf32>
    %cst_23 = arith.constant 1.000000e+00 : f32
    %42 = vector.broadcast %cst_23 : f32 to vector<16x128xf32>
    %43 = arith.addf %42, %41 : vector<16x128xf32>
    %44 = arith.divf %42, %43 : vector<16x128xf32>
    %45 = math.tanh %39 : vector<16x128xf32>
    %46 = vector.extract_strided_slice %44 {offsets = [0, 0], sizes = [16, 32], strides = [1, 1]} : vector<16x128xf32> to vector<16x32xf32>
    %47 = vector.extract_strided_slice %44 {offsets = [0, 32], sizes = [16, 32], strides = [1, 1]} : vector<16x128xf32> to vector<16x32xf32>
    %48 = vector.extract_strided_slice %45 {offsets = [0, 64], sizes = [16, 32], strides = [1, 1]} : vector<16x128xf32> to vector<16x32xf32>
    %49 = vector.extract_strided_slice %44 {offsets = [0, 96], sizes = [16, 32], strides = [1, 1]} : vector<16x128xf32> to vector<16x32xf32>
    %50 = arith.mulf %47, %13 : vector<16x32xf32>
    %51 = arith.mulf %46, %48 : vector<16x32xf32>
    %52 = arith.addf %50, %51 : vector<16x32xf32>
    %53 = math.tanh %52 : vector<16x32xf32>
    %54 = arith.mulf %49, %53 : vector<16x32xf32>
    %55 = arith.truncf %54 : vector<16x32xf32> to vector<16x32xbf16>
    %cst_24 = arith.constant dense<0.000000e+00> : vector<16x128xf32>
    %56 = tpu.matmul %55, %8, %cst_24 {dimension_numbers = #tpu.dot_dimension_numbers<[1], [0], [0], [1], [0, 0, 1, 1], [], []>} : vector<16x32xbf16>, vector<32x128xbf16>, vector<16x128xf32> -> vector<16x128xf32>
    %57 = vector.broadcast %9 : vector<1x128xf32> to vector<16x128xf32>
    %58 = arith.addf %56, %57 : vector<16x128xf32>
    %c0_25 = arith.constant 0 : index
    %c0_26 = arith.constant 0 : index
    %59 = vector.load %arg7[%c0_25, %c0_26] : memref<16x1024xf32, #tpu.memory_space<vmem>>, vector<16x128xf32>
    tpu.vector_store %arg7[%c0_25, %c0_26], %58 {strides = array<i32>} : memref<16x1024xf32, #tpu.memory_space<vmem>>, vector<16x128xf32>,
    %c0_27 = arith.constant 0 : index
    %c128 = arith.constant 128 : index
    %60 = vector.load %arg1[%c0_27, %c128] : memref<16x1024xf32, #tpu.memory_space<vmem>>, vector<16x128xf32>
    %61 = arith.truncf %32 : vector<16x32xf32> to vector<16x32xbf16>
    %cst_28 = arith.constant dense<0.000000e+00> : vector<16x128xf32>
    %62 = tpu.matmul %61, %1, %cst_28 {dimension_numbers = #tpu.dot_dimension_numbers<[1], [0], [0], [1], [0, 0, 1, 1], [], []>} : vector<16x32xbf16>, vector<32x128xbf16>, vector<16x128xf32> -> vector<16x128xf32>
    %63 = arith.addf %60, %62 : vector<16x128xf32>
    %64 = arith.negf %63 : vector<16x128xf32>
    %65 = math.exp %64 : vector<16x128xf32>
    %cst_29 = arith.constant 1.000000e+00 : f32
    %66 = vector.broadcast %cst_29 : f32 to vector<16x128xf32>
    %67 = arith.addf %66, %65 : vector<16x128xf32>
    %68 = arith.divf %66, %67 : vector<16x128xf32>
    %69 = math.tanh %63 : vector<16x128xf32>
    %70 = vector.extract_strided_slice %68 {offsets = [0, 0], sizes = [16, 32], strides = [1, 1]} : vector<16x128xf32> to vector<16x32xf32>
    %71 = vector.extract_strided_slice %68 {offsets = [0, 32], sizes = [16, 32], strides = [1, 1]} : vector<16x128xf32> to vector<16x32xf32>
    %72 = vector.extract_strided_slice %69 {offsets = [0, 64], sizes = [16, 32], strides = [1, 1]} : vector<16x128xf32> to vector<16x32xf32>
    %73 = vector.extract_strided_slice %68 {offsets = [0, 96], sizes = [16, 32], strides = [1, 1]} : vector<16x128xf32> to vector<16x32xf32>
    %74 = arith.mulf %71, %30 : vector<16x32xf32>
    %75 = arith.mulf %70, %72 : vector<16x32xf32>
    %76 = arith.addf %74, %75 : vector<16x32xf32>
    %77 = math.tanh %76 : vector<16x32xf32>
    %78 = arith.mulf %73, %77 : vector<16x32xf32>
    %79 = arith.truncf %78 : vector<16x32xf32> to vector<16x32xbf16>
    %cst_30 = arith.constant dense<0.000000e+00> : vector<16x128xf32>
    %80 = tpu.matmul %79, %5, %cst_30 {dimension_numbers = #tpu.dot_dimension_numbers<[1], [0], [0], [1], [0, 0, 1, 1], [], []>} : vector<16x32xbf16>, vector<32x128xbf16>, vector<16x128xf32> -> vector<16x128xf32>
    %81 = vector.broadcast %7 : vector<1x128xf32> to vector<16x128xf32>
    %82 = arith.addf %80, %81 : vector<16x128xf32>
    %83 = arith.truncf %54 : vector<16x32xf32> to vector<16x32xbf16>
    %cst_31 = arith.constant dense<0.000000e+00> : vector<16x128xf32>
    %84 = tpu.matmul %83, %3, %cst_31 {dimension_numbers = #tpu.dot_dimension_numbers<[1], [0], [0], [1], [0, 0, 1, 1], [], []>} : vector<16x32xbf16>, vector<32x128xbf16>, vector<16x128xf32> -> vector<16x128xf32>
    %85 = arith.addf %82, %84 : vector<16x128xf32>
    %86 = arith.negf %85 : vector<16x128xf32>
    %87 = math.exp %86 : vector<16x128xf32>
    %cst_32 = arith.constant 1.000000e+00 : f32
    %88 = vector.broadcast %cst_32 : f32 to vector<16x128xf32>
    %89 = arith.addf %88, %87 : vector<16x128xf32>
    %90 = arith.divf %88, %89 : vector<16x128xf32>
    %91 = math.tanh %85 : vector<16x128xf32>
    %92 = vector.extract_strided_slice %90 {offsets = [0, 0], sizes = [16, 32], strides = [1, 1]} : vector<16x128xf32> to vector<16x32xf32>
    %93 = vector.extract_strided_slice %90 {offsets = [0, 32], sizes = [16, 32], strides = [1, 1]} : vector<16x128xf32> to vector<16x32xf32>
    %94 = vector.extract_strided_slice %91 {offsets = [0, 64], sizes = [16, 32], strides = [1, 1]} : vector<16x128xf32> to vector<16x32xf32>
    %95 = vector.extract_strided_slice %90 {offsets = [0, 96], sizes = [16, 32], strides = [1, 1]} : vector<16x128xf32> to vector<16x32xf32>
    %96 = arith.mulf %93, %52 : vector<16x32xf32>
    %97 = arith.mulf %92, %94 : vector<16x32xf32>
    %98 = arith.addf %96, %97 : vector<16x32xf32>
    %99 = math.tanh %98 : vector<16x32xf32>
    %100 = arith.mulf %95, %99 : vector<16x32xf32>
    %101 = arith.truncf %100 : vector<16x32xf32> to vector<16x32xbf16>
    %cst_33 = arith.constant dense<0.000000e+00> : vector<16x128xf32>
    %102 = tpu.matmul %101, %8, %cst_33 {dimension_numbers = #tpu.dot_dimension_numbers<[1], [0], [0], [1], [0, 0, 1, 1], [], []>} : vector<16x32xbf16>, vector<32x128xbf16>, vector<16x128xf32> -> vector<16x128xf32>
    %103 = vector.broadcast %9 : vector<1x128xf32> to vector<16x128xf32>
    %104 = arith.addf %102, %103 : vector<16x128xf32>
    %c0_34 = arith.constant 0 : index
    %c128_35 = arith.constant 128 : index
    %105 = vector.load %arg7[%c0_34, %c128_35] : memref<16x1024xf32, #tpu.memory_space<vmem>>, vector<16x128xf32>
    tpu.vector_store %arg7[%c0_34, %c128_35], %104 {strides = array<i32>} : memref<16x1024xf32, #tpu.memory_space<vmem>>, vector<16x128xf32>,
    %c0_36 = arith.constant 0 : index
    %c256 = arith.constant 256 : index
    %106 = vector.load %arg1[%c0_36, %c256] : memref<16x1024xf32, #tpu.memory_space<vmem>>, vector<16x128xf32>
    %107 = arith.truncf %78 : vector<16x32xf32> to vector<16x32xbf16>
    %cst_37 = arith.constant dense<0.000000e+00> : vector<16x128xf32>
    %108 = tpu.matmul %107, %1, %cst_37 {dimension_numbers = #tpu.dot_dimension_numbers<[1], [0], [0], [1], [0, 0, 1, 1], [], []>} : vector<16x32xbf16>, vector<32x128xbf16>, vector<16x128xf32> -> vector<16x128xf32>
    %109 = arith.addf %106, %108 : vector<16x128xf32>
    %110 = arith.negf %109 : vector<16x128xf32>
    %111 = math.exp %110 : vector<16x128xf32>
    %cst_38 = arith.constant 1.000000e+00 : f32
    %112 = vector.broadcast %cst_38 : f32 to vector<16x128xf32>
    %113 = arith.addf %112, %111 : vector<16x128xf32>
    %114 = arith.divf %112, %113 : vector<16x128xf32>
    %115 = math.tanh %109 : vector<16x128xf32>
    %116 = vector.extract_strided_slice %114 {offsets = [0, 0], sizes = [16, 32], strides = [1, 1]} : vector<16x128xf32> to vector<16x32xf32>
    %117 = vector.extract_strided_slice %114 {offsets = [0, 32], sizes = [16, 32], strides = [1, 1]} : vector<16x128xf32> to vector<16x32xf32>
    %118 = vector.extract_strided_slice %115 {offsets = [0, 64], sizes = [16, 32], strides = [1, 1]} : vector<16x128xf32> to vector<16x32xf32>
    %119 = vector.extract_strided_slice %114 {offsets = [0, 96], sizes = [16, 32], strides = [1, 1]} : vector<16x128xf32> to vector<16x32xf32>
    %120 = arith.mulf %117, %76 : vector<16x32xf32>
    %121 = arith.mulf %116, %118 : vector<16x32xf32>
    %122 = arith.addf %120, %121 : vector<16x32xf32>
    %123 = math.tanh %122 : vector<16x32xf32>
    %124 = arith.mulf %119, %123 : vector<16x32xf32>
    %125 = arith.truncf %124 : vector<16x32xf32> to vector<16x32xbf16>
    %cst_39 = arith.constant dense<0.000000e+00> : vector<16x128xf32>
    %126 = tpu.matmul %125, %5, %cst_39 {dimension_numbers = #tpu.dot_dimension_numbers<[1], [0], [0], [1], [0, 0, 1, 1], [], []>} : vector<16x32xbf16>, vector<32x128xbf16>, vector<16x128xf32> -> vector<16x128xf32>
    %127 = vector.broadcast %7 : vector<1x128xf32> to vector<16x128xf32>
    %128 = arith.addf %126, %127 : vector<16x128xf32>
    %129 = arith.truncf %100 : vector<16x32xf32> to vector<16x32xbf16>
    %cst_40 = arith.constant dense<0.000000e+00> : vector<16x128xf32>
    %130 = tpu.matmul %129, %3, %cst_40 {dimension_numbers = #tpu.dot_dimension_numbers<[1], [0], [0], [1], [0, 0, 1, 1], [], []>} : vector<16x32xbf16>, vector<32x128xbf16>, vector<16x128xf32> -> vector<16x128xf32>
    %131 = arith.addf %128, %130 : vector<16x128xf32>
    %132 = arith.negf %131 : vector<16x128xf32>
    %133 = math.exp %132 : vector<16x128xf32>
    %cst_41 = arith.constant 1.000000e+00 : f32
    %134 = vector.broadcast %cst_41 : f32 to vector<16x128xf32>
    %135 = arith.addf %134, %133 : vector<16x128xf32>
    %136 = arith.divf %134, %135 : vector<16x128xf32>
    %137 = math.tanh %131 : vector<16x128xf32>
    %138 = vector.extract_strided_slice %136 {offsets = [0, 0], sizes = [16, 32], strides = [1, 1]} : vector<16x128xf32> to vector<16x32xf32>
    %139 = vector.extract_strided_slice %136 {offsets = [0, 32], sizes = [16, 32], strides = [1, 1]} : vector<16x128xf32> to vector<16x32xf32>
    %140 = vector.extract_strided_slice %137 {offsets = [0, 64], sizes = [16, 32], strides = [1, 1]} : vector<16x128xf32> to vector<16x32xf32>
    %141 = vector.extract_strided_slice %136 {offsets = [0, 96], sizes = [16, 32], strides = [1, 1]} : vector<16x128xf32> to vector<16x32xf32>
    %142 = arith.mulf %139, %98 : vector<16x32xf32>
    %143 = arith.mulf %138, %140 : vector<16x32xf32>
    %144 = arith.addf %142, %143 : vector<16x32xf32>
    %145 = math.tanh %144 : vector<16x32xf32>
    %146 = arith.mulf %141, %145 : vector<16x32xf32>
    %147 = arith.truncf %146 : vector<16x32xf32> to vector<16x32xbf16>
    %cst_42 = arith.constant dense<0.000000e+00> : vector<16x128xf32>
    %148 = tpu.matmul %147, %8, %cst_42 {dimension_numbers = #tpu.dot_dimension_numbers<[1], [0], [0], [1], [0, 0, 1, 1], [], []>} : vector<16x32xbf16>, vector<32x128xbf16>, vector<16x128xf32> -> vector<16x128xf32>
    %149 = vector.broadcast %9 : vector<1x128xf32> to vector<16x128xf32>
    %150 = arith.addf %148, %149 : vector<16x128xf32>
    %c0_43 = arith.constant 0 : index
    %c256_44 = arith.constant 256 : index
    %151 = vector.load %arg7[%c0_43, %c256_44] : memref<16x1024xf32, #tpu.memory_space<vmem>>, vector<16x128xf32>
    tpu.vector_store %arg7[%c0_43, %c256_44], %150 {strides = array<i32>} : memref<16x1024xf32, #tpu.memory_space<vmem>>, vector<16x128xf32>,
    %c0_45 = arith.constant 0 : index
    %c384 = arith.constant 384 : index
    %152 = vector.load %arg1[%c0_45, %c384] : memref<16x1024xf32, #tpu.memory_space<vmem>>, vector<16x128xf32>
    %153 = arith.truncf %124 : vector<16x32xf32> to vector<16x32xbf16>
    %cst_46 = arith.constant dense<0.000000e+00> : vector<16x128xf32>
    %154 = tpu.matmul %153, %1, %cst_46 {dimension_numbers = #tpu.dot_dimension_numbers<[1], [0], [0], [1], [0, 0, 1, 1], [], []>} : vector<16x32xbf16>, vector<32x128xbf16>, vector<16x128xf32> -> vector<16x128xf32>
    %155 = arith.addf %152, %154 : vector<16x128xf32>
    %156 = arith.negf %155 : vector<16x128xf32>
    %157 = math.exp %156 : vector<16x128xf32>
    %cst_47 = arith.constant 1.000000e+00 : f32
    %158 = vector.broadcast %cst_47 : f32 to vector<16x128xf32>
    %159 = arith.addf %158, %157 : vector<16x128xf32>
    %160 = arith.divf %158, %159 : vector<16x128xf32>
    %161 = math.tanh %155 : vector<16x128xf32>
    %162 = vector.extract_strided_slice %160 {offsets = [0, 0], sizes = [16, 32], strides = [1, 1]} : vector<16x128xf32> to vector<16x32xf32>
    %163 = vector.extract_strided_slice %160 {offsets = [0, 32], sizes = [16, 32], strides = [1, 1]} : vector<16x128xf32> to vector<16x32xf32>
    %164 = vector.extract_strided_slice %161 {offsets = [0, 64], sizes = [16, 32], strides = [1, 1]} : vector<16x128xf32> to vector<16x32xf32>
    %165 = vector.extract_strided_slice %160 {offsets = [0, 96], sizes = [16, 32], strides = [1, 1]} : vector<16x128xf32> to vector<16x32xf32>
    %166 = arith.mulf %163, %122 : vector<16x32xf32>
    %167 = arith.mulf %162, %164 : vector<16x32xf32>
    %168 = arith.addf %166, %167 : vector<16x32xf32>
    %169 = math.tanh %168 : vector<16x32xf32>
    %170 = arith.mulf %165, %169 : vector<16x32xf32>
    %171 = arith.truncf %170 : vector<16x32xf32> to vector<16x32xbf16>
    %cst_48 = arith.constant dense<0.000000e+00> : vector<16x128xf32>
    %172 = tpu.matmul %171, %5, %cst_48 {dimension_numbers = #tpu.dot_dimension_numbers<[1], [0], [0], [1], [0, 0, 1, 1], [], []>} : vector<16x32xbf16>, vector<32x128xbf16>, vector<16x128xf32> -> vector<16x128xf32>
    %173 = vector.broadcast %7 : vector<1x128xf32> to vector<16x128xf32>
    %174 = arith.addf %172, %173 : vector<16x128xf32>
    %175 = arith.truncf %146 : vector<16x32xf32> to vector<16x32xbf16>
    %cst_49 = arith.constant dense<0.000000e+00> : vector<16x128xf32>
    %176 = tpu.matmul %175, %3, %cst_49 {dimension_numbers = #tpu.dot_dimension_numbers<[1], [0], [0], [1], [0, 0, 1, 1], [], []>} : vector<16x32xbf16>, vector<32x128xbf16>, vector<16x128xf32> -> vector<16x128xf32>
    %177 = arith.addf %174, %176 : vector<16x128xf32>
    %178 = arith.negf %177 : vector<16x128xf32>
    %179 = math.exp %178 : vector<16x128xf32>
    %cst_50 = arith.constant 1.000000e+00 : f32
    %180 = vector.broadcast %cst_50 : f32 to vector<16x128xf32>
    %181 = arith.addf %180, %179 : vector<16x128xf32>
    %182 = arith.divf %180, %181 : vector<16x128xf32>
    %183 = math.tanh %177 : vector<16x128xf32>
    %184 = vector.extract_strided_slice %182 {offsets = [0, 0], sizes = [16, 32], strides = [1, 1]} : vector<16x128xf32> to vector<16x32xf32>
    %185 = vector.extract_strided_slice %182 {offsets = [0, 32], sizes = [16, 32], strides = [1, 1]} : vector<16x128xf32> to vector<16x32xf32>
    %186 = vector.extract_strided_slice %183 {offsets = [0, 64], sizes = [16, 32], strides = [1, 1]} : vector<16x128xf32> to vector<16x32xf32>
    %187 = vector.extract_strided_slice %182 {offsets = [0, 96], sizes = [16, 32], strides = [1, 1]} : vector<16x128xf32> to vector<16x32xf32>
    %188 = arith.mulf %185, %144 : vector<16x32xf32>
    %189 = arith.mulf %184, %186 : vector<16x32xf32>
    %190 = arith.addf %188, %189 : vector<16x32xf32>
    %191 = math.tanh %190 : vector<16x32xf32>
    %192 = arith.mulf %187, %191 : vector<16x32xf32>
    %193 = arith.truncf %192 : vector<16x32xf32> to vector<16x32xbf16>
    %cst_51 = arith.constant dense<0.000000e+00> : vector<16x128xf32>
    %194 = tpu.matmul %193, %8, %cst_51 {dimension_numbers = #tpu.dot_dimension_numbers<[1], [0], [0], [1], [0, 0, 1, 1], [], []>} : vector<16x32xbf16>, vector<32x128xbf16>, vector<16x128xf32> -> vector<16x128xf32>
    %195 = vector.broadcast %9 : vector<1x128xf32> to vector<16x128xf32>
    %196 = arith.addf %194, %195 : vector<16x128xf32>
    %c0_52 = arith.constant 0 : index
    %c384_53 = arith.constant 384 : index
    %197 = vector.load %arg7[%c0_52, %c384_53] : memref<16x1024xf32, #tpu.memory_space<vmem>>, vector<16x128xf32>
    tpu.vector_store %arg7[%c0_52, %c384_53], %196 {strides = array<i32>} : memref<16x1024xf32, #tpu.memory_space<vmem>>, vector<16x128xf32>,
    %c0_54 = arith.constant 0 : index
    %c512 = arith.constant 512 : index
    %198 = vector.load %arg1[%c0_54, %c512] : memref<16x1024xf32, #tpu.memory_space<vmem>>, vector<16x128xf32>
    %199 = arith.truncf %170 : vector<16x32xf32> to vector<16x32xbf16>
    %cst_55 = arith.constant dense<0.000000e+00> : vector<16x128xf32>
    %200 = tpu.matmul %199, %1, %cst_55 {dimension_numbers = #tpu.dot_dimension_numbers<[1], [0], [0], [1], [0, 0, 1, 1], [], []>} : vector<16x32xbf16>, vector<32x128xbf16>, vector<16x128xf32> -> vector<16x128xf32>
    %201 = arith.addf %198, %200 : vector<16x128xf32>
    %202 = arith.negf %201 : vector<16x128xf32>
    %203 = math.exp %202 : vector<16x128xf32>
    %cst_56 = arith.constant 1.000000e+00 : f32
    %204 = vector.broadcast %cst_56 : f32 to vector<16x128xf32>
    %205 = arith.addf %204, %203 : vector<16x128xf32>
    %206 = arith.divf %204, %205 : vector<16x128xf32>
    %207 = math.tanh %201 : vector<16x128xf32>
    %208 = vector.extract_strided_slice %206 {offsets = [0, 0], sizes = [16, 32], strides = [1, 1]} : vector<16x128xf32> to vector<16x32xf32>
    %209 = vector.extract_strided_slice %206 {offsets = [0, 32], sizes = [16, 32], strides = [1, 1]} : vector<16x128xf32> to vector<16x32xf32>
    %210 = vector.extract_strided_slice %207 {offsets = [0, 64], sizes = [16, 32], strides = [1, 1]} : vector<16x128xf32> to vector<16x32xf32>
    %211 = vector.extract_strided_slice %206 {offsets = [0, 96], sizes = [16, 32], strides = [1, 1]} : vector<16x128xf32> to vector<16x32xf32>
    %212 = arith.mulf %209, %168 : vector<16x32xf32>
    %213 = arith.mulf %208, %210 : vector<16x32xf32>
    %214 = arith.addf %212, %213 : vector<16x32xf32>
    %215 = math.tanh %214 : vector<16x32xf32>
    %216 = arith.mulf %211, %215 : vector<16x32xf32>
    %217 = arith.truncf %216 : vector<16x32xf32> to vector<16x32xbf16>
    %cst_57 = arith.constant dense<0.000000e+00> : vector<16x128xf32>
    %218 = tpu.matmul %217, %5, %cst_57 {dimension_numbers = #tpu.dot_dimension_numbers<[1], [0], [0], [1], [0, 0, 1, 1], [], []>} : vector<16x32xbf16>, vector<32x128xbf16>, vector<16x128xf32> -> vector<16x128xf32>
    %219 = vector.broadcast %7 : vector<1x128xf32> to vector<16x128xf32>
    %220 = arith.addf %218, %219 : vector<16x128xf32>
    %221 = arith.truncf %192 : vector<16x32xf32> to vector<16x32xbf16>
    %cst_58 = arith.constant dense<0.000000e+00> : vector<16x128xf32>
    %222 = tpu.matmul %221, %3, %cst_58 {dimension_numbers = #tpu.dot_dimension_numbers<[1], [0], [0], [1], [0, 0, 1, 1], [], []>} : vector<16x32xbf16>, vector<32x128xbf16>, vector<16x128xf32> -> vector<16x128xf32>
    %223 = arith.addf %220, %222 : vector<16x128xf32>
    %224 = arith.negf %223 : vector<16x128xf32>
    %225 = math.exp %224 : vector<16x128xf32>
    %cst_59 = arith.constant 1.000000e+00 : f32
    %226 = vector.broadcast %cst_59 : f32 to vector<16x128xf32>
    %227 = arith.addf %226, %225 : vector<16x128xf32>
    %228 = arith.divf %226, %227 : vector<16x128xf32>
    %229 = math.tanh %223 : vector<16x128xf32>
    %230 = vector.extract_strided_slice %228 {offsets = [0, 0], sizes = [16, 32], strides = [1, 1]} : vector<16x128xf32> to vector<16x32xf32>
    %231 = vector.extract_strided_slice %228 {offsets = [0, 32], sizes = [16, 32], strides = [1, 1]} : vector<16x128xf32> to vector<16x32xf32>
    %232 = vector.extract_strided_slice %229 {offsets = [0, 64], sizes = [16, 32], strides = [1, 1]} : vector<16x128xf32> to vector<16x32xf32>
    %233 = vector.extract_strided_slice %228 {offsets = [0, 96], sizes = [16, 32], strides = [1, 1]} : vector<16x128xf32> to vector<16x32xf32>
    %234 = arith.mulf %231, %190 : vector<16x32xf32>
    %235 = arith.mulf %230, %232 : vector<16x32xf32>
    %236 = arith.addf %234, %235 : vector<16x32xf32>
    %237 = math.tanh %236 : vector<16x32xf32>
    %238 = arith.mulf %233, %237 : vector<16x32xf32>
    %239 = arith.truncf %238 : vector<16x32xf32> to vector<16x32xbf16>
    %cst_60 = arith.constant dense<0.000000e+00> : vector<16x128xf32>
    %240 = tpu.matmul %239, %8, %cst_60 {dimension_numbers = #tpu.dot_dimension_numbers<[1], [0], [0], [1], [0, 0, 1, 1], [], []>} : vector<16x32xbf16>, vector<32x128xbf16>, vector<16x128xf32> -> vector<16x128xf32>
    %241 = vector.broadcast %9 : vector<1x128xf32> to vector<16x128xf32>
    %242 = arith.addf %240, %241 : vector<16x128xf32>
    %c0_61 = arith.constant 0 : index
    %c512_62 = arith.constant 512 : index
    %243 = vector.load %arg7[%c0_61, %c512_62] : memref<16x1024xf32, #tpu.memory_space<vmem>>, vector<16x128xf32>
    tpu.vector_store %arg7[%c0_61, %c512_62], %242 {strides = array<i32>} : memref<16x1024xf32, #tpu.memory_space<vmem>>, vector<16x128xf32>,
    %c0_63 = arith.constant 0 : index
    %c640 = arith.constant 640 : index
    %244 = vector.load %arg1[%c0_63, %c640] : memref<16x1024xf32, #tpu.memory_space<vmem>>, vector<16x128xf32>
    %245 = arith.truncf %216 : vector<16x32xf32> to vector<16x32xbf16>
    %cst_64 = arith.constant dense<0.000000e+00> : vector<16x128xf32>
    %246 = tpu.matmul %245, %1, %cst_64 {dimension_numbers = #tpu.dot_dimension_numbers<[1], [0], [0], [1], [0, 0, 1, 1], [], []>} : vector<16x32xbf16>, vector<32x128xbf16>, vector<16x128xf32> -> vector<16x128xf32>
    %247 = arith.addf %244, %246 : vector<16x128xf32>
    %248 = arith.negf %247 : vector<16x128xf32>
    %249 = math.exp %248 : vector<16x128xf32>
    %cst_65 = arith.constant 1.000000e+00 : f32
    %250 = vector.broadcast %cst_65 : f32 to vector<16x128xf32>
    %251 = arith.addf %250, %249 : vector<16x128xf32>
    %252 = arith.divf %250, %251 : vector<16x128xf32>
    %253 = math.tanh %247 : vector<16x128xf32>
    %254 = vector.extract_strided_slice %252 {offsets = [0, 0], sizes = [16, 32], strides = [1, 1]} : vector<16x128xf32> to vector<16x32xf32>
    %255 = vector.extract_strided_slice %252 {offsets = [0, 32], sizes = [16, 32], strides = [1, 1]} : vector<16x128xf32> to vector<16x32xf32>
    %256 = vector.extract_strided_slice %253 {offsets = [0, 64], sizes = [16, 32], strides = [1, 1]} : vector<16x128xf32> to vector<16x32xf32>
    %257 = vector.extract_strided_slice %252 {offsets = [0, 96], sizes = [16, 32], strides = [1, 1]} : vector<16x128xf32> to vector<16x32xf32>
    %258 = arith.mulf %255, %214 : vector<16x32xf32>
    %259 = arith.mulf %254, %256 : vector<16x32xf32>
    %260 = arith.addf %258, %259 : vector<16x32xf32>
    %261 = math.tanh %260 : vector<16x32xf32>
    %262 = arith.mulf %257, %261 : vector<16x32xf32>
    %263 = arith.truncf %262 : vector<16x32xf32> to vector<16x32xbf16>
    %cst_66 = arith.constant dense<0.000000e+00> : vector<16x128xf32>
    %264 = tpu.matmul %263, %5, %cst_66 {dimension_numbers = #tpu.dot_dimension_numbers<[1], [0], [0], [1], [0, 0, 1, 1], [], []>} : vector<16x32xbf16>, vector<32x128xbf16>, vector<16x128xf32> -> vector<16x128xf32>
    %265 = vector.broadcast %7 : vector<1x128xf32> to vector<16x128xf32>
    %266 = arith.addf %264, %265 : vector<16x128xf32>
    %267 = arith.truncf %238 : vector<16x32xf32> to vector<16x32xbf16>
    %cst_67 = arith.constant dense<0.000000e+00> : vector<16x128xf32>
    %268 = tpu.matmul %267, %3, %cst_67 {dimension_numbers = #tpu.dot_dimension_numbers<[1], [0], [0], [1], [0, 0, 1, 1], [], []>} : vector<16x32xbf16>, vector<32x128xbf16>, vector<16x128xf32> -> vector<16x128xf32>
    %269 = arith.addf %266, %268 : vector<16x128xf32>
    %270 = arith.negf %269 : vector<16x128xf32>
    %271 = math.exp %270 : vector<16x128xf32>
    %cst_68 = arith.constant 1.000000e+00 : f32
    %272 = vector.broadcast %cst_68 : f32 to vector<16x128xf32>
    %273 = arith.addf %272, %271 : vector<16x128xf32>
    %274 = arith.divf %272, %273 : vector<16x128xf32>
    %275 = math.tanh %269 : vector<16x128xf32>
    %276 = vector.extract_strided_slice %274 {offsets = [0, 0], sizes = [16, 32], strides = [1, 1]} : vector<16x128xf32> to vector<16x32xf32>
    %277 = vector.extract_strided_slice %274 {offsets = [0, 32], sizes = [16, 32], strides = [1, 1]} : vector<16x128xf32> to vector<16x32xf32>
    %278 = vector.extract_strided_slice %275 {offsets = [0, 64], sizes = [16, 32], strides = [1, 1]} : vector<16x128xf32> to vector<16x32xf32>
    %279 = vector.extract_strided_slice %274 {offsets = [0, 96], sizes = [16, 32], strides = [1, 1]} : vector<16x128xf32> to vector<16x32xf32>
    %280 = arith.mulf %277, %236 : vector<16x32xf32>
    %281 = arith.mulf %276, %278 : vector<16x32xf32>
    %282 = arith.addf %280, %281 : vector<16x32xf32>
    %283 = math.tanh %282 : vector<16x32xf32>
    %284 = arith.mulf %279, %283 : vector<16x32xf32>
    %285 = arith.truncf %284 : vector<16x32xf32> to vector<16x32xbf16>
    %cst_69 = arith.constant dense<0.000000e+00> : vector<16x128xf32>
    %286 = tpu.matmul %285, %8, %cst_69 {dimension_numbers = #tpu.dot_dimension_numbers<[1], [0], [0], [1], [0, 0, 1, 1], [], []>} : vector<16x32xbf16>, vector<32x128xbf16>, vector<16x128xf32> -> vector<16x128xf32>
    %287 = vector.broadcast %9 : vector<1x128xf32> to vector<16x128xf32>
    %288 = arith.addf %286, %287 : vector<16x128xf32>
    %c0_70 = arith.constant 0 : index
    %c640_71 = arith.constant 640 : index
    %289 = vector.load %arg7[%c0_70, %c640_71] : memref<16x1024xf32, #tpu.memory_space<vmem>>, vector<16x128xf32>
    tpu.vector_store %arg7[%c0_70, %c640_71], %288 {strides = array<i32>} : memref<16x1024xf32, #tpu.memory_space<vmem>>, vector<16x128xf32>,
    %c0_72 = arith.constant 0 : index
    %c768 = arith.constant 768 : index
    %290 = vector.load %arg1[%c0_72, %c768] : memref<16x1024xf32, #tpu.memory_space<vmem>>, vector<16x128xf32>
    %291 = arith.truncf %262 : vector<16x32xf32> to vector<16x32xbf16>
    %cst_73 = arith.constant dense<0.000000e+00> : vector<16x128xf32>
    %292 = tpu.matmul %291, %1, %cst_73 {dimension_numbers = #tpu.dot_dimension_numbers<[1], [0], [0], [1], [0, 0, 1, 1], [], []>} : vector<16x32xbf16>, vector<32x128xbf16>, vector<16x128xf32> -> vector<16x128xf32>
    %293 = arith.addf %290, %292 : vector<16x128xf32>
    %294 = arith.negf %293 : vector<16x128xf32>
    %295 = math.exp %294 : vector<16x128xf32>
    %cst_74 = arith.constant 1.000000e+00 : f32
    %296 = vector.broadcast %cst_74 : f32 to vector<16x128xf32>
    %297 = arith.addf %296, %295 : vector<16x128xf32>
    %298 = arith.divf %296, %297 : vector<16x128xf32>
    %299 = math.tanh %293 : vector<16x128xf32>
    %300 = vector.extract_strided_slice %298 {offsets = [0, 0], sizes = [16, 32], strides = [1, 1]} : vector<16x128xf32> to vector<16x32xf32>
    %301 = vector.extract_strided_slice %298 {offsets = [0, 32], sizes = [16, 32], strides = [1, 1]} : vector<16x128xf32> to vector<16x32xf32>
    %302 = vector.extract_strided_slice %299 {offsets = [0, 64], sizes = [16, 32], strides = [1, 1]} : vector<16x128xf32> to vector<16x32xf32>
    %303 = vector.extract_strided_slice %298 {offsets = [0, 96], sizes = [16, 32], strides = [1, 1]} : vector<16x128xf32> to vector<16x32xf32>
    %304 = arith.mulf %301, %260 : vector<16x32xf32>
    %305 = arith.mulf %300, %302 : vector<16x32xf32>
    %306 = arith.addf %304, %305 : vector<16x32xf32>
    %307 = math.tanh %306 : vector<16x32xf32>
    %308 = arith.mulf %303, %307 : vector<16x32xf32>
    %309 = arith.truncf %308 : vector<16x32xf32> to vector<16x32xbf16>
    %cst_75 = arith.constant dense<0.000000e+00> : vector<16x128xf32>
    %310 = tpu.matmul %309, %5, %cst_75 {dimension_numbers = #tpu.dot_dimension_numbers<[1], [0], [0], [1], [0, 0, 1, 1], [], []>} : vector<16x32xbf16>, vector<32x128xbf16>, vector<16x128xf32> -> vector<16x128xf32>
    %311 = vector.broadcast %7 : vector<1x128xf32> to vector<16x128xf32>
    %312 = arith.addf %310, %311 : vector<16x128xf32>
    %313 = arith.truncf %284 : vector<16x32xf32> to vector<16x32xbf16>
    %cst_76 = arith.constant dense<0.000000e+00> : vector<16x128xf32>
    %314 = tpu.matmul %313, %3, %cst_76 {dimension_numbers = #tpu.dot_dimension_numbers<[1], [0], [0], [1], [0, 0, 1, 1], [], []>} : vector<16x32xbf16>, vector<32x128xbf16>, vector<16x128xf32> -> vector<16x128xf32>
    %315 = arith.addf %312, %314 : vector<16x128xf32>
    %316 = arith.negf %315 : vector<16x128xf32>
    %317 = math.exp %316 : vector<16x128xf32>
    %cst_77 = arith.constant 1.000000e+00 : f32
    %318 = vector.broadcast %cst_77 : f32 to vector<16x128xf32>
    %319 = arith.addf %318, %317 : vector<16x128xf32>
    %320 = arith.divf %318, %319 : vector<16x128xf32>
    %321 = math.tanh %315 : vector<16x128xf32>
    %322 = vector.extract_strided_slice %320 {offsets = [0, 0], sizes = [16, 32], strides = [1, 1]} : vector<16x128xf32> to vector<16x32xf32>
    %323 = vector.extract_strided_slice %320 {offsets = [0, 32], sizes = [16, 32], strides = [1, 1]} : vector<16x128xf32> to vector<16x32xf32>
    %324 = vector.extract_strided_slice %321 {offsets = [0, 64], sizes = [16, 32], strides = [1, 1]} : vector<16x128xf32> to vector<16x32xf32>
    %325 = vector.extract_strided_slice %320 {offsets = [0, 96], sizes = [16, 32], strides = [1, 1]} : vector<16x128xf32> to vector<16x32xf32>
    %326 = arith.mulf %323, %282 : vector<16x32xf32>
    %327 = arith.mulf %322, %324 : vector<16x32xf32>
    %328 = arith.addf %326, %327 : vector<16x32xf32>
    %329 = math.tanh %328 : vector<16x32xf32>
    %330 = arith.mulf %325, %329 : vector<16x32xf32>
    %331 = arith.truncf %330 : vector<16x32xf32> to vector<16x32xbf16>
    %cst_78 = arith.constant dense<0.000000e+00> : vector<16x128xf32>
    %332 = tpu.matmul %331, %8, %cst_78 {dimension_numbers = #tpu.dot_dimension_numbers<[1], [0], [0], [1], [0, 0, 1, 1], [], []>} : vector<16x32xbf16>, vector<32x128xbf16>, vector<16x128xf32> -> vector<16x128xf32>
    %333 = vector.broadcast %9 : vector<1x128xf32> to vector<16x128xf32>
    %334 = arith.addf %332, %333 : vector<16x128xf32>
    %c0_79 = arith.constant 0 : index
    %c768_80 = arith.constant 768 : index
    %335 = vector.load %arg7[%c0_79, %c768_80] : memref<16x1024xf32, #tpu.memory_space<vmem>>, vector<16x128xf32>
    tpu.vector_store %arg7[%c0_79, %c768_80], %334 {strides = array<i32>} : memref<16x1024xf32, #tpu.memory_space<vmem>>, vector<16x128xf32>,
    %c0_81 = arith.constant 0 : index
    %c896 = arith.constant 896 : index
    %336 = vector.load %arg1[%c0_81, %c896] : memref<16x1024xf32, #tpu.memory_space<vmem>>, vector<16x128xf32>
    %337 = arith.truncf %308 : vector<16x32xf32> to vector<16x32xbf16>
    %cst_82 = arith.constant dense<0.000000e+00> : vector<16x128xf32>
    %338 = tpu.matmul %337, %1, %cst_82 {dimension_numbers = #tpu.dot_dimension_numbers<[1], [0], [0], [1], [0, 0, 1, 1], [], []>} : vector<16x32xbf16>, vector<32x128xbf16>, vector<16x128xf32> -> vector<16x128xf32>
    %339 = arith.addf %336, %338 : vector<16x128xf32>
    %340 = arith.negf %339 : vector<16x128xf32>
    %341 = math.exp %340 : vector<16x128xf32>
    %cst_83 = arith.constant 1.000000e+00 : f32
    %342 = vector.broadcast %cst_83 : f32 to vector<16x128xf32>
    %343 = arith.addf %342, %341 : vector<16x128xf32>
    %344 = arith.divf %342, %343 : vector<16x128xf32>
    %345 = math.tanh %339 : vector<16x128xf32>
    %346 = vector.extract_strided_slice %344 {offsets = [0, 0], sizes = [16, 32], strides = [1, 1]} : vector<16x128xf32> to vector<16x32xf32>
    %347 = vector.extract_strided_slice %344 {offsets = [0, 32], sizes = [16, 32], strides = [1, 1]} : vector<16x128xf32> to vector<16x32xf32>
    %348 = vector.extract_strided_slice %345 {offsets = [0, 64], sizes = [16, 32], strides = [1, 1]} : vector<16x128xf32> to vector<16x32xf32>
    %349 = vector.extract_strided_slice %344 {offsets = [0, 96], sizes = [16, 32], strides = [1, 1]} : vector<16x128xf32> to vector<16x32xf32>
    %350 = arith.mulf %347, %306 : vector<16x32xf32>
    %351 = arith.mulf %346, %348 : vector<16x32xf32>
    %352 = arith.addf %350, %351 : vector<16x32xf32>
    %353 = math.tanh %352 : vector<16x32xf32>
    %354 = arith.mulf %349, %353 : vector<16x32xf32>
    %355 = arith.truncf %354 : vector<16x32xf32> to vector<16x32xbf16>
    %cst_84 = arith.constant dense<0.000000e+00> : vector<16x128xf32>
    %356 = tpu.matmul %355, %5, %cst_84 {dimension_numbers = #tpu.dot_dimension_numbers<[1], [0], [0], [1], [0, 0, 1, 1], [], []>} : vector<16x32xbf16>, vector<32x128xbf16>, vector<16x128xf32> -> vector<16x128xf32>
    %357 = vector.broadcast %7 : vector<1x128xf32> to vector<16x128xf32>
    %358 = arith.addf %356, %357 : vector<16x128xf32>
    %359 = arith.truncf %330 : vector<16x32xf32> to vector<16x32xbf16>
    %cst_85 = arith.constant dense<0.000000e+00> : vector<16x128xf32>
    %360 = tpu.matmul %359, %3, %cst_85 {dimension_numbers = #tpu.dot_dimension_numbers<[1], [0], [0], [1], [0, 0, 1, 1], [], []>} : vector<16x32xbf16>, vector<32x128xbf16>, vector<16x128xf32> -> vector<16x128xf32>
    %361 = arith.addf %358, %360 : vector<16x128xf32>
    %362 = arith.negf %361 : vector<16x128xf32>
    %363 = math.exp %362 : vector<16x128xf32>
    %cst_86 = arith.constant 1.000000e+00 : f32
    %364 = vector.broadcast %cst_86 : f32 to vector<16x128xf32>
    %365 = arith.addf %364, %363 : vector<16x128xf32>
    %366 = arith.divf %364, %365 : vector<16x128xf32>
    %367 = math.tanh %361 : vector<16x128xf32>
    %368 = vector.extract_strided_slice %366 {offsets = [0, 0], sizes = [16, 32], strides = [1, 1]} : vector<16x128xf32> to vector<16x32xf32>
    %369 = vector.extract_strided_slice %366 {offsets = [0, 32], sizes = [16, 32], strides = [1, 1]} : vector<16x128xf32> to vector<16x32xf32>
    %370 = vector.extract_strided_slice %367 {offsets = [0, 64], sizes = [16, 32], strides = [1, 1]} : vector<16x128xf32> to vector<16x32xf32>
    %371 = vector.extract_strided_slice %366 {offsets = [0, 96], sizes = [16, 32], strides = [1, 1]} : vector<16x128xf32> to vector<16x32xf32>
    %372 = arith.mulf %369, %328 : vector<16x32xf32>
    %373 = arith.mulf %368, %370 : vector<16x32xf32>
    %374 = arith.addf %372, %373 : vector<16x32xf32>
    %375 = math.tanh %374 : vector<16x32xf32>
    %376 = arith.mulf %371, %375 : vector<16x32xf32>
    %377 = arith.truncf %376 : vector<16x32xf32> to vector<16x32xbf16>
    %cst_87 = arith.constant dense<0.000000e+00> : vector<16x128xf32>
    %378 = tpu.matmul %377, %8, %cst_87 {dimension_numbers = #tpu.dot_dimension_numbers<[1], [0], [0], [1], [0, 0, 1, 1], [], []>} : vector<16x32xbf16>, vector<32x128xbf16>, vector<16x128xf32> -> vector<16x128xf32>
    %379 = vector.broadcast %9 : vector<1x128xf32> to vector<16x128xf32>
    %380 = arith.addf %378, %379 : vector<16x128xf32>
    %c0_88 = arith.constant 0 : index
    %c896_89 = arith.constant 896 : index
    %381 = vector.load %arg7[%c0_88, %c896_89] : memref<16x1024xf32, #tpu.memory_space<vmem>>, vector<16x128xf32>
    tpu.vector_store %arg7[%c0_88, %c896_89], %380 {strides = array<i32>} : memref<16x1024xf32, #tpu.memory_space<vmem>>, vector<16x128xf32>,
    return
  }
  func.func @transform_0(%arg0: i32) -> (i32, i32) {
    %c0_i32 = arith.constant 0 : i32
    %c0_i32_0 = arith.constant 0 : i32
    return %arg0, %c0_i32 : i32, i32
  }
  func.func @transform_1(%arg0: i32) -> (i32, i32, i32) {
    %c0_i32 = arith.constant 0 : i32
    %c0_i32_0 = arith.constant 0 : i32
    %c0_i32_1 = arith.constant 0 : i32
    %c0_i32_2 = arith.constant 0 : i32
    return %c0_i32, %c0_i32_0, %c0_i32_1 : i32, i32, i32
  }
  func.func @transform_2(%arg0: i32) -> (i32, i32, i32) {
    %c0_i32 = arith.constant 0 : i32
    %c0_i32_0 = arith.constant 0 : i32
    %c0_i32_1 = arith.constant 0 : i32
    %c0_i32_2 = arith.constant 0 : i32
    return %c0_i32, %c0_i32_0, %c0_i32_1 : i32, i32, i32
  }
  func.func @transform_3(%arg0: i32) -> (i32, i32, i32) {
    %c0_i32 = arith.constant 0 : i32
    %c0_i32_0 = arith.constant 0 : i32
    %c0_i32_1 = arith.constant 0 : i32
    %c0_i32_2 = arith.constant 0 : i32
    return %c0_i32, %c0_i32_0, %c0_i32_1 : i32, i32, i32
  }
  func.func @transform_4(%arg0: i32) -> (i32, i32) {
    %c0_i32 = arith.constant 0 : i32
    %c0_i32_0 = arith.constant 0 : i32
    %c0_i32_1 = arith.constant 0 : i32
    return %c0_i32, %c0_i32_0 : i32, i32
  }
  func.func @transform_5(%arg0: i32) -> (i32, i32) {
    %c0_i32 = arith.constant 0 : i32
    %c0_i32_0 = arith.constant 0 : i32
    %c0_i32_1 = arith.constant 0 : i32
    return %c0_i32, %c0_i32_0 : i32, i32
  }
  func.func @transform_6(%arg0: i32) -> (i32, i32) {
    %c0_i32 = arith.constant 0 : i32
    %c0_i32_0 = arith.constant 0 : i32
    return %arg0, %c0_i32 : i32, i32
  }
}

</mosaic_0001>

<llo_original>
// kernel: smiles_lstm_forward.1
$region0: #{smiles_lstm_forward.1}
  #allocation0 [shape = 'u32[]', space=smem, size = 0x4, offset = 0x4, fixed_abs, tag = 'smem constant byte address 0x4 - core index']
  #allocation1 [shape = 'u32[144,128]{1,0:T(1,128)}', space=vmem, size = 0x12000, scoped, tag = 'internal scratch']
  %s0 = inlined_call_operand.vmem [shape: f32[32,1024], index: 0, kind: input, shape index: {}]
  %s1 = inlined_call_operand.vmem [shape: bf16[2,32,128], index: 1, kind: input, shape index: {}]
  %s2 = inlined_call_operand.vmem [shape: bf16[1,32,128], index: 2, kind: input, shape index: {}]
  %s3 = inlined_call_operand.vmem [shape: f32[1,1,128], index: 3, kind: input, shape index: {}]
  %s4 = inlined_call_operand.vmem [shape: bf16[32,128], index: 4, kind: input, shape index: {}]
  %s5 = inlined_call_operand.vmem [shape: f32[1,128], index: 5, kind: input, shape index: {}]
  %s6 = inlined_call_operand.vmem [shape: f32[32,1024], index: 6, kind: output, shape index: {}]
  %s7 = sld [smem:[#allocation0]]
  $region57: #{smiles_lstm_forward.1} parent=0
    _
  %s9 = ssub.s32 1, %s7
  %s10 = scalar_select 0, %s9, %s7
  loop: start=0, step=1, limit=4
  $region2: #{smiles_lstm_forward.1} parent=0 // loop_pre_header
    _
  $region3: #{smiles_lstm_forward.1} parent=0 // loop_header
    %s12 = sphi 0, %s16
    %p13 = scmp.ge.s32.totalorder %s12, 4
    %s22 = sphi 0, %s24
    %s25 = sphi 0, %s22
    %s26 = sphi 0, %s25
    %s42 = sphi 0, %s26
    %s46 = sphi 0, %s46
    %s48 = sphi 0, %s46
    %s49 = sphi 0, %s48
    %s63 = sphi 0, %s49
    %s67 = sphi 0, %s67
    %s69 = sphi 0, %s67
    %s70 = sphi 0, %s69
    %s84 = sphi 0, %s70
    %s88 = sphi 0, %s88
    %s90 = sphi 0, %s88
    %s91 = sphi 0, %s90
    %s105 = sphi 0, %s91
    %s109 = sphi 0, %s109
    %s111 = sphi 0, %s109
    %s112 = sphi 0, %s111
    %s126 = sphi 0, %s112
    %s130 = sphi 0, %s130
    %s132 = sphi 0, %s130
    %s133 = sphi 0, %s132
    %s147 = sphi 0, %s133
    %s153 = sphi 0, %s155
    %s156 = sphi 0, %s153
    %s157 = sphi 0, %s156
    %s173 = sphi 0, %s157
  $region4: #{smiles_lstm_forward.1} parent=0 // loop_header_branch
    %15 = sbr.rel (%p13) target = $region8
  $region5: #{smiles_lstm_forward.1} parent=0 // loop_body
    %s17 = ssub.s32 %s12, 1
    %s18 = ssub.s32 %s12, 2
    %s19 = sadd.s32 %s12, 1
    %s20 = ssub.s32 %s12, %s19
    %p21 = scmp.eq.s32.totalorder %s20, 0
    %s23 = sadd.s32 %s22, 1
    %s24 = scalar_select %p21, %s22, %s23
    %p27 = pneg %p21
    %p28 = scmp.eq.s32.totalorder %s12, 1
    %p29 = por %p27, %p28
    %p30 = scmp.ne.s32.totalorder %s22, %s25
    %p31 = scmp.eq.s32.totalorder %s12, 0
    %p32 = por %p30, %p31
    %p33 = scmp.ne.s32.totalorder %s22, %s25
    %p34 = scmp.eq.s32.totalorder %s17, 1
    %p35 = por %p33, %p34
    %p36 = scmp.ne.s32.totalorder %s25, %s26
    %p37 = scmp.eq.s32.totalorder %s17, 0
    %p38 = por %p36, %p37
    %p39 = scmp.ne.s32.totalorder %s25, %s26
    %p40 = scmp.eq.s32.totalorder %s18, 1
    %p41 = por %p39, %p40
    %p43 = scmp.ne.s32.totalorder %s26, %s42
    %p44 = scmp.eq.s32.totalorder %s18, 0
    %p45 = por %p43, %p44
    %s47 = sadd.s32 %s46, 1
    %p50 = scmp.eq.s32.totalorder %s12, 1
    %p51 = scmp.ne.s32.totalorder %s46, %s48
    %p52 = scmp.eq.s32.totalorder %s12, 0
    %p53 = por %p51, %p52
    %p54 = scmp.ne.s32.totalorder %s46, %s48
    %p55 = scmp.eq.s32.totalorder %s17, 1
    %p56 = por %p54, %p55
    %p57 = scmp.ne.s32.totalorder %s48, %s49
    %p58 = scmp.eq.s32.totalorder %s17, 0
    %p59 = por %p57, %p58
    %p60 = scmp.ne.s32.totalorder %s48, %s49
    %p61 = scmp.eq.s32.totalorder %s18, 1
    %p62 = por %p60, %p61
    %p64 = scmp.ne.s32.totalorder %s49, %s63
    %p65 = scmp.eq.s32.totalorder %s18, 0
    %p66 = por %p64, %p65
    %s68 = sadd.s32 %s67, 1
    %p71 = scmp.eq.s32.totalorder %s12, 1
    %p72 = scmp.ne.s32.totalorder %s67, %s69
    %p73 = scmp.eq.s32.totalorder %s12, 0
    %p74 = por %p72, %p73
    %p75 = scmp.ne.s32.totalorder %s67, %s69
    %p76 = scmp.eq.s32.totalorder %s17, 1
    %p77 = por %p75, %p76
    %p78 = scmp.ne.s32.totalorder %s69, %s70
    %p79 = scmp.eq.s32.totalorder %s17, 0
    %p80 = por %p78, %p79
    %p81 = scmp.ne.s32.totalorder %s69, %s70
    %p82 = scmp.eq.s32.totalorder %s18, 1
    %p83 = por %p81, %p82
    %p85 = scmp.ne.s32.totalorder %s70, %s84
    %p86 = scmp.eq.s32.totalorder %s18, 0
    %p87 = por %p85, %p86
    %s89 = sadd.s32 %s88, 1
    %p92 = scmp.eq.s32.totalorder %s12, 1
    %p93 = scmp.ne.s32.totalorder %s88, %s90
    %p94 = scmp.eq.s32.totalorder %s12, 0
    %p95 = por %p93, %p94
    %p96 = scmp.ne.s32.totalorder %s88, %s90
    %p97 = scmp.eq.s32.totalorder %s17, 1
    %p98 = por %p96, %p97
    %p99 = scmp.ne.s32.totalorder %s90, %s91
    %p100 = scmp.eq.s32.totalorder %s17, 0
    %p101 = por %p99, %p100
    %p102 = scmp.ne.s32.totalorder %s90, %s91
    %p103 = scmp.eq.s32.totalorder %s18, 1
    %p104 = por %p102, %p103
    %p106 = scmp.ne.s32.totalorder %s91, %s105
    %p107 = scmp.eq.s32.totalorder %s18, 0
    %p108 = por %p106, %p107
    %s110 = sadd.s32 %s109, 1
    %p113 = scmp.eq.s32.totalorder %s12, 1
    %p114 = scmp.ne.s32.totalorder %s109, %s111
    %p115 = scmp.eq.s32.totalorder %s12, 0
    %p116 = por %p114, %p115
    %p117 = scmp.ne.s32.totalorder %s109, %s111
    %p118 = scmp.eq.s32.totalorder %s17, 1
    %p119 = por %p117, %p118
    %p120 = scmp.ne.s32.totalorder %s111, %s112
    %p121 = scmp.eq.s32.totalorder %s17, 0
    %p122 = por %p120, %p121
    %p123 = scmp.ne.s32.totalorder %s111, %s112
    %p124 = scmp.eq.s32.totalorder %s18, 1
    %p125 = por %p123, %p124
    %p127 = scmp.ne.s32.totalorder %s112, %s126
    %p128 = scmp.eq.s32.totalorder %s18, 0
    %p129 = por %p127, %p128
    %s131 = sadd.s32 %s130, 1
    %p134 = scmp.eq.s32.totalorder %s12, 1
    %p135 = scmp.ne.s32.totalorder %s130, %s132
    %p136 = scmp.eq.s32.totalorder %s12, 0
    %p137 = por %p135, %p136
    %p138 = scmp.ne.s32.totalorder %s130, %s132
    %p139 = scmp.eq.s32.totalorder %s17, 1
    %p140 = por %p138, %p139
    %p141 = scmp.ne.s32.totalorder %s132, %s133
    %p142 = scmp.eq.s32.totalorder %s17, 0
    %p143 = por %p141, %p142
    %p144 = scmp.ne.s32.totalorder %s132, %s133
    %p145 = scmp.eq.s32.totalorder %s18, 1
    %p146 = por %p144, %p145
    %p148 = scmp.ne.s32.totalorder %s133, %s147
    %p149 = scmp.eq.s32.totalorder %s18, 0
    %p150 = por %p148, %p149
    %s151 = ssub.s32 %s12, %s19
    %p152 = scmp.eq.s32.totalorder %s151, 0
    %s154 = sadd.s32 %s153, 1
    %s155 = scalar_select %p152, %s153, %s154
    %p158 = pneg %p152
    %p159 = scmp.eq.s32.totalorder %s12, 1
    %p160 = por %p158, %p159
    %p161 = scmp.ne.s32.totalorder %s153, %s156
    %p162 = scmp.eq.s32.totalorder %s12, 0
    %p163 = por %p161, %p162
    %p164 = scmp.ne.s32.totalorder %s153, %s156
    %p165 = scmp.eq.s32.totalorder %s17, 1
    %p166 = por %p164, %p165
    %p167 = scmp.ne.s32.totalorder %s156, %s157
    %p168 = scmp.eq.s32.totalorder %s17, 0
    %p169 = por %p167, %p168
    %p170 = scmp.ne.s32.totalorder %s156, %s157
    %p171 = scmp.eq.s32.totalorder %s18, 1
    %p172 = por %p170, %p171
    %p174 = scmp.ne.s32.totalorder %s157, %s173
    %p175 = scmp.eq.s32.totalorder %s18, 0
    %p176 = por %p174, %p175
    %p177 = scmp.le.s32.totalorder 1, %s12
    %p178 = scmp.lt.s32.totalorder %s12, 3
    %p179 = pnand %p177, %p178
    %p180 = pneg %p179
    // Predicated region
    $region9: #{smiles_lstm_forward.1} parent=5 // pred_check
      _
    $region10: #{smiles_lstm_forward.1} parent=5 // pred_check_branch
      %182 = sbr.rel (%p179) target = $region12
    $region11: #{smiles_lstm_forward.1} parent=5 // pred_region
      %s183 = ssub.s32 %s12, 1
      // Predicated region
      $region13: #{smiles_lstm_forward.1} parent=11 // pred_check
        %p184 = pneg %p59
      $region14: #{smiles_lstm_forward.1} parent=11 // pred_check_branch
        %186 = sbr.rel (%p184) target = $region16
      $region15: #{smiles_lstm_forward.1} parent=11 // pred_region
        _
      $region16: #{smiles_lstm_forward.1} parent=11 // pred_fallthru
        _
      // Predicated region
      $region17: #{smiles_lstm_forward.1} parent=11 // pred_check
        %p187 = pneg %p80
      $region18: #{smiles_lstm_forward.1} parent=11 // pred_check_branch
        %189 = sbr.rel (%p187) target = $region20
      $region19: #{smiles_lstm_forward.1} parent=11 // pred_region
        _
      $region20: #{smiles_lstm_forward.1} parent=11 // pred_fallthru
        _
      // Predicated region
      $region21: #{smiles_lstm_forward.1} parent=11 // pred_check
        %p190 = pneg %p101
      $region22: #{smiles_lstm_forward.1} parent=11 // pred_check_branch
        %192 = sbr.rel (%p190) target = $region24
      $region23: #{smiles_lstm_forward.1} parent=11 // pred_region
        _
      $region24: #{smiles_lstm_forward.1} parent=11 // pred_fallthru
        _
      // Predicated region
      $region25: #{smiles_lstm_forward.1} parent=11 // pred_check
        %p193 = pneg %p122
      $region26: #{smiles_lstm_forward.1} parent=11 // pred_check_branch
        %195 = sbr.rel (%p193) target = $region28
      $region27: #{smiles_lstm_forward.1} parent=11 // pred_region
        _
      $region28: #{smiles_lstm_forward.1} parent=11 // pred_fallthru
        _
      // Predicated region
      $region29: #{smiles_lstm_forward.1} parent=11 // pred_check
        %p196 = pneg %p143
      $region30: #{smiles_lstm_forward.1} parent=11 // pred_check_branch
        %198 = sbr.rel (%p196) target = $region32
      $region31: #{smiles_lstm_forward.1} parent=11 // pred_region
        _
      $region32: #{smiles_lstm_forward.1} parent=11 // pred_fallthru
        _
    $region12: #{smiles_lstm_forward.1} parent=5 // pred_fallthru
      _
    %p199 = scmp.lt.s32.totalorder %s12, 2
    // Predicated region
    $region33: #{smiles_lstm_forward.1} parent=5 // pred_check
      %p200 = pneg %p199
    $region34: #{smiles_lstm_forward.1} parent=5 // pred_check_branch
      %202 = sbr.rel (%p200) target = $region36
    $region35: #{smiles_lstm_forward.1} parent=5 // pred_region
      // Predicated region
      $region37: #{smiles_lstm_forward.1} parent=35 // pred_check
        %p203 = pneg %p32
      $region38: #{smiles_lstm_forward.1} parent=35 // pred_check_branch
        %205 = sbr.rel (%p203) target = $region40
      $region39: #{smiles_lstm_forward.1} parent=35 // pred_region
        %s206 = smul.u32 2, %s12
        %p207 = scmp.lt.s32.totalorder %s206, 3
        %s208 = scalar_select %p207, %s206, 3
        %s209 = smul.addr %s208, 8
        %s210 = smul.addr %s209, 8
        %s211 = scalar_lea.vmem %s0, %s210
        %s212 = smul.u32 2, %s12
      $region40: #{smiles_lstm_forward.1} parent=35 // pred_fallthru
        _
    $region36: #{smiles_lstm_forward.1} parent=5 // pred_fallthru
      _
    %p213 = scmp.le.s32.totalorder 1, %s12
    %p214 = scmp.lt.s32.totalorder %s12, 3
    %p215 = pnand %p213, %p214
    %p216 = pneg %p215
    // Predicated region
    $region41: #{smiles_lstm_forward.1} parent=5 // pred_check
      _
    $region42: #{smiles_lstm_forward.1} parent=5 // pred_check_branch
      %218 = sbr.rel (%p215) target = $region44
    $region43: #{smiles_lstm_forward.1} parent=5 // pred_region
      %s219 = ssub.s32 %s12, 1
      %s220 = smul.u32 2, %s17
      %p221 = scmp.lt.s32.totalorder %s220, 3
      %s222 = scalar_select %p221, %s220, 3
      %s223 = smul.addr %s222, 8
      %s224 = smul.addr %s223, 8
      %s225 = scalar_lea.vmem %s0, %s224
      %p226 = pneg %p38
      %p227 = pneg %p35
      %p228 = pneg %p59
      %p229 = pneg %p56
      %p230 = pneg %p80
      %p231 = pneg %p77
      %p232 = pneg %p101
      %p233 = pneg %p98
      %p234 = pneg %p122
      %p235 = pneg %p119
      %p236 = pneg %p143
      %p237 = pneg %p140
      %p238 = pneg %p169
      %p239 = pneg %p166
      %s240 = smul.u32 2, %s17
      %p241 = scmp.lt.s32.totalorder %s240, 3
      %s242 = scalar_select %p241, %s240, 3
      %s243 = smul.addr %s242, 8
      %s244 = smul.addr %s243, 8
      %s245 = scalar_lea.vmem %s6, %s244
      %s246 = smul.u32 2, %s17
      %p247 = scmp.lt.s32.totalorder %s246, 3
      %s248 = scalar_select %p247, %s246, 3
      %s249 = smul.addr %s248, 8
      %s250 = smul.addr %s249, 8
      %s251 = scalar_lea.vmem %s0, %s250
      %s252 = smul.u32 2, %s17
      %s253 = smul.u32 2, %s17
      %p254 = scmp.lt.s32.totalorder %s253, 3
      %s255 = scalar_select %p254, %s253, 3
      %s256 = smul.addr %s255, 8
      %s257 = smul.addr %s256, 8
      %s258 = scalar_lea.vmem %s6, %s257
      %s259 = smul.u32 2, %s17
      %v261 = vld [vmem:[%s1] sm:$0xf]
      %v262 = vld [vmem:[%s1 + $0x4] sm:$0xf]
      %v263 = vld [vmem:[%s1 + $0x8] sm:$0xf]
      %v264 = vld [vmem:[%s1 + $0xc] sm:$0xf]
      %s265 = scalar_lea.vmem %s1, 16
      %v266 = vld [vmem:[%s265] sm:$0xf]
      %v267 = vld [vmem:[%s265 + $0x4] sm:$0xf]
      %v268 = vld [vmem:[%s265 + $0x8] sm:$0xf]
      %v269 = vld [vmem:[%s265 + $0xc] sm:$0xf]
      %v270 = vld [vmem:[%s2] sm:$0xf]
      %v271 = vld [vmem:[%s2 + $0x4] sm:$0xf]
      %v272 = vld [vmem:[%s2 + $0x8] sm:$0xf]
      %v273 = vld [vmem:[%s2 + $0xc] sm:$0xf]
      %v274 = vld [vmem:[%s3] sm:$0x1]
      %v275 = vld [vmem:[%s4] sm:$0xf]
      %v276 = vld [vmem:[%s4 + $0x4] sm:$0xf]
      %v277 = vld [vmem:[%s4 + $0x8] sm:$0xf]
      %v278 = vld [vmem:[%s4 + $0xc] sm:$0xf]
      %v279 = vld [vmem:[%s5] sm:$0x1]
      %v280 = vld [vmem:[%s251] sm:$0xff]
      %v281 = vld [vmem:[%s251 + $0x40] sm:$0xff]
      %v286 = vunpack.c.l.b16 %v261
      %v287 = vunpack.c.l.b16 %v262
      %v288 = vunpack.c.l.b16 %v263
      %v289 = vunpack.c.l.b16 %v264
      %v290 = vpack.c.b16 %v287, %v286
      %v291 = vpack.c.b16 %v289, %v288
      %vm294 = vcmask 261120
      %v296 = vsel %vm294, 0, 0
      %298 = vmatprep.subr.bf16.mxu0 0
      %299 = vmatpush1.bf16.msra.mxu0 %v290
      %300 = vmatprep.subr.bf16.mxu0 0
      %301 = vmatpush1.bf16.msra.mxu0 %v291
      %302 = vmatprep.subr.bf16.mxu0 0
      %303 = vmatpush1.bf16.msra.mxu0 0
      %304 = vmatprep.subr.bf16.mxu0 0
      %305 = vmatpush1.bf16.msra.mxu0 0
      %306 = vmatprep.subr.bf16.mxu0 0
      %307 = vmatpush1.bf16.msra.mxu0 0
      %308 = vmatprep.subr.bf16.mxu0 0
      %309 = vmatpush1.bf16.msra.mxu0 0
      %310 = vmatprep.subr.bf16.mxu0 0
      %311 = vmatpush1.bf16.msra.mxu0 0
      %312 = vmatprep.subr.bf16.mxu0 0
      %313 = vmatpush1.bf16.msra.mxu0 0
      %314 = vmatprep.subr.bf16.mxu0 0
      %315 = vmatpush1.bf16.msra.mxu0 0
      %316 = vmatprep.subr.bf16.mxu0 0
      %317 = vmatpush1.bf16.msra.mxu0 0
      %318 = vmatprep.subr.bf16.mxu0 0
      %319 = vmatpush1.bf16.msra.mxu0 0
      %320 = vmatprep.subr.bf16.mxu0 0
      %321 = vmatpush1.bf16.msra.mxu0 0
      %322 = vmatprep.subr.bf16.mxu0 0
      %323 = vmatpush1.bf16.msra.mxu0 0
      %324 = vmatprep.subr.bf16.mxu0 0
      %325 = vmatpush1.bf16.msra.mxu0 0
      %326 = vmatprep.subr.bf16.mxu0 0
      %327 = vmatpush1.bf16.msra.mxu0 0
      %328 = vmatprep.subr.bf16.mxu0 0
      %329 = vmatpush1.bf16.msra.mxu0 0
      %330 = vmatprep.mubr.bf16.mxu0 0
      %331 = vmatmul.mubr.bf16.gmra.mrb[0].mxu0 %v296
      %v332 = vpop.f32.mrb[0].mxu0
      %v333 = vadd.f32 0.0, %v332
      %v334 = vpop.f32.mrb[0].mxu0
      %v335 = vpop.f32.mrb[0].mxu0
      %v336 = vadd.f32 0.0, %v335
      %v337 = vpop.f32.mrb[0].mxu0
      %338 = vdwg.mxu0
      %v339 = vadd.f32 %v280, %v333
      %v340 = vadd.f32 %v281, %v336
      %v341 = vxor.u32 %v339, 2147483648
      %v342 = vxor.u32 %v340, 2147483648
      %v343 = vmul.f32 %v341, 1.442695
      %v344 = vpow.pop %v343
      %v345 = vmul.f32 %v342, 1.442695
      %v346 = vpow.pop %v345
      %v347 = vadd.f32 %v344, 1.0
      %v348 = vadd.f32 %v346, 1.0
      %v349 = vrcp.pop %v347
      %v350 = vmul.f32 1.0, %v349
      %v351 = vrcp.pop %v348
      %v352 = vmul.f32 1.0, %v351
      %v353 = vtanh.pop %v339
      %v354 = vtanh.pop %v340
      %v355 = vmul.f32 %v350, 0.0
      %v356 = vmul.f32 %v352, 0.0
      %359 = vrot.lane.b32.xlu0 %v353, 64
      %v360 = vpop.permute.xlu0 %359
      %361 = vrot.lane.b32.xlu0 %v354, 64
      %v362 = vpop.permute.xlu0 %361
      %v365 = vmul.f32 %v350, %v360
      %v366 = vmul.f32 %v352, %v362
      %369 = vrot.lane.b32.xlu0 %v365, 32
      %v370 = vpop.permute.xlu0 %369
      %371 = vrot.lane.b32.xlu0 %v366, 32
      %v372 = vpop.permute.xlu0 %371
      %v375 = vadd.f32 %v355, %v370
      %v376 = vadd.f32 %v356, %v372
      %v377 = vtanh.pop %v375
      %v378 = vtanh.pop %v376
      %381 = vrot.lane.b32.xlu0 %v377, 64
      %v382 = vpop.permute.xlu0 %381
      %383 = vrot.lane.b32.xlu0 %v378, 64
      %v384 = vpop.permute.xlu0 %383
      %v387 = vmul.f32 %v350, %v382
      %v388 = vmul.f32 %v352, %v384
      %v389 = vpack.c.bf16 %v388, %v387
      %v391 = vlaneseq
      %v392 = vshrl.u32 %v391, 7
      %v393 = vsub.s32 0, %v392
      %v394 = vrot.slane %v274, %v393
      %397 = vrot.lane.b32.xlu0 %v389, 32
      %v398 = vpop.permute.xlu0 %397
      %v403 = vunpack.c.l.b16 %v270
      %v404 = vunpack.c.l.b16 %v271
      %v405 = vunpack.c.l.b16 %v272
      %v406 = vunpack.c.l.b16 %v273
      %v407 = vpack.c.b16 %v404, %v403
      %v408 = vpack.c.b16 %v406, %v405
      %v412 = vsel %vm294, %v398, 0
      %414 = vmatprep.subr.bf16.mxu0 0
      %415 = vmatpush1.bf16.msra.mxu0 %v407
      %416 = vmatprep.subr.bf16.mxu0 0
      %417 = vmatpush1.bf16.msra.mxu0 %v408
      %418 = vmatprep.subr.bf16.mxu0 0
      %419 = vmatpush1.bf16.msra.mxu0 0
      %420 = vmatprep.subr.bf16.mxu0 0
      %421 = vmatpush1.bf16.msra.mxu0 0
      %422 = vmatprep.subr.bf16.mxu0 0
      %423 = vmatpush1.bf16.msra.mxu0 0
      %424 = vmatprep.subr.bf16.mxu0 0
      %425 = vmatpush1.bf16.msra.mxu0 0
      %426 = vmatprep.subr.bf16.mxu0 0
      %427 = vmatpush1.bf16.msra.mxu0 0
      %428 = vmatprep.subr.bf16.mxu0 0
      %429 = vmatpush1.bf16.msra.mxu0 0
      %430 = vmatprep.subr.bf16.mxu0 0
      %431 = vmatpush1.bf16.msra.mxu0 0
      %432 = vmatprep.subr.bf16.mxu0 0
      %433 = vmatpush1.bf16.msra.mxu0 0
      %434 = vmatprep.subr.bf16.mxu0 0
      %435 = vmatpush1.bf16.msra.mxu0 0
      %436 = vmatprep.subr.bf16.mxu0 0
      %437 = vmatpush1.bf16.msra.mxu0 0
      %438 = vmatprep.subr.bf16.mxu0 0
      %439 = vmatpush1.bf16.msra.mxu0 0
      %440 = vmatprep.subr.bf16.mxu0 0
      %441 = vmatpush1.bf16.msra.mxu0 0
      %442 = vmatprep.subr.bf16.mxu0 0
      %443 = vmatpush1.bf16.msra.mxu0 0
      %444 = vmatprep.subr.bf16.mxu0 0
      %445 = vmatpush1.bf16.msra.mxu0 0
      %446 = vmatprep.mubr.bf16.mxu0 0
      %447 = vmatmul.mubr.bf16.gmra.mrb[0].mxu0 %v412
      %v448 = vpop.f32.mrb[0].mxu0
      %v449 = vadd.f32 %v394, %v448
      %v450 = vpop.f32.mrb[0].mxu0
      %v451 = vpop.f32.mrb[0].mxu0
      %v452 = vadd.f32 %v394, %v451
      %v453 = vpop.f32.mrb[0].mxu0
      %454 = vdwg.mxu0
      %v459 = vunpack.c.l.b16 %v266
      %v460 = vunpack.c.l.b16 %v267
      %v461 = vunpack.c.l.b16 %v268
      %v462 = vunpack.c.l.b16 %v269
      %v463 = vpack.c.b16 %v460, %v459
      %v464 = vpack.c.b16 %v462, %v461
      %467 = vmatprep.subr.bf16.mxu0 0
      %468 = vmatpush1.bf16.msra.mxu0 %v463
      %469 = vmatprep.subr.bf16.mxu0 0
      %470 = vmatpush1.bf16.msra.mxu0 %v464
      %471 = vmatprep.subr.bf16.mxu0 0
      %472 = vmatpush1.bf16.msra.mxu0 0
      %473 = vmatprep.subr.bf16.mxu0 0
      %474 = vmatpush1.bf16.msra.mxu0 0
      %475 = vmatprep.subr.bf16.mxu0 0
      %476 = vmatpush1.bf16.msra.mxu0 0
      %477 = vmatprep.subr.bf16.mxu0 0
      %478 = vmatpush1.bf16.msra.mxu0 0
      %479 = vmatprep.subr.bf16.mxu0 0
      %480 = vmatpush1.bf16.msra.mxu0 0
      %481 = vmatprep.subr.bf16.mxu0 0
      %482 = vmatpush1.bf16.msra.mxu0 0
      %483 = vmatprep.subr.bf16.mxu0 0
      %484 = vmatpush1.bf16.msra.mxu0 0
      %485 = vmatprep.subr.bf16.mxu0 0
      %486 = vmatpush1.bf16.msra.mxu0 0
      %487 = vmatprep.subr.bf16.mxu0 0
      %488 = vmatpush1.bf16.msra.mxu0 0
      %489 = vmatprep.subr.bf16.mxu0 0
      %490 = vmatpush1.bf16.msra.mxu0 0
      %491 = vmatprep.subr.bf16.mxu0 0
      %492 = vmatpush1.bf16.msra.mxu0 0
      %493 = vmatprep.subr.bf16.mxu0 0
      %494 = vmatpush1.bf16.msra.mxu0 0
      %495 = vmatprep.subr.bf16.mxu0 0
      %496 = vmatpush1.bf16.msra.mxu0 0
      %497 = vmatprep.subr.bf16.mxu0 0
      %498 = vmatpush1.bf16.msra.mxu0 0
      %499 = vmatprep.mubr.bf16.mxu0 0
      %500 = vmatmul.mubr.bf16.gmra.mrb[0].mxu0 %v296
      %v501 = vpop.f32.mrb[0].mxu0
      %v502 = vadd.f32 0.0, %v501
      %v503 = vpop.f32.mrb[0].mxu0
      %v504 = vpop.f32.mrb[0].mxu0
      %v505 = vadd.f32 0.0, %v504
      %v506 = vpop.f32.mrb[0].mxu0
      %507 = vdwg.mxu0
      %v508 = vadd.f32 %v449, %v502
      %v509 = vadd.f32 %v452, %v505
      %v510 = vxor.u32 %v508, 2147483648
      %v511 = vxor.u32 %v509, 2147483648
      %v512 = vmul.f32 %v510, 1.442695
      %v513 = vpow.pop %v512
      %v514 = vmul.f32 %v511, 1.442695
      %v515 = vpow.pop %v514
      %v516 = vadd.f32 %v513, 1.0
      %v517 = vadd.f32 %v515, 1.0
      %v518 = vrcp.pop %v516
      %v519 = vmul.f32 1.0, %v518
      %v520 = vrcp.pop %v517
      %v521 = vmul.f32 1.0, %v520
      %v522 = vtanh.pop %v508
      %v523 = vtanh.pop %v509
      %v524 = vmul.f32 %v519, 0.0
      %v525 = vmul.f32 %v521, 0.0
      %528 = vrot.lane.b32.xlu0 %v522, 64
      %v529 = vpop.permute.xlu0 %528
      %530 = vrot.lane.b32.xlu0 %v523, 64
      %v531 = vpop.permute.xlu0 %530
      %v534 = vmul.f32 %v519, %v529
      %v535 = vmul.f32 %v521, %v531
      %538 = vrot.lane.b32.xlu0 %v534, 32
      %v539 = vpop.permute.xlu0 %538
      %540 = vrot.lane.b32.xlu0 %v535, 32
      %v541 = vpop.permute.xlu0 %540
      %v544 = vadd.f32 %v524, %v539
      %v545 = vadd.f32 %v525, %v541
      %v546 = vtanh.pop %v544
      %v547 = vtanh.pop %v545
      %550 = vrot.lane.b32.xlu0 %v546, 64
      %v551 = vpop.permute.xlu0 %550
      %552 = vrot.lane.b32.xlu0 %v547, 64
      %v553 = vpop.permute.xlu0 %552
      %v556 = vmul.f32 %v519, %v551
      %v557 = vmul.f32 %v521, %v553
      %v558 = vpack.c.bf16 %v557, %v556
      %v560 = vlaneseq
      %v561 = vshrl.u32 %v560, 7
      %v562 = vsub.s32 0, %v561
      %v563 = vrot.slane %v279, %v562
      %566 = vrot.lane.b32.xlu0 %v558, 32
      %v567 = vpop.permute.xlu0 %566
      %v572 = vunpack.c.l.b16 %v275
      %v573 = vunpack.c.l.b16 %v276
      %v574 = vunpack.c.l.b16 %v277
      %v575 = vunpack.c.l.b16 %v278
      %v576 = vpack.c.b16 %v573, %v572
      %v577 = vpack.c.b16 %v575, %v574
      %v581 = vsel %vm294, %v567, 0
      %583 = vmatprep.subr.bf16.mxu0 0
      %584 = vmatpush1.bf16.msra.mxu0 %v576
      %585 = vmatprep.subr.bf16.mxu0 0
      %586 = vmatpush1.bf16.msra.mxu0 %v577
      %587 = vmatprep.subr.bf16.mxu0 0
      %588 = vmatpush1.bf16.msra.mxu0 0
      %589 = vmatprep.subr.bf16.mxu0 0
      %590 = vmatpush1.bf16.msra.mxu0 0
      %591 = vmatprep.subr.bf16.mxu0 0
      %592 = vmatpush1.bf16.msra.mxu0 0
      %593 = vmatprep.subr.bf16.mxu0 0
      %594 = vmatpush1.bf16.msra.mxu0 0
      %595 = vmatprep.subr.bf16.mxu0 0
      %596 = vmatpush1.bf16.msra.mxu0 0
      %597 = vmatprep.subr.bf16.mxu0 0
      %598 = vmatpush1.bf16.msra.mxu0 0
      %599 = vmatprep.subr.bf16.mxu0 0
      %600 = vmatpush1.bf16.msra.mxu0 0
      %601 = vmatprep.subr.bf16.mxu0 0
      %602 = vmatpush1.bf16.msra.mxu0 0
      %603 = vmatprep.subr.bf16.mxu0 0
      %604 = vmatpush1.bf16.msra.mxu0 0
      %605 = vmatprep.subr.bf16.mxu0 0
      %606 = vmatpush1.bf16.msra.mxu0 0
      %607 = vmatprep.subr.bf16.mxu0 0
      %608 = vmatpush1.bf16.msra.mxu0 0
      %609 = vmatprep.subr.bf16.mxu0 0
      %610 = vmatpush1.bf16.msra.mxu0 0
      %611 = vmatprep.subr.bf16.mxu0 0
      %612 = vmatpush1.bf16.msra.mxu0 0
      %613 = vmatprep.subr.bf16.mxu0 0
      %614 = vmatpush1.bf16.msra.mxu0 0
      %615 = vmatprep.mubr.bf16.mxu0 0
      %616 = vmatmul.mubr.bf16.gmra.mrb[0].mxu0 %v581
      %v617 = vpop.f32.mrb[0].mxu0
      %v618 = vadd.f32 %v563, %v617
      %v619 = vpop.f32.mrb[0].mxu0
      %v620 = vpop.f32.mrb[0].mxu0
      %v621 = vadd.f32 %v563, %v620
      %v622 = vpop.f32.mrb[0].mxu0
      %623 = vdwg.mxu0
      %624 = vst [vmem:[%s258] sm:$0xff] %v618
      %625 = vst [vmem:[%s258 + $0x40] sm:$0xff] %v621
      %v626 = vld [vmem:[%s251 + $0x8] sm:$0xff]
      %v627 = vld [vmem:[%s251 + $0x48] sm:$0xff]
      %628 = vmatprep.subr.bf16.mxu0 0
      %629 = vmatpush1.bf16.msra.mxu0 %v290
      %630 = vmatprep.subr.bf16.mxu0 0
      %631 = vmatpush1.bf16.msra.mxu0 %v291
      %632 = vmatprep.subr.bf16.mxu0 0
      %633 = vmatpush1.bf16.msra.mxu0 0
      %634 = vmatprep.subr.bf16.mxu0 0
      %635 = vmatpush1.bf16.msra.mxu0 0
      %636 = vmatprep.subr.bf16.mxu0 0
      %637 = vmatpush1.bf16.msra.mxu0 0
      %638 = vmatprep.subr.bf16.mxu0 0
      %639 = vmatpush1.bf16.msra.mxu0 0
      %640 = vmatprep.subr.bf16.mxu0 0
      %641 = vmatpush1.bf16.msra.mxu0 0
      %642 = vmatprep.subr.bf16.mxu0 0
      %643 = vmatpush1.bf16.msra.mxu0 0
      %644 = vmatprep.subr.bf16.mxu0 0
      %645 = vmatpush1.bf16.msra.mxu0 0
      %646 = vmatprep.subr.bf16.mxu0 0
      %647 = vmatpush1.bf16.msra.mxu0 0
      %648 = vmatprep.subr.bf16.mxu0 0
      %649 = vmatpush1.bf16.msra.mxu0 0
      %650 = vmatprep.subr.bf16.mxu0 0
      %651 = vmatpush1.bf16.msra.mxu0 0
      %652 = vmatprep.subr.bf16.mxu0 0
      %653 = vmatpush1.bf16.msra.mxu0 0
      %654 = vmatprep.subr.bf16.mxu0 0
      %655 = vmatpush1.bf16.msra.mxu0 0
      %656 = vmatprep.subr.bf16.mxu0 0
      %657 = vmatpush1.bf16.msra.mxu0 0
      %658 = vmatprep.subr.bf16.mxu0 0
      %659 = vmatpush1.bf16.msra.mxu0 0
      %660 = vmatprep.mubr.bf16.mxu0 0
      %661 = vmatmul.mubr.bf16.gmra.mrb[0].mxu0 %v412
      %v662 = vpop.f32.mrb[0].mxu0
      %v663 = vadd.f32 0.0, %v662
      %v664 = vpop.f32.mrb[0].mxu0
      %v665 = vpop.f32.mrb[0].mxu0
      %v666 = vadd.f32 0.0, %v665
      %v667 = vpop.f32.mrb[0].mxu0
      %668 = vdwg.mxu0
      %v669 = vadd.f32 %v626, %v663
      %v670 = vadd.f32 %v627, %v666
      %v671 = vxor.u32 %v669, 2147483648
      %v672 = vxor.u32 %v670, 2147483648
      %v673 = vmul.f32 %v671, 1.442695
      %v674 = vpow.pop %v673
      %v675 = vmul.f32 %v672, 1.442695
      %v676 = vpow.pop %v675
      %v677 = vadd.f32 %v674, 1.0
      %v678 = vadd.f32 %v676, 1.0
      %v679 = vrcp.pop %v677
      %v680 = vmul.f32 1.0, %v679
      %v681 = vrcp.pop %v678
      %v682 = vmul.f32 1.0, %v681
      %v683 = vtanh.pop %v669
      %v684 = vtanh.pop %v670
      %v685 = vmul.f32 %v680, %v375
      %v686 = vmul.f32 %v682, %v376
      %689 = vrot.lane.b32.xlu0 %v683, 64
      %v690 = vpop.permute.xlu0 %689
      %691 = vrot.lane.b32.xlu0 %v684, 64
      %v692 = vpop.permute.xlu0 %691
      %v695 = vmul.f32 %v680, %v690
      %v696 = vmul.f32 %v682, %v692
      %699 = vrot.lane.b32.xlu0 %v695, 32
      %v700 = vpop.permute.xlu0 %699
      %701 = vrot.lane.b32.xlu0 %v696, 32
      %v702 = vpop.permute.xlu0 %701
      %v705 = vadd.f32 %v685, %v700
      %v706 = vadd.f32 %v686, %v702
      %v707 = vtanh.pop %v705
      %v708 = vtanh.pop %v706
      %711 = vrot.lane.b32.xlu0 %v707, 64
      %v712 = vpop.permute.xlu0 %711
      %713 = vrot.lane.b32.xlu0 %v708, 64
      %v714 = vpop.permute.xlu0 %713
      %v717 = vmul.f32 %v680, %v712
      %v718 = vmul.f32 %v682, %v714
      %v719 = vpack.c.bf16 %v718, %v717
      %721 = vrot.lane.b32.xlu0 %v719, 32
      %v722 = vpop.permute.xlu0 %721
      %v724 = vsel %vm294, %v722, 0
      %726 = vmatprep.subr.bf16.mxu0 0
      %727 = vmatpush1.bf16.msra.mxu0 %v407
      %728 = vmatprep.subr.bf16.mxu0 0
      %729 = vmatpush1.bf16.msra.mxu0 %v408
      %730 = vmatprep.subr.bf16.mxu0 0
      %731 = vmatpush1.bf16.msra.mxu0 0
      %732 = vmatprep.subr.bf16.mxu0 0
      %733 = vmatpush1.bf16.msra.mxu0 0
      %734 = vmatprep.subr.bf16.mxu0 0
      %735 = vmatpush1.bf16.msra.mxu0 0
      %736 = vmatprep.subr.bf16.mxu0 0
      %737 = vmatpush1.bf16.msra.mxu0 0
      %738 = vmatprep.subr.bf16.mxu0 0
      %739 = vmatpush1.bf16.msra.mxu0 0
      %740 = vmatprep.subr.bf16.mxu0 0
      %741 = vmatpush1.bf16.msra.mxu0 0
      %742 = vmatprep.subr.bf16.mxu0 0
      %743 = vmatpush1.bf16.msra.mxu0 0
      %744 = vmatprep.subr.bf16.mxu0 0
      %745 = vmatpush1.bf16.msra.mxu0 0
      %746 = vmatprep.subr.bf16.mxu0 0
      %747 = vmatpush1.bf16.msra.mxu0 0
      %748 = vmatprep.subr.bf16.mxu0 0
      %749 = vmatpush1.bf16.msra.mxu0 0
      %750 = vmatprep.subr.bf16.mxu0 0
      %751 = vmatpush1.bf16.msra.mxu0 0
      %752 = vmatprep.subr.bf16.mxu0 0
      %753 = vmatpush1.bf16.msra.mxu0 0
      %754 = vmatprep.subr.bf16.mxu0 0
      %755 = vmatpush1.bf16.msra.mxu0 0
      %756 = vmatprep.subr.bf16.mxu0 0
      %757 = vmatpush1.bf16.msra.mxu0 0
      %758 = vmatprep.mubr.bf16.mxu0 0
      %759 = vmatmul.mubr.bf16.gmra.mrb[0].mxu0 %v724
      %v760 = vpop.f32.mrb[0].mxu0
      %v761 = vadd.f32 %v394, %v760
      %v762 = vpop.f32.mrb[0].mxu0
      %v763 = vpop.f32.mrb[0].mxu0
      %v764 = vadd.f32 %v394, %v763
      %v765 = vpop.f32.mrb[0].mxu0
      %766 = vdwg.mxu0
      %767 = vmatprep.subr.bf16.mxu0 0
      %768 = vmatpush1.bf16.msra.mxu0 %v463
      %769 = vmatprep.subr.bf16.mxu0 0
      %770 = vmatpush1.bf16.msra.mxu0 %v464
      %771 = vmatprep.subr.bf16.mxu0 0
      %772 = vmatpush1.bf16.msra.mxu0 0
      %773 = vmatprep.subr.bf16.mxu0 0
      %774 = vmatpush1.bf16.msra.mxu0 0
      %775 = vmatprep.subr.bf16.mxu0 0
      %776 = vmatpush1.bf16.msra.mxu0 0
      %777 = vmatprep.subr.bf16.mxu0 0
      %778 = vmatpush1.bf16.msra.mxu0 0
      %779 = vmatprep.subr.bf16.mxu0 0
      %780 = vmatpush1.bf16.msra.mxu0 0
      %781 = vmatprep.subr.bf16.mxu0 0
      %782 = vmatpush1.bf16.msra.mxu0 0
      %783 = vmatprep.subr.bf16.mxu0 0
      %784 = vmatpush1.bf16.msra.mxu0 0
      %785 = vmatprep.subr.bf16.mxu0 0
      %786 = vmatpush1.bf16.msra.mxu0 0
      %787 = vmatprep.subr.bf16.mxu0 0
      %788 = vmatpush1.bf16.msra.mxu0 0
      %789 = vmatprep.subr.bf16.mxu0 0
      %790 = vmatpush1.bf16.msra.mxu0 0
      %791 = vmatprep.subr.bf16.mxu0 0
      %792 = vmatpush1.bf16.msra.mxu0 0
      %793 = vmatprep.subr.bf16.mxu0 0
      %794 = vmatpush1.bf16.msra.mxu0 0
      %795 = vmatprep.subr.bf16.mxu0 0
      %796 = vmatpush1.bf16.msra.mxu0 0
      %797 = vmatprep.subr.bf16.mxu0 0
      %798 = vmatpush1.bf16.msra.mxu0 0
      %799 = vmatprep.mubr.bf16.mxu0 0
      %800 = vmatmul.mubr.bf16.gmra.mrb[0].mxu0 %v581
      %v801 = vpop.f32.mrb[0].mxu0
      %v802 = vadd.f32 0.0, %v801
      %v803 = vpop.f32.mrb[0].mxu0
      %v804 = vpop.f32.mrb[0].mxu0
      %v805 = vadd.f32 0.0, %v804
      %v806 = vpop.f32.mrb[0].mxu0
      %807 = vdwg.mxu0
      %v808 = vadd.f32 %v761, %v802
      %v809 = vadd.f32 %v764, %v805
      %v810 = vxor.u32 %v808, 2147483648
      %v811 = vxor.u32 %v809, 2147483648
      %v812 = vmul.f32 %v810, 1.442695
      %v813 = vpow.pop %v812
      %v814 = vmul.f32 %v811, 1.442695
      %v815 = vpow.pop %v814
      %v816 = vadd.f32 %v813, 1.0
      %v817 = vadd.f32 %v815, 1.0
      %v818 = vrcp.pop %v816
      %v819 = vmul.f32 1.0, %v818
      %v820 = vrcp.pop %v817
      %v821 = vmul.f32 1.0, %v820
      %v822 = vtanh.pop %v808
      %v823 = vtanh.pop %v809
      %v824 = vmul.f32 %v819, %v544
      %v825 = vmul.f32 %v821, %v545
      %828 = vrot.lane.b32.xlu0 %v822, 64
      %v829 = vpop.permute.xlu0 %828
      %830 = vrot.lane.b32.xlu0 %v823, 64
      %v831 = vpop.permute.xlu0 %830
      %v834 = vmul.f32 %v819, %v829
      %v835 = vmul.f32 %v821, %v831
      %838 = vrot.lane.b32.xlu0 %v834, 32
      %v839 = vpop.permute.xlu0 %838
      %840 = vrot.lane.b32.xlu0 %v835, 32
      %v841 = vpop.permute.xlu0 %840
      %v844 = vadd.f32 %v824, %v839
      %v845 = vadd.f32 %v825, %v841
      %v846 = vtanh.pop %v844
      %v847 = vtanh.pop %v845
      %850 = vrot.lane.b32.xlu0 %v846, 64
      %v851 = vpop.permute.xlu0 %850
      %852 = vrot.lane.b32.xlu0 %v847, 64
      %v853 = vpop.permute.xlu0 %852
      %v856 = vmul.f32 %v819, %v851
      %v857 = vmul.f32 %v821, %v853
      %v858 = vpack.c.bf16 %v857, %v856
      %860 = vrot.lane.b32.xlu0 %v858, 32
      %v861 = vpop.permute.xlu0 %860
      %v863 = vsel %vm294, %v861, 0
      %865 = vmatprep.subr.bf16.mxu0 0
      %866 = vmatpush1.bf16.msra.mxu0 %v576
      %867 = vmatprep.subr.bf16.mxu0 0
      %868 = vmatpush1.bf16.msra.mxu0 %v577
      %869 = vmatprep.subr.bf16.mxu0 0
      %870 = vmatpush1.bf16.msra.mxu0 0
      %871 = vmatprep.subr.bf16.mxu0 0
      %872 = vmatpush1.bf16.msra.mxu0 0
      %873 = vmatprep.subr.bf16.mxu0 0
      %874 = vmatpush1.bf16.msra.mxu0 0
      %875 = vmatprep.subr.bf16.mxu0 0
      %876 = vmatpush1.bf16.msra.mxu0 0
      %877 = vmatprep.subr.bf16.mxu0 0
      %878 = vmatpush1.bf16.msra.mxu0 0
      %879 = vmatprep.subr.bf16.mxu0 0
      %880 = vmatpush1.bf16.msra.mxu0 0
      %881 = vmatprep.subr.bf16.mxu0 0
      %882 = vmatpush1.bf16.msra.mxu0 0
      %883 = vmatprep.subr.bf16.mxu0 0
      %884 = vmatpush1.bf16.msra.mxu0 0
      %885 = vmatprep.subr.bf16.mxu0 0
      %886 = vmatpush1.bf16.msra.mxu0 0
      %887 = vmatprep.subr.bf16.mxu0 0
      %888 = vmatpush1.bf16.msra.mxu0 0
      %889 = vmatprep.subr.bf16.mxu0 0
      %890 = vmatpush1.bf16.msra.mxu0 0
      %891 = vmatprep.subr.bf16.mxu0 0
      %892 = vmatpush1.bf16.msra.mxu0 0
      %893 = vmatprep.subr.bf16.mxu0 0
      %894 = vmatpush1.bf16.msra.mxu0 0
      %895 = vmatprep.subr.bf16.mxu0 0
      %896 = vmatpush1.bf16.msra.mxu0 0
      %897 = vmatprep.mubr.bf16.mxu0 0
      %898 = vmatmul.mubr.bf16.gmra.mrb[0].mxu0 %v863
      %v899 = vpop.f32.mrb[0].mxu0
      %v900 = vadd.f32 %v563, %v899
      %v901 = vpop.f32.mrb[0].mxu0
      %v902 = vpop.f32.mrb[0].mxu0
      %v903 = vadd.f32 %v563, %v902
      %v904 = vpop.f32.mrb[0].mxu0
      %905 = vdwg.mxu0
      %906 = vst [vmem:[%s258 + $0x8] sm:$0xff] %v900
      %907 = vst [vmem:[%s258 + $0x48] sm:$0xff] %v903
      %v908 = vld [vmem:[%s251 + $0x10] sm:$0xff]
      %v909 = vld [vmem:[%s251 + $0x50] sm:$0xff]
      %910 = vmatprep.subr.bf16.mxu0 0
      %911 = vmatpush1.bf16.msra.mxu0 %v290
      %912 = vmatprep.subr.bf16.mxu0 0
      %913 = vmatpush1.bf16.msra.mxu0 %v291
      %914 = vmatprep.subr.bf16.mxu0 0
      %915 = vmatpush1.bf16.msra.mxu0 0
      %916 = vmatprep.subr.bf16.mxu0 0
      %917 = vmatpush1.bf16.msra.mxu0 0
      %918 = vmatprep.subr.bf16.mxu0 0
      %919 = vmatpush1.bf16.msra.mxu0 0
      %920 = vmatprep.subr.bf16.mxu0 0
      %921 = vmatpush1.bf16.msra.mxu0 0
      %922 = vmatprep.subr.bf16.mxu0 0
      %923 = vmatpush1.bf16.msra.mxu0 0
      %924 = vmatprep.subr.bf16.mxu0 0
      %925 = vmatpush1.bf16.msra.mxu0 0
      %926 = vmatprep.subr.bf16.mxu0 0
      %927 = vmatpush1.bf16.msra.mxu0 0
      %928 = vmatprep.subr.bf16.mxu0 0
      %929 = vmatpush1.bf16.msra.mxu0 0
      %930 = vmatprep.subr.bf16.mxu0 0
      %931 = vmatpush1.bf16.msra.mxu0 0
      %932 = vmatprep.subr.bf16.mxu0 0
      %933 = vmatpush1.bf16.msra.mxu0 0
      %934 = vmatprep.subr.bf16.mxu0 0
      %935 = vmatpush1.bf16.msra.mxu0 0
      %936 = vmatprep.subr.bf16.mxu0 0
      %937 = vmatpush1.bf16.msra.mxu0 0
      %938 = vmatprep.subr.bf16.mxu0 0
      %939 = vmatpush1.bf16.msra.mxu0 0
      %940 = vmatprep.subr.bf16.mxu0 0
      %941 = vmatpush1.bf16.msra.mxu0 0
      %942 = vmatprep.mubr.bf16.mxu0 0
      %943 = vmatmul.mubr.bf16.gmra.mrb[0].mxu0 %v724
      %v944 = vpop.f32.mrb[0].mxu0
      %v945 = vadd.f32 0.0, %v944
      %v946 = vpop.f32.mrb[0].mxu0
      %v947 = vpop.f32.mrb[0].mxu0
      %v948 = vadd.f32 0.0, %v947
      %v949 = vpop.f32.mrb[0].mxu0
      %950 = vdwg.mxu0
      %v951 = vadd.f32 %v908, %v945
      %v952 = vadd.f32 %v909, %v948
      %v953 = vxor.u32 %v951, 2147483648
      %v954 = vxor.u32 %v952, 2147483648
      %v955 = vmul.f32 %v953, 1.442695
      %v956 = vpow.pop %v955
      %v957 = vmul.f32 %v954, 1.442695
      %v958 = vpow.pop %v957
      %v959 = vadd.f32 %v956, 1.0
      %v960 = vadd.f32 %v958, 1.0
      %v961 = vrcp.pop %v959
      %v962 = vmul.f32 1.0, %v961
      %v963 = vrcp.pop %v960
      %v964 = vmul.f32 1.0, %v963
      %v965 = vtanh.pop %v951
      %v966 = vtanh.pop %v952
      %v967 = vmul.f32 %v962, %v705
      %v968 = vmul.f32 %v964, %v706
      %971 = vrot.lane.b32.xlu0 %v965, 64
      %v972 = vpop.permute.xlu0 %971
      %973 = vrot.lane.b32.xlu0 %v966, 64
      %v974 = vpop.permute.xlu0 %973
      %v977 = vmul.f32 %v962, %v972
      %v978 = vmul.f32 %v964, %v974
      %981 = vrot.lane.b32.xlu0 %v977, 32
      %v982 = vpop.permute.xlu0 %981
      %983 = vrot.lane.b32.xlu0 %v978, 32
      %v984 = vpop.permute.xlu0 %983
      %v987 = vadd.f32 %v967, %v982
      %v988 = vadd.f32 %v968, %v984
      %v989 = vtanh.pop %v987
      %v990 = vtanh.pop %v988
      %993 = vrot.lane.b32.xlu0 %v989, 64
      %v994 = vpop.permute.xlu0 %993
      %995 = vrot.lane.b32.xlu0 %v990, 64
      %v996 = vpop.permute.xlu0 %995
      %v999 = vmul.f32 %v962, %v994
      %v1000 = vmul.f32 %v964, %v996
      %v1001 = vpack.c.bf16 %v1000, %v999
      %1003 = vrot.lane.b32.xlu0 %v1001, 32
      %v1004 = vpop.permute.xlu0 %1003
      %v1006 = vsel %vm294, %v1004, 0
      %1008 = vmatprep.subr.bf16.mxu0 0
      %1009 = vmatpush1.bf16.msra.mxu0 %v407
      %1010 = vmatprep.subr.bf16.mxu0 0
      %1011 = vmatpush1.bf16.msra.mxu0 %v408
      %1012 = vmatprep.subr.bf16.mxu0 0
      %1013 = vmatpush1.bf16.msra.mxu0 0
      %1014 = vmatprep.subr.bf16.mxu0 0
      %1015 = vmatpush1.bf16.msra.mxu0 0
      %1016 = vmatprep.subr.bf16.mxu0 0
      %1017 = vmatpush1.bf16.msra.mxu0 0
      %1018 = vmatprep.subr.bf16.mxu0 0
      %1019 = vmatpush1.bf16.msra.mxu0 0
      %1020 = vmatprep.subr.bf16.mxu0 0
      %1021 = vmatpush1.bf16.msra.mxu0 0
      %1022 = vmatprep.subr.bf16.mxu0 0
      %1023 = vmatpush1.bf16.msra.mxu0 0
      %1024 = vmatprep.subr.bf16.mxu0 0
      %1025 = vmatpush1.bf16.msra.mxu0 0
      %1026 = vmatprep.subr.bf16.mxu0 0
      %1027 = vmatpush1.bf16.msra.mxu0 0
      %1028 = vmatprep.subr.bf16.mxu0 0
      %1029 = vmatpush1.bf16.msra.mxu0 0
      %1030 = vmatprep.subr.bf16.mxu0 0
      %1031 = vmatpush1.bf16.msra.mxu0 0
      %1032 = vmatprep.subr.bf16.mxu0 0
      %1033 = vmatpush1.bf16.msra.mxu0 0
      %1034 = vmatprep.subr.bf16.mxu0 0
      %1035 = vmatpush1.bf16.msra.mxu0 0
      %1036 = vmatprep.subr.bf16.mxu0 0
      %1037 = vmatpush1.bf16.msra.mxu0 0
      %1038 = vmatprep.subr.bf16.mxu0 0
      %1039 = vmatpush1.bf16.msra.mxu0 0
      %1040 = vmatprep.mubr.bf16.mxu0 0
      %1041 = vmatmul.mubr.bf16.gmra.mrb[0].mxu0 %v1006
      %v1042 = vpop.f32.mrb[0].mxu0
      %v1043 = vadd.f32 %v394, %v1042
      %v1044 = vpop.f32.mrb[0].mxu0
      %v1045 = vpop.f32.mrb[0].mxu0
      %v1046 = vadd.f32 %v394, %v1045
      %v1047 = vpop.f32.mrb[0].mxu0
      %1048 = vdwg.mxu0
      %1049 = vmatprep.subr.bf16.mxu0 0
      %1050 = vmatpush1.bf16.msra.mxu0 %v463
      %1051 = vmatprep.subr.bf16.mxu0 0
      %1052 = vmatpush1.bf16.msra.mxu0 %v464
      %1053 = vmatprep.subr.bf16.mxu0 0
      %1054 = vmatpush1.bf16.msra.mxu0 0
      %1055 = vmatprep.subr.bf16.mxu0 0
      %1056 = vmatpush1.bf16.msra.mxu0 0
      %1057 = vmatprep.subr.bf16.mxu0 0
      %1058 = vmatpush1.bf16.msra.mxu0 0
      %1059 = vmatprep.subr.bf16.mxu0 0
      %1060 = vmatpush1.bf16.msra.mxu0 0
      %1061 = vmatprep.subr.bf16.mxu0 0
      %1062 = vmatpush1.bf16.msra.mxu0 0
      %1063 = vmatprep.subr.bf16.mxu0 0
      %1064 = vmatpush1.bf16.msra.mxu0 0
      %1065 = vmatprep.subr.bf16.mxu0 0
      %1066 = vmatpush1.bf16.msra.mxu0 0
      %1067 = vmatprep.subr.bf16.mxu0 0
      %1068 = vmatpush1.bf16.msra.mxu0 0
      %1069 = vmatprep.subr.bf16.mxu0 0
      %1070 = vmatpush1.bf16.msra.mxu0 0
      %1071 = vmatprep.subr.bf16.mxu0 0
      %1072 = vmatpush1.bf16.msra.mxu0 0
      %1073 = vmatprep.subr.bf16.mxu0 0
      %1074 = vmatpush1.bf16.msra.mxu0 0
      %1075 = vmatprep.subr.bf16.mxu0 0
      %1076 = vmatpush1.bf16.msra.mxu0 0
      %1077 = vmatprep.subr.bf16.mxu0 0
      %1078 = vmatpush1.bf16.msra.mxu0 0
      %1079 = vmatprep.subr.bf16.mxu0 0
      %1080 = vmatpush1.bf16.msra.mxu0 0
      %1081 = vmatprep.mubr.bf16.mxu0 0
      %1082 = vmatmul.mubr.bf16.gmra.mrb[0].mxu0 %v863
      %v1083 = vpop.f32.mrb[0].mxu0
      %v1084 = vadd.f32 0.0, %v1083
      %v1085 = vpop.f32.mrb[0].mxu0
      %v1086 = vpop.f32.mrb[0].mxu0
      %v1087 = vadd.f32 0.0, %v1086
      %v1088 = vpop.f32.mrb[0].mxu0
      %1089 = vdwg.mxu0
      %v1090 = vadd.f32 %v1043, %v1084
      %v1091 = vadd.f32 %v1046, %v1087
      %v1092 = vxor.u32 %v1090, 2147483648
      %v1093 = vxor.u32 %v1091, 2147483648
      %v1094 = vmul.f32 %v1092, 1.442695
      %v1095 = vpow.pop %v1094
      %v1096 = vmul.f32 %v1093, 1.442695
      %v1097 = vpow.pop %v1096
      %v1098 = vadd.f32 %v1095, 1.0
      %v1099 = vadd.f32 %v1097, 1.0
      %v1100 = vrcp.pop %v1098
      %v1101 = vmul.f32 1.0, %v1100
      %v1102 = vrcp.pop %v1099
      %v1103 = vmul.f32 1.0, %v1102
      %v1104 = vtanh.pop %v1090
      %v1105 = vtanh.pop %v1091
      %v1106 = vmul.f32 %v1101, %v844
      %v1107 = vmul.f32 %v1103, %v845
      %1110 = vrot.lane.b32.xlu0 %v1104, 64
      %v1111 = vpop.permute.xlu0 %1110
      %1112 = vrot.lane.b32.xlu0 %v1105, 64
      %v1113 = vpop.permute.xlu0 %1112
      %v1116 = vmul.f32 %v1101, %v1111
      %v1117 = vmul.f32 %v1103, %v1113
      %1120 = vrot.lane.b32.xlu0 %v1116, 32
      %v1121 = vpop.permute.xlu0 %1120
      %1122 = vrot.lane.b32.xlu0 %v1117, 32
      %v1123 = vpop.permute.xlu0 %1122
      %v1126 = vadd.f32 %v1106, %v1121
      %v1127 = vadd.f32 %v1107, %v1123
      %v1128 = vtanh.pop %v1126
      %v1129 = vtanh.pop %v1127
      %1132 = vrot.lane.b32.xlu0 %v1128, 64
      %v1133 = vpop.permute.xlu0 %1132
      %1134 = vrot.lane.b32.xlu0 %v1129, 64
      %v1135 = vpop.permute.xlu0 %1134
      %v1138 = vmul.f32 %v1101, %v1133
      %v1139 = vmul.f32 %v1103, %v1135
      %v1140 = vpack.c.bf16 %v1139, %v1138
      %1142 = vrot.lane.b32.xlu0 %v1140, 32
      %v1143 = vpop.permute.xlu0 %1142
      %v1145 = vsel %vm294, %v1143, 0
      %1147 = vmatprep.subr.bf16.mxu0 0
      %1148 = vmatpush1.bf16.msra.mxu0 %v576
      %1149 = vmatprep.subr.bf16.mxu0 0
      %1150 = vmatpush1.bf16.msra.mxu0 %v577
      %1151 = vmatprep.subr.bf16.mxu0 0
      %1152 = vmatpush1.bf16.msra.mxu0 0
      %1153 = vmatprep.subr.bf16.mxu0 0
      %1154 = vmatpush1.bf16.msra.mxu0 0
      %1155 = vmatprep.subr.bf16.mxu0 0
      %1156 = vmatpush1.bf16.msra.mxu0 0
      %1157 = vmatprep.subr.bf16.mxu0 0
      %1158 = vmatpush1.bf16.msra.mxu0 0
      %1159 = vmatprep.subr.bf16.mxu0 0
      %1160 = vmatpush1.bf16.msra.mxu0 0
      %1161 = vmatprep.subr.bf16.mxu0 0
      %1162 = vmatpush1.bf16.msra.mxu0 0
      %1163 = vmatprep.subr.bf16.mxu0 0
      %1164 = vmatpush1.bf16.msra.mxu0 0
      %1165 = vmatprep.subr.bf16.mxu0 0
      %1166 = vmatpush1.bf16.msra.mxu0 0
      %1167 = vmatprep.subr.bf16.mxu0 0
      %1168 = vmatpush1.bf16.msra.mxu0 0
      %1169 = vmatprep.subr.bf16.mxu0 0
      %1170 = vmatpush1.bf16.msra.mxu0 0
      %1171 = vmatprep.subr.bf16.mxu0 0
      %1172 = vmatpush1.bf16.msra.mxu0 0
      %1173 = vmatprep.subr.bf16.mxu0 0
      %1174 = vmatpush1.bf16.msra.mxu0 0
      %1175 = vmatprep.subr.bf16.mxu0 0
      %1176 = vmatpush1.bf16.msra.mxu0 0
      %1177 = vmatprep.subr.bf16.mxu0 0
      %1178 = vmatpush1.bf16.msra.mxu0 0
      %1179 = vmatprep.mubr.bf16.mxu0 0
      %1180 = vmatmul.mubr.bf16.gmra.mrb[0].mxu0 %v1145
      %v1181 = vpop.f32.mrb[0].mxu0
      %v1182 = vadd.f32 %v563, %v1181
      %v1183 = vpop.f32.mrb[0].mxu0
      %v1184 = vpop.f32.mrb[0].mxu0
      %v1185 = vadd.f32 %v563, %v1184
      %v1186 = vpop.f32.mrb[0].mxu0
      %1187 = vdwg.mxu0
      %1188 = vst [vmem:[%s258 + $0x10] sm:$0xff] %v1182
      %1189 = vst [vmem:[%s258 + $0x50] sm:$0xff] %v1185
      %v1190 = vld [vmem:[%s251 + $0x18] sm:$0xff]
      %v1191 = vld [vmem:[%s251 + $0x58] sm:$0xff]
      %1192 = vmatprep.subr.bf16.mxu0 0
      %1193 = vmatpush1.bf16.msra.mxu0 %v290
      %1194 = vmatprep.subr.bf16.mxu0 0
      %1195 = vmatpush1.bf16.msra.mxu0 %v291
      %1196 = vmatprep.subr.bf16.mxu0 0
      %1197 = vmatpush1.bf16.msra.mxu0 0
      %1198 = vmatprep.subr.bf16.mxu0 0
      %1199 = vmatpush1.bf16.msra.mxu0 0
      %1200 = vmatprep.subr.bf16.mxu0 0
      %1201 = vmatpush1.bf16.msra.mxu0 0
      %1202 = vmatprep.subr.bf16.mxu0 0
      %1203 = vmatpush1.bf16.msra.mxu0 0
      %1204 = vmatprep.subr.bf16.mxu0 0
      %1205 = vmatpush1.bf16.msra.mxu0 0
      %1206 = vmatprep.subr.bf16.mxu0 0
      %1207 = vmatpush1.bf16.msra.mxu0 0
      %1208 = vmatprep.subr.bf16.mxu0 0
      %1209 = vmatpush1.bf16.msra.mxu0 0
      %1210 = vmatprep.subr.bf16.mxu0 0
      %1211 = vmatpush1.bf16.msra.mxu0 0
      %1212 = vmatprep.subr.bf16.mxu0 0
      %1213 = vmatpush1.bf16.msra.mxu0 0
      %1214 = vmatprep.subr.bf16.mxu0 0
      %1215 = vmatpush1.bf16.msra.mxu0 0
      %1216 = vmatprep.subr.bf16.mxu0 0
      %1217 = vmatpush1.bf16.msra.mxu0 0
      %1218 = vmatprep.subr.bf16.mxu0 0
      %1219 = vmatpush1.bf16.msra.mxu0 0
      %1220 = vmatprep.subr.bf16.mxu0 0
      %1221 = vmatpush1.bf16.msra.mxu0 0
      %1222 = vmatprep.subr.bf16.mxu0 0
      %1223 = vmatpush1.bf16.msra.mxu0 0
      %1224 = vmatprep.mubr.bf16.mxu0 0
      %1225 = vmatmul.mubr.bf16.gmra.mrb[0].mxu0 %v1006
      %v1226 = vpop.f32.mrb[0].mxu0
      %v1227 = vadd.f32 0.0, %v1226
      %v1228 = vpop.f32.mrb[0].mxu0
      %v1229 = vpop.f32.mrb[0].mxu0
      %v1230 = vadd.f32 0.0, %v1229
      %v1231 = vpop.f32.mrb[0].mxu0
      %1232 = vdwg.mxu0
      %v1233 = vadd.f32 %v1190, %v1227
      %v1234 = vadd.f32 %v1191, %v1230
      %v1235 = vxor.u32 %v1233, 2147483648
      %v1236 = vxor.u32 %v1234, 2147483648
      %v1237 = vmul.f32 %v1235, 1.442695
      %v1238 = vpow.pop %v1237
      %v1239 = vmul.f32 %v1236, 1.442695
      %v1240 = vpow.pop %v1239
      %v1241 = vadd.f32 %v1238, 1.0
      %v1242 = vadd.f32 %v1240, 1.0
      %v1243 = vrcp.pop %v1241
      %v1244 = vmul.f32 1.0, %v1243
      %v1245 = vrcp.pop %v1242
      %v1246 = vmul.f32 1.0, %v1245
      %v1247 = vtanh.pop %v1233
      %v1248 = vtanh.pop %v1234
      %v1249 = vmul.f32 %v1244, %v987
      %v1250 = vmul.f32 %v1246, %v988
      %1253 = vrot.lane.b32.xlu0 %v1247, 64
      %v1254 = vpop.permute.xlu0 %1253
      %1255 = vrot.lane.b32.xlu0 %v1248, 64
      %v1256 = vpop.permute.xlu0 %1255
      %v1259 = vmul.f32 %v1244, %v1254
      %v1260 = vmul.f32 %v1246, %v1256
      %1263 = vrot.lane.b32.xlu0 %v1259, 32
      %v1264 = vpop.permute.xlu0 %1263
      %1265 = vrot.lane.b32.xlu0 %v1260, 32
      %v1266 = vpop.permute.xlu0 %1265
      %v1269 = vadd.f32 %v1249, %v1264
      %v1270 = vadd.f32 %v1250, %v1266
      %v1271 = vtanh.pop %v1269
      %v1272 = vtanh.pop %v1270
      %1275 = vrot.lane.b32.xlu0 %v1271, 64
      %v1276 = vpop.permute.xlu0 %1275
      %1277 = vrot.lane.b32.xlu0 %v1272, 64
      %v1278 = vpop.permute.xlu0 %1277
      %v1281 = vmul.f32 %v1244, %v1276
      %v1282 = vmul.f32 %v1246, %v1278
      %v1283 = vpack.c.bf16 %v1282, %v1281
      %1285 = vrot.lane.b32.xlu0 %v1283, 32
      %v1286 = vpop.permute.xlu0 %1285
      %v1288 = vsel %vm294, %v1286, 0
      %1290 = vmatprep.subr.bf16.mxu0 0
      %1291 = vmatpush1.bf16.msra.mxu0 %v407
      %1292 = vmatprep.subr.bf16.mxu0 0
      %1293 = vmatpush1.bf16.msra.mxu0 %v408
      %1294 = vmatprep.subr.bf16.mxu0 0
      %1295 = vmatpush1.bf16.msra.mxu0 0
      %1296 = vmatprep.subr.bf16.mxu0 0
      %1297 = vmatpush1.bf16.msra.mxu0 0
      %1298 = vmatprep.subr.bf16.mxu0 0
      %1299 = vmatpush1.bf16.msra.mxu0 0
      %1300 = vmatprep.subr.bf16.mxu0 0
      %1301 = vmatpush1.bf16.msra.mxu0 0
      %1302 = vmatprep.subr.bf16.mxu0 0
      %1303 = vmatpush1.bf16.msra.mxu0 0
      %1304 = vmatprep.subr.bf16.mxu0 0
      %1305 = vmatpush1.bf16.msra.mxu0 0
      %1306 = vmatprep.subr.bf16.mxu0 0
      %1307 = vmatpush1.bf16.msra.mxu0 0
      %1308 = vmatprep.subr.bf16.mxu0 0
      %1309 = vmatpush1.bf16.msra.mxu0 0
      %1310 = vmatprep.subr.bf16.mxu0 0
      %1311 = vmatpush1.bf16.msra.mxu0 0
      %1312 = vmatprep.subr.bf16.mxu0 0
      %1313 = vmatpush1.bf16.msra.mxu0 0
      %1314 = vmatprep.subr.bf16.mxu0 0
      %1315 = vmatpush1.bf16.msra.mxu0 0
      %1316 = vmatprep.subr.bf16.mxu0 0
      %1317 = vmatpush1.bf16.msra.mxu0 0
      %1318 = vmatprep.subr.bf16.mxu0 0
      %1319 = vmatpush1.bf16.msra.mxu0 0
      %1320 = vmatprep.subr.bf16.mxu0 0
      %1321 = vmatpush1.bf16.msra.mxu0 0
      %1322 = vmatprep.mubr.bf16.mxu0 0
      %1323 = vmatmul.mubr.bf16.gmra.mrb[0].mxu0 %v1288
      %v1324 = vpop.f32.mrb[0].mxu0
      %v1325 = vadd.f32 %v394, %v1324
      %v1326 = vpop.f32.mrb[0].mxu0
      %v1327 = vpop.f32.mrb[0].mxu0
      %v1328 = vadd.f32 %v394, %v1327
      %v1329 = vpop.f32.mrb[0].mxu0
      %1330 = vdwg.mxu0
      %1331 = vmatprep.subr.bf16.mxu0 0
      %1332 = vmatpush1.bf16.msra.mxu0 %v463
      %1333 = vmatprep.subr.bf16.mxu0 0
      %1334 = vmatpush1.bf16.msra.mxu0 %v464
      %1335 = vmatprep.subr.bf16.mxu0 0
      %1336 = vmatpush1.bf16.msra.mxu0 0
      %1337 = vmatprep.subr.bf16.mxu0 0
      %1338 = vmatpush1.bf16.msra.mxu0 0
      %1339 = vmatprep.subr.bf16.mxu0 0
      %1340 = vmatpush1.bf16.msra.mxu0 0
      %1341 = vmatprep.subr.bf16.mxu0 0
      %1342 = vmatpush1.bf16.msra.mxu0 0
      %1343 = vmatprep.subr.bf16.mxu0 0
      %1344 = vmatpush1.bf16.msra.mxu0 0
      %1345 = vmatprep.subr.bf16.mxu0 0
      %1346 = vmatpush1.bf16.msra.mxu0 0
      %1347 = vmatprep.subr.bf16.mxu0 0
      %1348 = vmatpush1.bf16.msra.mxu0 0
      %1349 = vmatprep.subr.bf16.mxu0 0
      %1350 = vmatpush1.bf16.msra.mxu0 0
      %1351 = vmatprep.subr.bf16.mxu0 0
      %1352 = vmatpush1.bf16.msra.mxu0 0
      %1353 = vmatprep.subr.bf16.mxu0 0
      %1354 = vmatpush1.bf16.msra.mxu0 0
      %1355 = vmatprep.subr.bf16.mxu0 0
      %1356 = vmatpush1.bf16.msra.mxu0 0
      %1357 = vmatprep.subr.bf16.mxu0 0
      %1358 = vmatpush1.bf16.msra.mxu0 0
      %1359 = vmatprep.subr.bf16.mxu0 0
      %1360 = vmatpush1.bf16.msra.mxu0 0
      %1361 = vmatprep.subr.bf16.mxu0 0
      %1362 = vmatpush1.bf16.msra.mxu0 0
      %1363 = vmatprep.mubr.bf16.mxu0 0
      %1364 = vmatmul.mubr.bf16.gmra.mrb[0].mxu0 %v1145
      %v1365 = vpop.f32.mrb[0].mxu0
      %v1366 = vadd.f32 0.0, %v1365
      %v1367 = vpop.f32.mrb[0].mxu0
      %v1368 = vpop.f32.mrb[0].mxu0
      %v1369 = vadd.f32 0.0, %v1368
      %v1370 = vpop.f32.mrb[0].mxu0
      %1371 = vdwg.mxu0
      %v1372 = vadd.f32 %v1325, %v1366
      %v1373 = vadd.f32 %v1328, %v1369
      %v1374 = vxor.u32 %v1372, 2147483648
      %v1375 = vxor.u32 %v1373, 2147483648
      %v1376 = vmul.f32 %v1374, 1.442695
      %v1377 = vpow.pop %v1376
      %v1378 = vmul.f32 %v1375, 1.442695
      %v1379 = vpow.pop %v1378
      %v1380 = vadd.f32 %v1377, 1.0
      %v1381 = vadd.f32 %v1379, 1.0
      %v1382 = vrcp.pop %v1380
      %v1383 = vmul.f32 1.0, %v1382
      %v1384 = vrcp.pop %v1381
      %v1385 = vmul.f32 1.0, %v1384
      %v1386 = vtanh.pop %v1372
      %v1387 = vtanh.pop %v1373
      %v1388 = vmul.f32 %v1383, %v1126
      %v1389 = vmul.f32 %v1385, %v1127
      %1392 = vrot.lane.b32.xlu0 %v1386, 64
      %v1393 = vpop.permute.xlu0 %1392
      %1394 = vrot.lane.b32.xlu0 %v1387, 64
      %v1395 = vpop.permute.xlu0 %1394
      %v1398 = vmul.f32 %v1383, %v1393
      %v1399 = vmul.f32 %v1385, %v1395
      %1402 = vrot.lane.b32.xlu0 %v1398, 32
      %v1403 = vpop.permute.xlu0 %1402
      %1404 = vrot.lane.b32.xlu0 %v1399, 32
      %v1405 = vpop.permute.xlu0 %1404
      %v1408 = vadd.f32 %v1388, %v1403
      %v1409 = vadd.f32 %v1389, %v1405
      %v1410 = vtanh.pop %v1408
      %v1411 = vtanh.pop %v1409
      %1414 = vrot.lane.b32.xlu0 %v1410, 64
      %v1415 = vpop.permute.xlu0 %1414
      %1416 = vrot.lane.b32.xlu0 %v1411, 64
      %v1417 = vpop.permute.xlu0 %1416
      %v1420 = vmul.f32 %v1383, %v1415
      %v1421 = vmul.f32 %v1385, %v1417
      %v1422 = vpack.c.bf16 %v1421, %v1420
      %1424 = vrot.lane.b32.xlu0 %v1422, 32
      %v1425 = vpop.permute.xlu0 %1424
      %v1427 = vsel %vm294, %v1425, 0
      %1429 = vmatprep.subr.bf16.mxu0 0
      %1430 = vmatpush1.bf16.msra.mxu0 %v576
      %1431 = vmatprep.subr.bf16.mxu0 0
      %1432 = vmatpush1.bf16.msra.mxu0 %v577
      %1433 = vmatprep.subr.bf16.mxu0 0
      %1434 = vmatpush1.bf16.msra.mxu0 0
      %1435 = vmatprep.subr.bf16.mxu0 0
      %1436 = vmatpush1.bf16.msra.mxu0 0
      %1437 = vmatprep.subr.bf16.mxu0 0
      %1438 = vmatpush1.bf16.msra.mxu0 0
      %1439 = vmatprep.subr.bf16.mxu0 0
      %1440 = vmatpush1.bf16.msra.mxu0 0
      %1441 = vmatprep.subr.bf16.mxu0 0
      %1442 = vmatpush1.bf16.msra.mxu0 0
      %1443 = vmatprep.subr.bf16.mxu0 0
      %1444 = vmatpush1.bf16.msra.mxu0 0
      %1445 = vmatprep.subr.bf16.mxu0 0
      %1446 = vmatpush1.bf16.msra.mxu0 0
      %1447 = vmatprep.subr.bf16.mxu0 0
      %1448 = vmatpush1.bf16.msra.mxu0 0
      %1449 = vmatprep.subr.bf16.mxu0 0
      %1450 = vmatpush1.bf16.msra.mxu0 0
      %1451 = vmatprep.subr.bf16.mxu0 0
      %1452 = vmatpush1.bf16.msra.mxu0 0
      %1453 = vmatprep.subr.bf16.mxu0 0
      %1454 = vmatpush1.bf16.msra.mxu0 0
      %1455 = vmatprep.subr.bf16.mxu0 0
      %1456 = vmatpush1.bf16.msra.mxu0 0
      %1457 = vmatprep.subr.bf16.mxu0 0
      %1458 = vmatpush1.bf16.msra.mxu0 0
      %1459 = vmatprep.subr.bf16.mxu0 0
      %1460 = vmatpush1.bf16.msra.mxu0 0
      %1461 = vmatprep.mubr.bf16.mxu0 0
      %1462 = vmatmul.mubr.bf16.gmra.mrb[0].mxu0 %v1427
      %v1463 = vpop.f32.mrb[0].mxu0
      %v1464 = vadd.f32 %v563, %v1463
      %v1465 = vpop.f32.mrb[0].mxu0
      %v1466 = vpop.f32.mrb[0].mxu0
      %v1467 = vadd.f32 %v563, %v1466
      %v1468 = vpop.f32.mrb[0].mxu0
      %1469 = vdwg.mxu0
      %1470 = vst [vmem:[%s258 + $0x18] sm:$0xff] %v1464
      %1471 = vst [vmem:[%s258 + $0x58] sm:$0xff] %v1467
      %v1472 = vld [vmem:[%s251 + $0x20] sm:$0xff]
      %v1473 = vld [vmem:[%s251 + $0x60] sm:$0xff]
      %1474 = vmatprep.subr.bf16.mxu0 0
      %1475 = vmatpush1.bf16.msra.mxu0 %v290
      %1476 = vmatprep.subr.bf16.mxu0 0
      %1477 = vmatpush1.bf16.msra.mxu0 %v291
      %1478 = vmatprep.subr.bf16.mxu0 0
      %1479 = vmatpush1.bf16.msra.mxu0 0
      %1480 = vmatprep.subr.bf16.mxu0 0
      %1481 = vmatpush1.bf16.msra.mxu0 0
      %1482 = vmatprep.subr.bf16.mxu0 0
      %1483 = vmatpush1.bf16.msra.mxu0 0
      %1484 = vmatprep.subr.bf16.mxu0 0
      %1485 = vmatpush1.bf16.msra.mxu0 0
      %1486 = vmatprep.subr.bf16.mxu0 0
      %1487 = vmatpush1.bf16.msra.mxu0 0
      %1488 = vmatprep.subr.bf16.mxu0 0
      %1489 = vmatpush1.bf16.msra.mxu0 0
      %1490 = vmatprep.subr.bf16.mxu0 0
      %1491 = vmatpush1.bf16.msra.mxu0 0
      %1492 = vmatprep.subr.bf16.mxu0 0
      %1493 = vmatpush1.bf16.msra.mxu0 0
      %1494 = vmatprep.subr.bf16.mxu0 0
      %1495 = vmatpush1.bf16.msra.mxu0 0
      %1496 = vmatprep.subr.bf16.mxu0 0
      %1497 = vmatpush1.bf16.msra.mxu0 0
      %1498 = vmatprep.subr.bf16.mxu0 0
      %1499 = vmatpush1.bf16.msra.mxu0 0
      %1500 = vmatprep.subr.bf16.mxu0 0
      %1501 = vmatpush1.bf16.msra.mxu0 0
      %1502 = vmatprep.subr.bf16.mxu0 0
      %1503 = vmatpush1.bf16.msra.mxu0 0
      %1504 = vmatprep.subr.bf16.mxu0 0
      %1505 = vmatpush1.bf16.msra.mxu0 0
      %1506 = vmatprep.mubr.bf16.mxu0 0
      %1507 = vmatmul.mubr.bf16.gmra.mrb[0].mxu0 %v1288
      %v1508 = vpop.f32.mrb[0].mxu0
      %v1509 = vadd.f32 0.0, %v1508
      %v1510 = vpop.f32.mrb[0].mxu0
      %v1511 = vpop.f32.mrb[0].mxu0
      %v1512 = vadd.f32 0.0, %v1511
      %v1513 = vpop.f32.mrb[0].mxu0
      %1514 = vdwg.mxu0
      %v1515 = vadd.f32 %v1472, %v1509
      %v1516 = vadd.f32 %v1473, %v1512
      %v1517 = vxor.u32 %v1515, 2147483648
      %v1518 = vxor.u32 %v1516, 2147483648
      %v1519 = vmul.f32 %v1517, 1.442695
      %v1520 = vpow.pop %v1519
      %v1521 = vmul.f32 %v1518, 1.442695
      %v1522 = vpow.pop %v1521
      %v1523 = vadd.f32 %v1520, 1.0
      %v1524 = vadd.f32 %v1522, 1.0
      %v1525 = vrcp.pop %v1523
      %v1526 = vmul.f32 1.0, %v1525
      %v1527 = vrcp.pop %v1524
      %v1528 = vmul.f32 1.0, %v1527
      %v1529 = vtanh.pop %v1515
      %v1530 = vtanh.pop %v1516
      %v1531 = vmul.f32 %v1526, %v1269
      %v1532 = vmul.f32 %v1528, %v1270
      %1535 = vrot.lane.b32.xlu0 %v1529, 64
      %v1536 = vpop.permute.xlu0 %1535
      %1537 = vrot.lane.b32.xlu0 %v1530, 64
      %v1538 = vpop.permute.xlu0 %1537
      %v1541 = vmul.f32 %v1526, %v1536
      %v1542 = vmul.f32 %v1528, %v1538
      %1545 = vrot.lane.b32.xlu0 %v1541, 32
      %v1546 = vpop.permute.xlu0 %1545
      %1547 = vrot.lane.b32.xlu0 %v1542, 32
      %v1548 = vpop.permute.xlu0 %1547
      %v1551 = vadd.f32 %v1531, %v1546
      %v1552 = vadd.f32 %v1532, %v1548
      %v1553 = vtanh.pop %v1551
      %v1554 = vtanh.pop %v1552
      %1557 = vrot.lane.b32.xlu0 %v1553, 64
      %v1558 = vpop.permute.xlu0 %1557
      %1559 = vrot.lane.b32.xlu0 %v1554, 64
      %v1560 = vpop.permute.xlu0 %1559
      %v1563 = vmul.f32 %v1526, %v1558
      %v1564 = vmul.f32 %v1528, %v1560
      %v1565 = vpack.c.bf16 %v1564, %v1563
      %1567 = vrot.lane.b32.xlu0 %v1565, 32
      %v1568 = vpop.permute.xlu0 %1567
      %v1570 = vsel %vm294, %v1568, 0
      %1572 = vmatprep.subr.bf16.mxu0 0
      %1573 = vmatpush1.bf16.msra.mxu0 %v407
      %1574 = vmatprep.subr.bf16.mxu0 0
      %1575 = vmatpush1.bf16.msra.mxu0 %v408
      %1576 = vmatprep.subr.bf16.mxu0 0
      %1577 = vmatpush1.bf16.msra.mxu0 0
      %1578 = vmatprep.subr.bf16.mxu0 0
      %1579 = vmatpush1.bf16.msra.mxu0 0
      %1580 = vmatprep.subr.bf16.mxu0 0
      %1581 = vmatpush1.bf16.msra.mxu0 0
      %1582 = vmatprep.subr.bf16.mxu0 0
      %1583 = vmatpush1.bf16.msra.mxu0 0
      %1584 = vmatprep.subr.bf16.mxu0 0
      %1585 = vmatpush1.bf16.msra.mxu0 0
      %1586 = vmatprep.subr.bf16.mxu0 0
      %1587 = vmatpush1.bf16.msra.mxu0 0
      %1588 = vmatprep.subr.bf16.mxu0 0
      %1589 = vmatpush1.bf16.msra.mxu0 0
      %1590 = vmatprep.subr.bf16.mxu0 0
      %1591 = vmatpush1.bf16.msra.mxu0 0
      %1592 = vmatprep.subr.bf16.mxu0 0
      %1593 = vmatpush1.bf16.msra.mxu0 0
      %1594 = vmatprep.subr.bf16.mxu0 0
      %1595 = vmatpush1.bf16.msra.mxu0 0
      %1596 = vmatprep.subr.bf16.mxu0 0
      %1597 = vmatpush1.bf16.msra.mxu0 0
      %1598 = vmatprep.subr.bf16.mxu0 0
      %1599 = vmatpush1.bf16.msra.mxu0 0
      %1600 = vmatprep.subr.bf16.mxu0 0
      %1601 = vmatpush1.bf16.msra.mxu0 0
      %1602 = vmatprep.subr.bf16.mxu0 0
      %1603 = vmatpush1.bf16.msra.mxu0 0
      %1604 = vmatprep.mubr.bf16.mxu0 0
      %1605 = vmatmul.mubr.bf16.gmra.mrb[0].mxu0 %v1570
      %v1606 = vpop.f32.mrb[0].mxu0
      %v1607 = vadd.f32 %v394, %v1606
      %v1608 = vpop.f32.mrb[0].mxu0
      %v1609 = vpop.f32.mrb[0].mxu0
      %v1610 = vadd.f32 %v394, %v1609
      %v1611 = vpop.f32.mrb[0].mxu0
      %1612 = vdwg.mxu0
      %1613 = vmatprep.subr.bf16.mxu0 0
      %1614 = vmatpush1.bf16.msra.mxu0 %v463
      %1615 = vmatprep.subr.bf16.mxu0 0
      %1616 = vmatpush1.bf16.msra.mxu0 %v464
      %1617 = vmatprep.subr.bf16.mxu0 0
      %1618 = vmatpush1.bf16.msra.mxu0 0
      %1619 = vmatprep.subr.bf16.mxu0 0
      %1620 = vmatpush1.bf16.msra.mxu0 0
      %1621 = vmatprep.subr.bf16.mxu0 0
      %1622 = vmatpush1.bf16.msra.mxu0 0
      %1623 = vmatprep.subr.bf16.mxu0 0
      %1624 = vmatpush1.bf16.msra.mxu0 0
      %1625 = vmatprep.subr.bf16.mxu0 0
      %1626 = vmatpush1.bf16.msra.mxu0 0
      %1627 = vmatprep.subr.bf16.mxu0 0
      %1628 = vmatpush1.bf16.msra.mxu0 0
      %1629 = vmatprep.subr.bf16.mxu0 0
      %1630 = vmatpush1.bf16.msra.mxu0 0
      %1631 = vmatprep.subr.bf16.mxu0 0
      %1632 = vmatpush1.bf16.msra.mxu0 0
      %1633 = vmatprep.subr.bf16.mxu0 0
      %1634 = vmatpush1.bf16.msra.mxu0 0
      %1635 = vmatprep.subr.bf16.mxu0 0
      %1636 = vmatpush1.bf16.msra.mxu0 0
      %1637 = vmatprep.subr.bf16.mxu0 0
      %1638 = vmatpush1.bf16.msra.mxu0 0
      %1639 = vmatprep.subr.bf16.mxu0 0
      %1640 = vmatpush1.bf16.msra.mxu0 0
      %1641 = vmatprep.subr.bf16.mxu0 0
      %1642 = vmatpush1.bf16.msra.mxu0 0
      %1643 = vmatprep.subr.bf16.mxu0 0
      %1644 = vmatpush1.bf16.msra.mxu0 0
      %1645 = vmatprep.mubr.bf16.mxu0 0
      %1646 = vmatmul.mubr.bf16.gmra.mrb[0].mxu0 %v1427
      %v1647 = vpop.f32.mrb[0].mxu0
      %v1648 = vadd.f32 0.0, %v1647
      %v1649 = vpop.f32.mrb[0].mxu0
      %v1650 = vpop.f32.mrb[0].mxu0
      %v1651 = vadd.f32 0.0, %v1650
      %v1652 = vpop.f32.mrb[0].mxu0
      %1653 = vdwg.mxu0
      %v1654 = vadd.f32 %v1607, %v1648
      %v1655 = vadd.f32 %v1610, %v1651
      %v1656 = vxor.u32 %v1654, 2147483648
      %v1657 = vxor.u32 %v1655, 2147483648
      %v1658 = vmul.f32 %v1656, 1.442695
      %v1659 = vpow.pop %v1658
      %v1660 = vmul.f32 %v1657, 1.442695
      %v1661 = vpow.pop %v1660
      %v1662 = vadd.f32 %v1659, 1.0
      %v1663 = vadd.f32 %v1661, 1.0
      %v1664 = vrcp.pop %v1662
      %v1665 = vmul.f32 1.0, %v1664
      %v1666 = vrcp.pop %v1663
      %v1667 = vmul.f32 1.0, %v1666
      %v1668 = vtanh.pop %v1654
      %v1669 = vtanh.pop %v1655
      %v1670 = vmul.f32 %v1665, %v1408
      %v1671 = vmul.f32 %v1667, %v1409
      %1674 = vrot.lane.b32.xlu0 %v1668, 64
      %v1675 = vpop.permute.xlu0 %1674
      %1676 = vrot.lane.b32.xlu0 %v1669, 64
      %v1677 = vpop.permute.xlu0 %1676
      %v1680 = vmul.f32 %v1665, %v1675
      %v1681 = vmul.f32 %v1667, %v1677
      %1684 = vrot.lane.b32.xlu0 %v1680, 32
      %v1685 = vpop.permute.xlu0 %1684
      %1686 = vrot.lane.b32.xlu0 %v1681, 32
      %v1687 = vpop.permute.xlu0 %1686
      %v1690 = vadd.f32 %v1670, %v1685
      %v1691 = vadd.f32 %v1671, %v1687
      %v1692 = vtanh.pop %v1690
      %v1693 = vtanh.pop %v1691
      %1696 = vrot.lane.b32.xlu0 %v1692, 64
      %v1697 = vpop.permute.xlu0 %1696
      %1698 = vrot.lane.b32.xlu0 %v1693, 64
      %v1699 = vpop.permute.xlu0 %1698
      %v1702 = vmul.f32 %v1665, %v1697
      %v1703 = vmul.f32 %v1667, %v1699
      %v1704 = vpack.c.bf16 %v1703, %v1702
      %1706 = vrot.lane.b32.xlu0 %v1704, 32
      %v1707 = vpop.permute.xlu0 %1706
      %v1709 = vsel %vm294, %v1707, 0
      %1711 = vmatprep.subr.bf16.mxu0 0
      %1712 = vmatpush1.bf16.msra.mxu0 %v576
      %1713 = vmatprep.subr.bf16.mxu0 0
      %1714 = vmatpush1.bf16.msra.mxu0 %v577
      %1715 = vmatprep.subr.bf16.mxu0 0
      %1716 = vmatpush1.bf16.msra.mxu0 0
      %1717 = vmatprep.subr.bf16.mxu0 0
      %1718 = vmatpush1.bf16.msra.mxu0 0
      %1719 = vmatprep.subr.bf16.mxu0 0
      %1720 = vmatpush1.bf16.msra.mxu0 0
      %1721 = vmatprep.subr.bf16.mxu0 0
      %1722 = vmatpush1.bf16.msra.mxu0 0
      %1723 = vmatprep.subr.bf16.mxu0 0
      %1724 = vmatpush1.bf16.msra.mxu0 0
      %1725 = vmatprep.subr.bf16.mxu0 0
      %1726 = vmatpush1.bf16.msra.mxu0 0
      %1727 = vmatprep.subr.bf16.mxu0 0
      %1728 = vmatpush1.bf16.msra.mxu0 0
      %1729 = vmatprep.subr.bf16.mxu0 0
      %1730 = vmatpush1.bf16.msra.mxu0 0
      %1731 = vmatprep.subr.bf16.mxu0 0
      %1732 = vmatpush1.bf16.msra.mxu0 0
      %1733 = vmatprep.subr.bf16.mxu0 0
      %1734 = vmatpush1.bf16.msra.mxu0 0
      %1735 = vmatprep.subr.bf16.mxu0 0
      %1736 = vmatpush1.bf16.msra.mxu0 0
      %1737 = vmatprep.subr.bf16.mxu0 0
      %1738 = vmatpush1.bf16.msra.mxu0 0
      %1739 = vmatprep.subr.bf16.mxu0 0
      %1740 = vmatpush1.bf16.msra.mxu0 0
      %1741 = vmatprep.subr.bf16.mxu0 0
      %1742 = vmatpush1.bf16.msra.mxu0 0
      %1743 = vmatprep.mubr.bf16.mxu0 0
      %1744 = vmatmul.mubr.bf16.gmra.mrb[0].mxu0 %v1709
      %v1745 = vpop.f32.mrb[0].mxu0
      %v1746 = vadd.f32 %v563, %v1745
      %v1747 = vpop.f32.mrb[0].mxu0
      %v1748 = vpop.f32.mrb[0].mxu0
      %v1749 = vadd.f32 %v563, %v1748
      %v1750 = vpop.f32.mrb[0].mxu0
      %1751 = vdwg.mxu0
      %1752 = vst [vmem:[%s258 + $0x20] sm:$0xff] %v1746
      %1753 = vst [vmem:[%s258 + $0x60] sm:$0xff] %v1749
      %v1754 = vld [vmem:[%s251 + $0x28] sm:$0xff]
      %v1755 = vld [vmem:[%s251 + $0x68] sm:$0xff]
      %1756 = vmatprep.subr.bf16.mxu0 0
      %1757 = vmatpush1.bf16.msra.mxu0 %v290
      %1758 = vmatprep.subr.bf16.mxu0 0
      %1759 = vmatpush1.bf16.msra.mxu0 %v291
      %1760 = vmatprep.subr.bf16.mxu0 0
      %1761 = vmatpush1.bf16.msra.mxu0 0
      %1762 = vmatprep.subr.bf16.mxu0 0
      %1763 = vmatpush1.bf16.msra.mxu0 0
      %1764 = vmatprep.subr.bf16.mxu0 0
      %1765 = vmatpush1.bf16.msra.mxu0 0
      %1766 = vmatprep.subr.bf16.mxu0 0
      %1767 = vmatpush1.bf16.msra.mxu0 0
      %1768 = vmatprep.subr.bf16.mxu0 0
      %1769 = vmatpush1.bf16.msra.mxu0 0
      %1770 = vmatprep.subr.bf16.mxu0 0
      %1771 = vmatpush1.bf16.msra.mxu0 0
      %1772 = vmatprep.subr.bf16.mxu0 0
      %1773 = vmatpush1.bf16.msra.mxu0 0
      %1774 = vmatprep.subr.bf16.mxu0 0
      %1775 = vmatpush1.bf16.msra.mxu0 0
      %1776 = vmatprep.subr.bf16.mxu0 0
      %1777 = vmatpush1.bf16.msra.mxu0 0
      %1778 = vmatprep.subr.bf16.mxu0 0
      %1779 = vmatpush1.bf16.msra.mxu0 0
      %1780 = vmatprep.subr.bf16.mxu0 0
      %1781 = vmatpush1.bf16.msra.mxu0 0
      %1782 = vmatprep.subr.bf16.mxu0 0
      %1783 = vmatpush1.bf16.msra.mxu0 0
      %1784 = vmatprep.subr.bf16.mxu0 0
      %1785 = vmatpush1.bf16.msra.mxu0 0
      %1786 = vmatprep.subr.bf16.mxu0 0
      %1787 = vmatpush1.bf16.msra.mxu0 0
      %1788 = vmatprep.mubr.bf16.mxu0 0
      %1789 = vmatmul.mubr.bf16.gmra.mrb[0].mxu0 %v1570
      %v1790 = vpop.f32.mrb[0].mxu0
      %v1791 = vadd.f32 0.0, %v1790
      %v1792 = vpop.f32.mrb[0].mxu0
      %v1793 = vpop.f32.mrb[0].mxu0
      %v1794 = vadd.f32 0.0, %v1793
      %v1795 = vpop.f32.mrb[0].mxu0
      %1796 = vdwg.mxu0
      %v1797 = vadd.f32 %v1754, %v1791
      %v1798 = vadd.f32 %v1755, %v1794
      %v1799 = vxor.u32 %v1797, 2147483648
      %v1800 = vxor.u32 %v1798, 2147483648
      %v1801 = vmul.f32 %v1799, 1.442695
      %v1802 = vpow.pop %v1801
      %v1803 = vmul.f32 %v1800, 1.442695
      %v1804 = vpow.pop %v1803
      %v1805 = vadd.f32 %v1802, 1.0
      %v1806 = vadd.f32 %v1804, 1.0
      %v1807 = vrcp.pop %v1805
      %v1808 = vmul.f32 1.0, %v1807
      %v1809 = vrcp.pop %v1806
      %v1810 = vmul.f32 1.0, %v1809
      %v1811 = vtanh.pop %v1797
      %v1812 = vtanh.pop %v1798
      %v1813 = vmul.f32 %v1808, %v1551
      %v1814 = vmul.f32 %v1810, %v1552
      %1817 = vrot.lane.b32.xlu0 %v1811, 64
      %v1818 = vpop.permute.xlu0 %1817
      %1819 = vrot.lane.b32.xlu0 %v1812, 64
      %v1820 = vpop.permute.xlu0 %1819
      %v1823 = vmul.f32 %v1808, %v1818
      %v1824 = vmul.f32 %v1810, %v1820
      %1827 = vrot.lane.b32.xlu0 %v1823, 32
      %v1828 = vpop.permute.xlu0 %1827
      %1829 = vrot.lane.b32.xlu0 %v1824, 32
      %v1830 = vpop.permute.xlu0 %1829
      %v1833 = vadd.f32 %v1813, %v1828
      %v1834 = vadd.f32 %v1814, %v1830
      %v1835 = vtanh.pop %v1833
      %v1836 = vtanh.pop %v1834
      %1839 = vrot.lane.b32.xlu0 %v1835, 64
      %v1840 = vpop.permute.xlu0 %1839
      %1841 = vrot.lane.b32.xlu0 %v1836, 64
      %v1842 = vpop.permute.xlu0 %1841
      %v1845 = vmul.f32 %v1808, %v1840
      %v1846 = vmul.f32 %v1810, %v1842
      %v1847 = vpack.c.bf16 %v1846, %v1845
      %1849 = vrot.lane.b32.xlu0 %v1847, 32
      %v1850 = vpop.permute.xlu0 %1849
      %v1852 = vsel %vm294, %v1850, 0
      %1854 = vmatprep.subr.bf16.mxu0 0
      %1855 = vmatpush1.bf16.msra.mxu0 %v407
      %1856 = vmatprep.subr.bf16.mxu0 0
      %1857 = vmatpush1.bf16.msra.mxu0 %v408
      %1858 = vmatprep.subr.bf16.mxu0 0
      %1859 = vmatpush1.bf16.msra.mxu0 0
      %1860 = vmatprep.subr.bf16.mxu0 0
      %1861 = vmatpush1.bf16.msra.mxu0 0
      %1862 = vmatprep.subr.bf16.mxu0 0
      %1863 = vmatpush1.bf16.msra.mxu0 0
      %1864 = vmatprep.subr.bf16.mxu0 0
      %1865 = vmatpush1.bf16.msra.mxu0 0
      %1866 = vmatprep.subr.bf16.mxu0 0
      %1867 = vmatpush1.bf16.msra.mxu0 0
      %1868 = vmatprep.subr.bf16.mxu0 0
      %1869 = vmatpush1.bf16.msra.mxu0 0
      %1870 = vmatprep.subr.bf16.mxu0 0
      %1871 = vmatpush1.bf16.msra.mxu0 0
      %1872 = vmatprep.subr.bf16.mxu0 0
      %1873 = vmatpush1.bf16.msra.mxu0 0
      %1874 = vmatprep.subr.bf16.mxu0 0
      %1875 = vmatpush1.bf16.msra.mxu0 0
      %1876 = vmatprep.subr.bf16.mxu0 0
      %1877 = vmatpush1.bf16.msra.mxu0 0
      %1878 = vmatprep.subr.bf16.mxu0 0
      %1879 = vmatpush1.bf16.msra.mxu0 0
      %1880 = vmatprep.subr.bf16.mxu0 0
      %1881 = vmatpush1.bf16.msra.mxu0 0
      %1882 = vmatprep.subr.bf16.mxu0 0
      %1883 = vmatpush1.bf16.msra.mxu0 0
      %1884 = vmatprep.subr.bf16.mxu0 0
      %1885 = vmatpush1.bf16.msra.mxu0 0
      %1886 = vmatprep.mubr.bf16.mxu0 0
      %1887 = vmatmul.mubr.bf16.gmra.mrb[0].mxu0 %v1852
      %v1888 = vpop.f32.mrb[0].mxu0
      %v1889 = vadd.f32 %v394, %v1888
      %v1890 = vpop.f32.mrb[0].mxu0
      %v1891 = vpop.f32.mrb[0].mxu0
      %v1892 = vadd.f32 %v394, %v1891
      %v1893 = vpop.f32.mrb[0].mxu0
      %1894 = vdwg.mxu0
      %1895 = vmatprep.subr.bf16.mxu0 0
      %1896 = vmatpush1.bf16.msra.mxu0 %v463
      %1897 = vmatprep.subr.bf16.mxu0 0
      %1898 = vmatpush1.bf16.msra.mxu0 %v464
      %1899 = vmatprep.subr.bf16.mxu0 0
      %1900 = vmatpush1.bf16.msra.mxu0 0
      %1901 = vmatprep.subr.bf16.mxu0 0
      %1902 = vmatpush1.bf16.msra.mxu0 0
      %1903 = vmatprep.subr.bf16.mxu0 0
      %1904 = vmatpush1.bf16.msra.mxu0 0
      %1905 = vmatprep.subr.bf16.mxu0 0
      %1906 = vmatpush1.bf16.msra.mxu0 0
      %1907 = vmatprep.subr.bf16.mxu0 0
      %1908 = vmatpush1.bf16.msra.mxu0 0
      %1909 = vmatprep.subr.bf16.mxu0 0
      %1910 = vmatpush1.bf16.msra.mxu0 0
      %1911 = vmatprep.subr.bf16.mxu0 0
      %1912 = vmatpush1.bf16.msra.mxu0 0
      %1913 = vmatprep.subr.bf16.mxu0 0
      %1914 = vmatpush1.bf16.msra.mxu0 0
      %1915 = vmatprep.subr.bf16.mxu0 0
      %1916 = vmatpush1.bf16.msra.mxu0 0
      %1917 = vmatprep.subr.bf16.mxu0 0
      %1918 = vmatpush1.bf16.msra.mxu0 0
      %1919 = vmatprep.subr.bf16.mxu0 0
      %1920 = vmatpush1.bf16.msra.mxu0 0
      %1921 = vmatprep.subr.bf16.mxu0 0
      %1922 = vmatpush1.bf16.msra.mxu0 0
      %1923 = vmatprep.subr.bf16.mxu0 0
      %1924 = vmatpush1.bf16.msra.mxu0 0
      %1925 = vmatprep.subr.bf16.mxu0 0
      %1926 = vmatpush1.bf16.msra.mxu0 0
      %1927 = vmatprep.mubr.bf16.mxu0 0
      %1928 = vmatmul.mubr.bf16.gmra.mrb[0].mxu0 %v1709
      %v1929 = vpop.f32.mrb[0].mxu0
      %v1930 = vadd.f32 0.0, %v1929
      %v1931 = vpop.f32.mrb[0].mxu0
      %v1932 = vpop.f32.mrb[0].mxu0
      %v1933 = vadd.f32 0.0, %v1932
      %v1934 = vpop.f32.mrb[0].mxu0
      %1935 = vdwg.mxu0
      %v1936 = vadd.f32 %v1889, %v1930
      %v1937 = vadd.f32 %v1892, %v1933
      %v1938 = vxor.u32 %v1936, 2147483648
      %v1939 = vxor.u32 %v1937, 2147483648
      %v1940 = vmul.f32 %v1938, 1.442695
      %v1941 = vpow.pop %v1940
      %v1942 = vmul.f32 %v1939, 1.442695
      %v1943 = vpow.pop %v1942
      %v1944 = vadd.f32 %v1941, 1.0
      %v1945 = vadd.f32 %v1943, 1.0
      %v1946 = vrcp.pop %v1944
      %v1947 = vmul.f32 1.0, %v1946
      %v1948 = vrcp.pop %v1945
      %v1949 = vmul.f32 1.0, %v1948
      %v1950 = vtanh.pop %v1936
      %v1951 = vtanh.pop %v1937
      %v1952 = vmul.f32 %v1947, %v1690
      %v1953 = vmul.f32 %v1949, %v1691
      %1956 = vrot.lane.b32.xlu0 %v1950, 64
      %v1957 = vpop.permute.xlu0 %1956
      %1958 = vrot.lane.b32.xlu0 %v1951, 64
      %v1959 = vpop.permute.xlu0 %1958
      %v1962 = vmul.f32 %v1947, %v1957
      %v1963 = vmul.f32 %v1949, %v1959
      %1966 = vrot.lane.b32.xlu0 %v1962, 32
      %v1967 = vpop.permute.xlu0 %1966
      %1968 = vrot.lane.b32.xlu0 %v1963, 32
      %v1969 = vpop.permute.xlu0 %1968
      %v1972 = vadd.f32 %v1952, %v1967
      %v1973 = vadd.f32 %v1953, %v1969
      %v1974 = vtanh.pop %v1972
      %v1975 = vtanh.pop %v1973
      %1978 = vrot.lane.b32.xlu0 %v1974, 64
      %v1979 = vpop.permute.xlu0 %1978
      %1980 = vrot.lane.b32.xlu0 %v1975, 64
      %v1981 = vpop.permute.xlu0 %1980
      %v1984 = vmul.f32 %v1947, %v1979
      %v1985 = vmul.f32 %v1949, %v1981
      %v1986 = vpack.c.bf16 %v1985, %v1984
      %1988 = vrot.lane.b32.xlu0 %v1986, 32
      %v1989 = vpop.permute.xlu0 %1988
      %v1991 = vsel %vm294, %v1989, 0
      %1993 = vmatprep.subr.bf16.mxu0 0
      %1994 = vmatpush1.bf16.msra.mxu0 %v576
      %1995 = vmatprep.subr.bf16.mxu0 0
      %1996 = vmatpush1.bf16.msra.mxu0 %v577
      %1997 = vmatprep.subr.bf16.mxu0 0
      %1998 = vmatpush1.bf16.msra.mxu0 0
      %1999 = vmatprep.subr.bf16.mxu0 0
      %2000 = vmatpush1.bf16.msra.mxu0 0
      %2001 = vmatprep.subr.bf16.mxu0 0
      %2002 = vmatpush1.bf16.msra.mxu0 0
      %2003 = vmatprep.subr.bf16.mxu0 0
      %2004 = vmatpush1.bf16.msra.mxu0 0
      %2005 = vmatprep.subr.bf16.mxu0 0
      %2006 = vmatpush1.bf16.msra.mxu0 0
      %2007 = vmatprep.subr.bf16.mxu0 0
      %2008 = vmatpush1.bf16.msra.mxu0 0
      %2009 = vmatprep.subr.bf16.mxu0 0
      %2010 = vmatpush1.bf16.msra.mxu0 0
      %2011 = vmatprep.subr.bf16.mxu0 0
      %2012 = vmatpush1.bf16.msra.mxu0 0
      %2013 = vmatprep.subr.bf16.mxu0 0
      %2014 = vmatpush1.bf16.msra.mxu0 0
      %2015 = vmatprep.subr.bf16.mxu0 0
      %2016 = vmatpush1.bf16.msra.mxu0 0
      %2017 = vmatprep.subr.bf16.mxu0 0
      %2018 = vmatpush1.bf16.msra.mxu0 0
      %2019 = vmatprep.subr.bf16.mxu0 0
      %2020 = vmatpush1.bf16.msra.mxu0 0
      %2021 = vmatprep.subr.bf16.mxu0 0
      %2022 = vmatpush1.bf16.msra.mxu0 0
      %2023 = vmatprep.subr.bf16.mxu0 0
      %2024 = vmatpush1.bf16.msra.mxu0 0
      %2025 = vmatprep.mubr.bf16.mxu0 0
      %2026 = vmatmul.mubr.bf16.gmra.mrb[0].mxu0 %v1991
      %v2027 = vpop.f32.mrb[0].mxu0
      %v2028 = vadd.f32 %v563, %v2027
      %v2029 = vpop.f32.mrb[0].mxu0
      %v2030 = vpop.f32.mrb[0].mxu0
      %v2031 = vadd.f32 %v563, %v2030
      %v2032 = vpop.f32.mrb[0].mxu0
      %2033 = vdwg.mxu0
      %2034 = vst [vmem:[%s258 + $0x28] sm:$0xff] %v2028
      %2035 = vst [vmem:[%s258 + $0x68] sm:$0xff] %v2031
      %v2036 = vld [vmem:[%s251 + $0x30] sm:$0xff]
      %v2037 = vld [vmem:[%s251 + $0x70] sm:$0xff]
      %2038 = vmatprep.subr.bf16.mxu0 0
      %2039 = vmatpush1.bf16.msra.mxu0 %v290
      %2040 = vmatprep.subr.bf16.mxu0 0
      %2041 = vmatpush1.bf16.msra.mxu0 %v291
      %2042 = vmatprep.subr.bf16.mxu0 0
      %2043 = vmatpush1.bf16.msra.mxu0 0
      %2044 = vmatprep.subr.bf16.mxu0 0
      %2045 = vmatpush1.bf16.msra.mxu0 0
      %2046 = vmatprep.subr.bf16.mxu0 0
      %2047 = vmatpush1.bf16.msra.mxu0 0
      %2048 = vmatprep.subr.bf16.mxu0 0
      %2049 = vmatpush1.bf16.msra.mxu0 0
      %2050 = vmatprep.subr.bf16.mxu0 0
      %2051 = vmatpush1.bf16.msra.mxu0 0
      %2052 = vmatprep.subr.bf16.mxu0 0
      %2053 = vmatpush1.bf16.msra.mxu0 0
      %2054 = vmatprep.subr.bf16.mxu0 0
      %2055 = vmatpush1.bf16.msra.mxu0 0
      %2056 = vmatprep.subr.bf16.mxu0 0
      %2057 = vmatpush1.bf16.msra.mxu0 0
      %2058 = vmatprep.subr.bf16.mxu0 0
      %2059 = vmatpush1.bf16.msra.mxu0 0
      %2060 = vmatprep.subr.bf16.mxu0 0
      %2061 = vmatpush1.bf16.msra.mxu0 0
      %2062 = vmatprep.subr.bf16.mxu0 0
      %2063 = vmatpush1.bf16.msra.mxu0 0
      %2064 = vmatprep.subr.bf16.mxu0 0
      %2065 = vmatpush1.bf16.msra.mxu0 0
      %2066 = vmatprep.subr.bf16.mxu0 0
      %2067 = vmatpush1.bf16.msra.mxu0 0
      %2068 = vmatprep.subr.bf16.mxu0 0
      %2069 = vmatpush1.bf16.msra.mxu0 0
      %2070 = vmatprep.mubr.bf16.mxu0 0
      %2071 = vmatmul.mubr.bf16.gmra.mrb[0].mxu0 %v1852
      %v2072 = vpop.f32.mrb[0].mxu0
      %v2073 = vadd.f32 0.0, %v2072
      %v2074 = vpop.f32.mrb[0].mxu0
      %v2075 = vpop.f32.mrb[0].mxu0
      %v2076 = vadd.f32 0.0, %v2075
      %v2077 = vpop.f32.mrb[0].mxu0
      %2078 = vdwg.mxu0
      %v2079 = vadd.f32 %v2036, %v2073
      %v2080 = vadd.f32 %v2037, %v2076
      %v2081 = vxor.u32 %v2079, 2147483648
      %v2082 = vxor.u32 %v2080, 2147483648
      %v2083 = vmul.f32 %v2081, 1.442695
      %v2084 = vpow.pop %v2083
      %v2085 = vmul.f32 %v2082, 1.442695
      %v2086 = vpow.pop %v2085
      %v2087 = vadd.f32 %v2084, 1.0
      %v2088 = vadd.f32 %v2086, 1.0
      %v2089 = vrcp.pop %v2087
      %v2090 = vmul.f32 1.0, %v2089
      %v2091 = vrcp.pop %v2088
      %v2092 = vmul.f32 1.0, %v2091
      %v2093 = vtanh.pop %v2079
      %v2094 = vtanh.pop %v2080
      %v2095 = vmul.f32 %v2090, %v1833
      %v2096 = vmul.f32 %v2092, %v1834
      %2099 = vrot.lane.b32.xlu0 %v2093, 64
      %v2100 = vpop.permute.xlu0 %2099
      %2101 = vrot.lane.b32.xlu0 %v2094, 64
      %v2102 = vpop.permute.xlu0 %2101
      %v2105 = vmul.f32 %v2090, %v2100
      %v2106 = vmul.f32 %v2092, %v2102
      %2109 = vrot.lane.b32.xlu0 %v2105, 32
      %v2110 = vpop.permute.xlu0 %2109
      %2111 = vrot.lane.b32.xlu0 %v2106, 32
      %v2112 = vpop.permute.xlu0 %2111
      %v2115 = vadd.f32 %v2095, %v2110
      %v2116 = vadd.f32 %v2096, %v2112
      %v2117 = vtanh.pop %v2115
      %v2118 = vtanh.pop %v2116
      %2121 = vrot.lane.b32.xlu0 %v2117, 64
      %v2122 = vpop.permute.xlu0 %2121
      %2123 = vrot.lane.b32.xlu0 %v2118, 64
      %v2124 = vpop.permute.xlu0 %2123
      %v2127 = vmul.f32 %v2090, %v2122
      %v2128 = vmul.f32 %v2092, %v2124
      %v2129 = vpack.c.bf16 %v2128, %v2127
      %2131 = vrot.lane.b32.xlu0 %v2129, 32
      %v2132 = vpop.permute.xlu0 %2131
      %v2134 = vsel %vm294, %v2132, 0
      %2136 = vmatprep.subr.bf16.mxu0 0
      %2137 = vmatpush1.bf16.msra.mxu0 %v407
      %2138 = vmatprep.subr.bf16.mxu0 0
      %2139 = vmatpush1.bf16.msra.mxu0 %v408
      %2140 = vmatprep.subr.bf16.mxu0 0
      %2141 = vmatpush1.bf16.msra.mxu0 0
      %2142 = vmatprep.subr.bf16.mxu0 0
      %2143 = vmatpush1.bf16.msra.mxu0 0
      %2144 = vmatprep.subr.bf16.mxu0 0
      %2145 = vmatpush1.bf16.msra.mxu0 0
      %2146 = vmatprep.subr.bf16.mxu0 0
      %2147 = vmatpush1.bf16.msra.mxu0 0
      %2148 = vmatprep.subr.bf16.mxu0 0
      %2149 = vmatpush1.bf16.msra.mxu0 0
      %2150 = vmatprep.subr.bf16.mxu0 0
      %2151 = vmatpush1.bf16.msra.mxu0 0
      %2152 = vmatprep.subr.bf16.mxu0 0
      %2153 = vmatpush1.bf16.msra.mxu0 0
      %2154 = vmatprep.subr.bf16.mxu0 0
      %2155 = vmatpush1.bf16.msra.mxu0 0
      %2156 = vmatprep.subr.bf16.mxu0 0
      %2157 = vmatpush1.bf16.msra.mxu0 0
      %2158 = vmatprep.subr.bf16.mxu0 0
      %2159 = vmatpush1.bf16.msra.mxu0 0
      %2160 = vmatprep.subr.bf16.mxu0 0
      %2161 = vmatpush1.bf16.msra.mxu0 0
      %2162 = vmatprep.subr.bf16.mxu0 0
      %2163 = vmatpush1.bf16.msra.mxu0 0
      %2164 = vmatprep.subr.bf16.mxu0 0
      %2165 = vmatpush1.bf16.msra.mxu0 0
      %2166 = vmatprep.subr.bf16.mxu0 0
      %2167 = vmatpush1.bf16.msra.mxu0 0
      %2168 = vmatprep.mubr.bf16.mxu0 0
      %2169 = vmatmul.mubr.bf16.gmra.mrb[0].mxu0 %v2134
      %v2170 = vpop.f32.mrb[0].mxu0
      %v2171 = vadd.f32 %v394, %v2170
      %v2172 = vpop.f32.mrb[0].mxu0
      %v2173 = vpop.f32.mrb[0].mxu0
      %v2174 = vadd.f32 %v394, %v2173
      %v2175 = vpop.f32.mrb[0].mxu0
      %2176 = vdwg.mxu0
      %2177 = vmatprep.subr.bf16.mxu0 0
      %2178 = vmatpush1.bf16.msra.mxu0 %v463
      %2179 = vmatprep.subr.bf16.mxu0 0
      %2180 = vmatpush1.bf16.msra.mxu0 %v464
      %2181 = vmatprep.subr.bf16.mxu0 0
      %2182 = vmatpush1.bf16.msra.mxu0 0
      %2183 = vmatprep.subr.bf16.mxu0 0
      %2184 = vmatpush1.bf16.msra.mxu0 0
      %2185 = vmatprep.subr.bf16.mxu0 0
      %2186 = vmatpush1.bf16.msra.mxu0 0
      %2187 = vmatprep.subr.bf16.mxu0 0
      %2188 = vmatpush1.bf16.msra.mxu0 0
      %2189 = vmatprep.subr.bf16.mxu0 0
      %2190 = vmatpush1.bf16.msra.mxu0 0
      %2191 = vmatprep.subr.bf16.mxu0 0
      %2192 = vmatpush1.bf16.msra.mxu0 0
      %2193 = vmatprep.subr.bf16.mxu0 0
      %2194 = vmatpush1.bf16.msra.mxu0 0
      %2195 = vmatprep.subr.bf16.mxu0 0
      %2196 = vmatpush1.bf16.msra.mxu0 0
      %2197 = vmatprep.subr.bf16.mxu0 0
      %2198 = vmatpush1.bf16.msra.mxu0 0
      %2199 = vmatprep.subr.bf16.mxu0 0
      %2200 = vmatpush1.bf16.msra.mxu0 0
      %2201 = vmatprep.subr.bf16.mxu0 0
      %2202 = vmatpush1.bf16.msra.mxu0 0
      %2203 = vmatprep.subr.bf16.mxu0 0
      %2204 = vmatpush1.bf16.msra.mxu0 0
      %2205 = vmatprep.subr.bf16.mxu0 0
      %2206 = vmatpush1.bf16.msra.mxu0 0
      %2207 = vmatprep.subr.bf16.mxu0 0
      %2208 = vmatpush1.bf16.msra.mxu0 0
      %2209 = vmatprep.mubr.bf16.mxu0 0
      %2210 = vmatmul.mubr.bf16.gmra.mrb[0].mxu0 %v1991
      %v2211 = vpop.f32.mrb[0].mxu0
      %v2212 = vadd.f32 0.0, %v2211
      %v2213 = vpop.f32.mrb[0].mxu0
      %v2214 = vpop.f32.mrb[0].mxu0
      %v2215 = vadd.f32 0.0, %v2214
      %v2216 = vpop.f32.mrb[0].mxu0
      %2217 = vdwg.mxu0
      %v2218 = vadd.f32 %v2171, %v2212
      %v2219 = vadd.f32 %v2174, %v2215
      %v2220 = vxor.u32 %v2218, 2147483648
      %v2221 = vxor.u32 %v2219, 2147483648
      %v2222 = vmul.f32 %v2220, 1.442695
      %v2223 = vpow.pop %v2222
      %v2224 = vmul.f32 %v2221, 1.442695
      %v2225 = vpow.pop %v2224
      %v2226 = vadd.f32 %v2223, 1.0
      %v2227 = vadd.f32 %v2225, 1.0
      %v2228 = vrcp.pop %v2226
      %v2229 = vmul.f32 1.0, %v2228
      %v2230 = vrcp.pop %v2227
      %v2231 = vmul.f32 1.0, %v2230
      %v2232 = vtanh.pop %v2218
      %v2233 = vtanh.pop %v2219
      %v2234 = vmul.f32 %v2229, %v1972
      %v2235 = vmul.f32 %v2231, %v1973
      %2238 = vrot.lane.b32.xlu0 %v2232, 64
      %v2239 = vpop.permute.xlu0 %2238
      %2240 = vrot.lane.b32.xlu0 %v2233, 64
      %v2241 = vpop.permute.xlu0 %2240
      %v2244 = vmul.f32 %v2229, %v2239
      %v2245 = vmul.f32 %v2231, %v2241
      %2248 = vrot.lane.b32.xlu0 %v2244, 32
      %v2249 = vpop.permute.xlu0 %2248
      %2250 = vrot.lane.b32.xlu0 %v2245, 32
      %v2251 = vpop.permute.xlu0 %2250
      %v2254 = vadd.f32 %v2234, %v2249
      %v2255 = vadd.f32 %v2235, %v2251
      %v2256 = vtanh.pop %v2254
      %v2257 = vtanh.pop %v2255
      %2260 = vrot.lane.b32.xlu0 %v2256, 64
      %v2261 = vpop.permute.xlu0 %2260
      %2262 = vrot.lane.b32.xlu0 %v2257, 64
      %v2263 = vpop.permute.xlu0 %2262
      %v2266 = vmul.f32 %v2229, %v2261
      %v2267 = vmul.f32 %v2231, %v2263
      %v2268 = vpack.c.bf16 %v2267, %v2266
      %2270 = vrot.lane.b32.xlu0 %v2268, 32
      %v2271 = vpop.permute.xlu0 %2270
      %v2273 = vsel %vm294, %v2271, 0
      %2275 = vmatprep.subr.bf16.mxu0 0
      %2276 = vmatpush1.bf16.msra.mxu0 %v576
      %2277 = vmatprep.subr.bf16.mxu0 0
      %2278 = vmatpush1.bf16.msra.mxu0 %v577
      %2279 = vmatprep.subr.bf16.mxu0 0
      %2280 = vmatpush1.bf16.msra.mxu0 0
      %2281 = vmatprep.subr.bf16.mxu0 0
      %2282 = vmatpush1.bf16.msra.mxu0 0
      %2283 = vmatprep.subr.bf16.mxu0 0
      %2284 = vmatpush1.bf16.msra.mxu0 0
      %2285 = vmatprep.subr.bf16.mxu0 0
      %2286 = vmatpush1.bf16.msra.mxu0 0
      %2287 = vmatprep.subr.bf16.mxu0 0
      %2288 = vmatpush1.bf16.msra.mxu0 0
      %2289 = vmatprep.subr.bf16.mxu0 0
      %2290 = vmatpush1.bf16.msra.mxu0 0
      %2291 = vmatprep.subr.bf16.mxu0 0
      %2292 = vmatpush1.bf16.msra.mxu0 0
      %2293 = vmatprep.subr.bf16.mxu0 0
      %2294 = vmatpush1.bf16.msra.mxu0 0
      %2295 = vmatprep.subr.bf16.mxu0 0
      %2296 = vmatpush1.bf16.msra.mxu0 0
      %2297 = vmatprep.subr.bf16.mxu0 0
      %2298 = vmatpush1.bf16.msra.mxu0 0
      %2299 = vmatprep.subr.bf16.mxu0 0
      %2300 = vmatpush1.bf16.msra.mxu0 0
      %2301 = vmatprep.subr.bf16.mxu0 0
      %2302 = vmatpush1.bf16.msra.mxu0 0
      %2303 = vmatprep.subr.bf16.mxu0 0
      %2304 = vmatpush1.bf16.msra.mxu0 0
      %2305 = vmatprep.subr.bf16.mxu0 0
      %2306 = vmatpush1.bf16.msra.mxu0 0
      %2307 = vmatprep.mubr.bf16.mxu0 0
      %2308 = vmatmul.mubr.bf16.gmra.mrb[0].mxu0 %v2273
      %v2309 = vpop.f32.mrb[0].mxu0
      %v2310 = vadd.f32 %v563, %v2309
      %v2311 = vpop.f32.mrb[0].mxu0
      %v2312 = vpop.f32.mrb[0].mxu0
      %v2313 = vadd.f32 %v563, %v2312
      %v2314 = vpop.f32.mrb[0].mxu0
      %2315 = vdwg.mxu0
      %2316 = vst [vmem:[%s258 + $0x30] sm:$0xff] %v2310
      %2317 = vst [vmem:[%s258 + $0x70] sm:$0xff] %v2313
      %v2318 = vld [vmem:[%s251 + $0x38] sm:$0xff]
      %v2319 = vld [vmem:[%s251 + $0x78] sm:$0xff]
      %2320 = vmatprep.subr.bf16.mxu0 0
      %2321 = vmatpush1.bf16.msra.mxu0 %v290
      %2322 = vmatprep.subr.bf16.mxu0 0
      %2323 = vmatpush1.bf16.msra.mxu0 %v291
      %2324 = vmatprep.subr.bf16.mxu0 0
      %2325 = vmatpush1.bf16.msra.mxu0 0
      %2326 = vmatprep.subr.bf16.mxu0 0
      %2327 = vmatpush1.bf16.msra.mxu0 0
      %2328 = vmatprep.subr.bf16.mxu0 0
      %2329 = vmatpush1.bf16.msra.mxu0 0
      %2330 = vmatprep.subr.bf16.mxu0 0
      %2331 = vmatpush1.bf16.msra.mxu0 0
      %2332 = vmatprep.subr.bf16.mxu0 0
      %2333 = vmatpush1.bf16.msra.mxu0 0
      %2334 = vmatprep.subr.bf16.mxu0 0
      %2335 = vmatpush1.bf16.msra.mxu0 0
      %2336 = vmatprep.subr.bf16.mxu0 0
      %2337 = vmatpush1.bf16.msra.mxu0 0
      %2338 = vmatprep.subr.bf16.mxu0 0
      %2339 = vmatpush1.bf16.msra.mxu0 0
      %2340 = vmatprep.subr.bf16.mxu0 0
      %2341 = vmatpush1.bf16.msra.mxu0 0
      %2342 = vmatprep.subr.bf16.mxu0 0
      %2343 = vmatpush1.bf16.msra.mxu0 0
      %2344 = vmatprep.subr.bf16.mxu0 0
      %2345 = vmatpush1.bf16.msra.mxu0 0
      %2346 = vmatprep.subr.bf16.mxu0 0
      %2347 = vmatpush1.bf16.msra.mxu0 0
      %2348 = vmatprep.subr.bf16.mxu0 0
      %2349 = vmatpush1.bf16.msra.mxu0 0
      %2350 = vmatprep.subr.bf16.mxu0 0
      %2351 = vmatpush1.bf16.msra.mxu0 0
      %2352 = vmatprep.mubr.bf16.mxu0 0
      %2353 = vmatmul.mubr.bf16.gmra.mrb[0].mxu0 %v2134
      %v2354 = vpop.f32.mrb[0].mxu0
      %v2355 = vadd.f32 0.0, %v2354
      %v2356 = vpop.f32.mrb[0].mxu0
      %v2357 = vpop.f32.mrb[0].mxu0
      %v2358 = vadd.f32 0.0, %v2357
      %v2359 = vpop.f32.mrb[0].mxu0
      %2360 = vdwg.mxu0
      %v2361 = vadd.f32 %v2318, %v2355
      %v2362 = vadd.f32 %v2319, %v2358
      %v2363 = vxor.u32 %v2361, 2147483648
      %v2364 = vxor.u32 %v2362, 2147483648
      %v2365 = vmul.f32 %v2363, 1.442695
      %v2366 = vpow.pop %v2365
      %v2367 = vmul.f32 %v2364, 1.442695
      %v2368 = vpow.pop %v2367
      %v2369 = vadd.f32 %v2366, 1.0
      %v2370 = vadd.f32 %v2368, 1.0
      %v2371 = vrcp.pop %v2369
      %v2372 = vmul.f32 1.0, %v2371
      %v2373 = vrcp.pop %v2370
      %v2374 = vmul.f32 1.0, %v2373
      %v2375 = vtanh.pop %v2361
      %v2376 = vtanh.pop %v2362
      %v2377 = vmul.f32 %v2372, %v2115
      %v2378 = vmul.f32 %v2374, %v2116
      %2381 = vrot.lane.b32.xlu0 %v2375, 64
      %v2382 = vpop.permute.xlu0 %2381
      %2383 = vrot.lane.b32.xlu0 %v2376, 64
      %v2384 = vpop.permute.xlu0 %2383
      %v2387 = vmul.f32 %v2372, %v2382
      %v2388 = vmul.f32 %v2374, %v2384
      %2391 = vrot.lane.b32.xlu0 %v2387, 32
      %v2392 = vpop.permute.xlu0 %2391
      %2393 = vrot.lane.b32.xlu0 %v2388, 32
      %v2394 = vpop.permute.xlu0 %2393
      %v2397 = vadd.f32 %v2377, %v2392
      %v2398 = vadd.f32 %v2378, %v2394
      %v2399 = vtanh.pop %v2397
      %v2400 = vtanh.pop %v2398
      %2403 = vrot.lane.b32.xlu0 %v2399, 64
      %v2404 = vpop.permute.xlu0 %2403
      %2405 = vrot.lane.b32.xlu0 %v2400, 64
      %v2406 = vpop.permute.xlu0 %2405
      %v2409 = vmul.f32 %v2372, %v2404
      %v2410 = vmul.f32 %v2374, %v2406
      %v2411 = vpack.c.bf16 %v2410, %v2409
      %2413 = vrot.lane.b32.xlu0 %v2411, 32
      %v2414 = vpop.permute.xlu0 %2413
      %v2416 = vsel %vm294, %v2414, 0
      %2418 = vmatprep.subr.bf16.mxu0 0
      %2419 = vmatpush1.bf16.msra.mxu0 %v407
      %2420 = vmatprep.subr.bf16.mxu0 0
      %2421 = vmatpush1.bf16.msra.mxu0 %v408
      %2422 = vmatprep.subr.bf16.mxu0 0
      %2423 = vmatpush1.bf16.msra.mxu0 0
      %2424 = vmatprep.subr.bf16.mxu0 0
      %2425 = vmatpush1.bf16.msra.mxu0 0
      %2426 = vmatprep.subr.bf16.mxu0 0
      %2427 = vmatpush1.bf16.msra.mxu0 0
      %2428 = vmatprep.subr.bf16.mxu0 0
      %2429 = vmatpush1.bf16.msra.mxu0 0
      %2430 = vmatprep.subr.bf16.mxu0 0
      %2431 = vmatpush1.bf16.msra.mxu0 0
      %2432 = vmatprep.subr.bf16.mxu0 0
      %2433 = vmatpush1.bf16.msra.mxu0 0
      %2434 = vmatprep.subr.bf16.mxu0 0
      %2435 = vmatpush1.bf16.msra.mxu0 0
      %2436 = vmatprep.subr.bf16.mxu0 0
      %2437 = vmatpush1.bf16.msra.mxu0 0
      %2438 = vmatprep.subr.bf16.mxu0 0
      %2439 = vmatpush1.bf16.msra.mxu0 0
      %2440 = vmatprep.subr.bf16.mxu0 0
      %2441 = vmatpush1.bf16.msra.mxu0 0
      %2442 = vmatprep.subr.bf16.mxu0 0
      %2443 = vmatpush1.bf16.msra.mxu0 0
      %2444 = vmatprep.subr.bf16.mxu0 0
      %2445 = vmatpush1.bf16.msra.mxu0 0
      %2446 = vmatprep.subr.bf16.mxu0 0
      %2447 = vmatpush1.bf16.msra.mxu0 0
      %2448 = vmatprep.subr.bf16.mxu0 0
      %2449 = vmatpush1.bf16.msra.mxu0 0
      %2450 = vmatprep.mubr.bf16.mxu0 0
      %2451 = vmatmul.mubr.bf16.gmra.mrb[0].mxu0 %v2416
      %v2452 = vpop.f32.mrb[0].mxu0
      %v2453 = vadd.f32 %v394, %v2452
      %v2454 = vpop.f32.mrb[0].mxu0
      %v2455 = vpop.f32.mrb[0].mxu0
      %v2456 = vadd.f32 %v394, %v2455
      %v2457 = vpop.f32.mrb[0].mxu0
      %2458 = vdwg.mxu0
      %2459 = vmatprep.subr.bf16.mxu0 0
      %2460 = vmatpush1.bf16.msra.mxu0 %v463
      %2461 = vmatprep.subr.bf16.mxu0 0
      %2462 = vmatpush1.bf16.msra.mxu0 %v464
      %2463 = vmatprep.subr.bf16.mxu0 0
      %2464 = vmatpush1.bf16.msra.mxu0 0
      %2465 = vmatprep.subr.bf16.mxu0 0
      %2466 = vmatpush1.bf16.msra.mxu0 0
      %2467 = vmatprep.subr.bf16.mxu0 0
      %2468 = vmatpush1.bf16.msra.mxu0 0
      %2469 = vmatprep.subr.bf16.mxu0 0
      %2470 = vmatpush1.bf16.msra.mxu0 0
      %2471 = vmatprep.subr.bf16.mxu0 0
      %2472 = vmatpush1.bf16.msra.mxu0 0
      %2473 = vmatprep.subr.bf16.mxu0 0
      %2474 = vmatpush1.bf16.msra.mxu0 0
      %2475 = vmatprep.subr.bf16.mxu0 0
      %2476 = vmatpush1.bf16.msra.mxu0 0
      %2477 = vmatprep.subr.bf16.mxu0 0
      %2478 = vmatpush1.bf16.msra.mxu0 0
      %2479 = vmatprep.subr.bf16.mxu0 0
      %2480 = vmatpush1.bf16.msra.mxu0 0
      %2481 = vmatprep.subr.bf16.mxu0 0
      %2482 = vmatpush1.bf16.msra.mxu0 0
      %2483 = vmatprep.subr.bf16.mxu0 0
      %2484 = vmatpush1.bf16.msra.mxu0 0
      %2485 = vmatprep.subr.bf16.mxu0 0
      %2486 = vmatpush1.bf16.msra.mxu0 0
      %2487 = vmatprep.subr.bf16.mxu0 0
      %2488 = vmatpush1.bf16.msra.mxu0 0
      %2489 = vmatprep.subr.bf16.mxu0 0
      %2490 = vmatpush1.bf16.msra.mxu0 0
      %2491 = vmatprep.mubr.bf16.mxu0 0
      %2492 = vmatmul.mubr.bf16.gmra.mrb[0].mxu0 %v2273
      %v2493 = vpop.f32.mrb[0].mxu0
      %v2494 = vadd.f32 0.0, %v2493
      %v2495 = vpop.f32.mrb[0].mxu0
      %v2496 = vpop.f32.mrb[0].mxu0
      %v2497 = vadd.f32 0.0, %v2496
      %v2498 = vpop.f32.mrb[0].mxu0
      %2499 = vdwg.mxu0
      %v2500 = vadd.f32 %v2453, %v2494
      %v2501 = vadd.f32 %v2456, %v2497
      %v2502 = vxor.u32 %v2500, 2147483648
      %v2503 = vxor.u32 %v2501, 2147483648
      %v2504 = vmul.f32 %v2502, 1.442695
      %v2505 = vpow.pop %v2504
      %v2506 = vmul.f32 %v2503, 1.442695
      %v2507 = vpow.pop %v2506
      %v2508 = vadd.f32 %v2505, 1.0
      %v2509 = vadd.f32 %v2507, 1.0
      %v2510 = vrcp.pop %v2508
      %v2511 = vmul.f32 1.0, %v2510
      %v2512 = vrcp.pop %v2509
      %v2513 = vmul.f32 1.0, %v2512
      %v2514 = vtanh.pop %v2500
      %v2515 = vtanh.pop %v2501
      %v2516 = vmul.f32 %v2511, %v2254
      %v2517 = vmul.f32 %v2513, %v2255
      %2520 = vrot.lane.b32.xlu0 %v2514, 64
      %v2521 = vpop.permute.xlu0 %2520
      %2522 = vrot.lane.b32.xlu0 %v2515, 64
      %v2523 = vpop.permute.xlu0 %2522
      %v2526 = vmul.f32 %v2511, %v2521
      %v2527 = vmul.f32 %v2513, %v2523
      %2530 = vrot.lane.b32.xlu0 %v2526, 32
      %v2531 = vpop.permute.xlu0 %2530
      %2532 = vrot.lane.b32.xlu0 %v2527, 32
      %v2533 = vpop.permute.xlu0 %2532
      %v2536 = vadd.f32 %v2516, %v2531
      %v2537 = vadd.f32 %v2517, %v2533
      %v2538 = vtanh.pop %v2536
      %v2539 = vtanh.pop %v2537
      %2542 = vrot.lane.b32.xlu0 %v2538, 64
      %v2543 = vpop.permute.xlu0 %2542
      %2544 = vrot.lane.b32.xlu0 %v2539, 64
      %v2545 = vpop.permute.xlu0 %2544
      %v2548 = vmul.f32 %v2511, %v2543
      %v2549 = vmul.f32 %v2513, %v2545
      %v2550 = vpack.c.bf16 %v2549, %v2548
      %2552 = vrot.lane.b32.xlu0 %v2550, 32
      %v2553 = vpop.permute.xlu0 %2552
      %v2555 = vsel %vm294, %v2553, 0
      %2557 = vmatprep.subr.bf16.mxu0 0
      %2558 = vmatpush1.bf16.msra.mxu0 %v576
      %2559 = vmatprep.subr.bf16.mxu0 0
      %2560 = vmatpush1.bf16.msra.mxu0 %v577
      %2561 = vmatprep.subr.bf16.mxu0 0
      %2562 = vmatpush1.bf16.msra.mxu0 0
      %2563 = vmatprep.subr.bf16.mxu0 0
      %2564 = vmatpush1.bf16.msra.mxu0 0
      %2565 = vmatprep.subr.bf16.mxu0 0
      %2566 = vmatpush1.bf16.msra.mxu0 0
      %2567 = vmatprep.subr.bf16.mxu0 0
      %2568 = vmatpush1.bf16.msra.mxu0 0
      %2569 = vmatprep.subr.bf16.mxu0 0
      %2570 = vmatpush1.bf16.msra.mxu0 0
      %2571 = vmatprep.subr.bf16.mxu0 0
      %2572 = vmatpush1.bf16.msra.mxu0 0
      %2573 = vmatprep.subr.bf16.mxu0 0
      %2574 = vmatpush1.bf16.msra.mxu0 0
      %2575 = vmatprep.subr.bf16.mxu0 0
      %2576 = vmatpush1.bf16.msra.mxu0 0
      %2577 = vmatprep.subr.bf16.mxu0 0
      %2578 = vmatpush1.bf16.msra.mxu0 0
      %2579 = vmatprep.subr.bf16.mxu0 0
      %2580 = vmatpush1.bf16.msra.mxu0 0
      %2581 = vmatprep.subr.bf16.mxu0 0
      %2582 = vmatpush1.bf16.msra.mxu0 0
      %2583 = vmatprep.subr.bf16.mxu0 0
      %2584 = vmatpush1.bf16.msra.mxu0 0
      %2585 = vmatprep.subr.bf16.mxu0 0
      %2586 = vmatpush1.bf16.msra.mxu0 0
      %2587 = vmatprep.subr.bf16.mxu0 0
      %2588 = vmatpush1.bf16.msra.mxu0 0
      %2589 = vmatprep.mubr.bf16.mxu0 0
      %2590 = vmatmul.mubr.bf16.gmra.mrb[0].mxu0 %v2555
      %v2591 = vpop.f32.mrb[0].mxu0
      %v2592 = vadd.f32 %v563, %v2591
      %v2593 = vpop.f32.mrb[0].mxu0
      %v2594 = vpop.f32.mrb[0].mxu0
      %v2595 = vadd.f32 %v563, %v2594
      %v2596 = vpop.f32.mrb[0].mxu0
      %2597 = vdwg.mxu0
      %2598 = vst [vmem:[%s258 + $0x38] sm:$0xff] %v2592
      %2599 = vst [vmem:[%s258 + $0x78] sm:$0xff] %v2595
      %s2600 = smul.u32 2, %s17
      %p2601 = scmp.lt.s32.totalorder %s2600, 3
      %s2602 = scalar_select %p2601, %s2600, 3
      %s2603 = smul.addr %s2602, 8
      %s2604 = smul.addr %s2603, 8
      %s2605 = scalar_lea.vmem %s6, %s2604
      // Predicated region
      $region45: #{smiles_lstm_forward.1} parent=43 // pred_check
        %p2606 = pneg %p166
      $region46: #{smiles_lstm_forward.1} parent=43 // pred_check_branch
        %2608 = sbr.rel (%p2606) target = $region48
      $region47: #{smiles_lstm_forward.1} parent=43 // pred_region
        %s2609 = smul.u32 2, %s17
      $region48: #{smiles_lstm_forward.1} parent=43 // pred_fallthru
        _
    $region44: #{smiles_lstm_forward.1} parent=5 // pred_fallthru
      _
    %p2610 = scmp.le.s32.totalorder 2, %s12
    // Predicated region
    $region49: #{smiles_lstm_forward.1} parent=5 // pred_check
      %p2611 = pneg %p2610
    $region50: #{smiles_lstm_forward.1} parent=5 // pred_check_branch
      %2613 = sbr.rel (%p2611) target = $region52
    $region51: #{smiles_lstm_forward.1} parent=5 // pred_region
      %s2614 = ssub.s32 %s12, 2
      // Predicated region
      $region53: #{smiles_lstm_forward.1} parent=51 // pred_check
        %p2615 = pneg %p172
      $region54: #{smiles_lstm_forward.1} parent=51 // pred_check_branch
        %2617 = sbr.rel (%p2615) target = $region56
      $region55: #{smiles_lstm_forward.1} parent=51 // pred_region
        %s2618 = smul.u32 2, %s18
        %p2619 = scmp.lt.s32.totalorder %s2618, 3
        %s2620 = scalar_select %p2619, %s2618, 3
        %s2621 = smul.addr %s2620, 8
        %s2622 = smul.addr %s2621, 8
        %s2623 = scalar_lea.vmem %s6, %s2622
      $region56: #{smiles_lstm_forward.1} parent=51 // pred_fallthru
        _
    $region52: #{smiles_lstm_forward.1} parent=5 // pred_fallthru
      _
  $region6: #{smiles_lstm_forward.1} parent=0 // loop_footer
    %s16 = sadd.s32 1, %s12
  $region7: #{smiles_lstm_forward.1} parent=0 // loop_footer_branch
    %11 = sbr.rel target = $region3
  $region8: #{smiles_lstm_forward.1} parent=0 // loop_exit
    _

</llo_original>
